<compile_context>
chip_gen: v7x
topology: tpu7x:2x2x1
jax: 0.10.0
libtpu: 0.0.40
codegen_flags: <defaults>
</compile_context>

<pallas_src>
import functools

import jax
import jax.numpy as jnp
from jax.experimental import pallas as pl
from jax.experimental.pallas import tpu as pltpu


# ---------------------------------------------------------------------------
# Fused Pallas kernel: all LSTM layers + FC head, layers wavefronted per step
# ---------------------------------------------------------------------------
def _fused_lstm_fc_kernel(x_ref, *refs, S, B, H, num_layers):
    """Fused multi-layer LSTM + FC.

    x_ref:  (B, S, In)  batch-first input, exactly as the model receives it
    refs:   [wih_t (In_l, 4H), whh_t (H, 4H), b (1, 4H)] * num_layers
            (gate columns pre-permuted to [i, f, o, g]),
            wfc_t (H, O), bfc (1, O), out_ref (B, O)
    """
    out_ref = refs[-1]
    wfc = refs[-3][...]
    bfc = refs[-2][...]

    wih = [refs[3 * l][...] for l in range(num_layers)]
    whh = [refs[3 * l + 1][...] for l in range(num_layers)]
    b = [refs[3 * l + 2][...] for l in range(num_layers)]

    x = x_ref[...]  # (B, S, In), tiny, lives in vregs

    zeros = jnp.zeros((B, H), jnp.float32)
    h = [zeros] * num_layers
    c = [zeros] * num_layers

    H3 = 3 * H
    # Static Python loops -> fully unrolled trace; h/c stay in vregs.
    # Layers are interleaved per time step so there is no inter-layer barrier:
    # layer l step t only depends on (layer l step t-1) and (layer l-1 step t).
    for t in range(S):
        inp = x[:, t, :]  # (B, In) recurrence-independent slice (overlappable)
        for l in range(num_layers):
            gates = (
                jnp.dot(inp, wih[l], preferred_element_type=jnp.float32)
                + b[l]
                + jnp.dot(h[l], whh[l], preferred_element_type=jnp.float32)
            )  # (B, 4H), columns [i, f, o, g]
            ifo = jax.nn.sigmoid(gates[:, :H3])   # one sigmoid over i,f,o
            g_g = jnp.tanh(gates[:, H3:])         # one tanh for g
            c[l] = ifo[:, H:2 * H] * c[l] + ifo[:, :H] * g_g
            h[l] = ifo[:, 2 * H:H3] * jnp.tanh(c[l])
            # dropout between layers is identity in eval mode
            inp = h[l]

    # FC head on the last time step's hidden state of the last layer.
    out_ref[...] = (
        jnp.dot(h[-1], wfc, preferred_element_type=jnp.float32) + bfc
    )


# ---------------------------------------------------------------------------
# Wrapper
# ---------------------------------------------------------------------------
def lstm_model_forward(x, kparams):
    """x: (B, S, input_size) -> (B, output_size). Mirrors LSTMModel.forward (eval)."""
    B, S, In = x.shape
    num_layers = len(kparams["lstm"])
    H = kparams["lstm"][0]["whh_t"].shape[0]
    O = kparams["wfc_t"].shape[1]

    flat_params = []
    for layer in kparams["lstm"]:
        flat_params += [layer["wih_t"], layer["whh_t"], layer["b"]]
    flat_params += [kparams["wfc_t"], kparams["bfc"]]

    kernel = functools.partial(
        _fused_lstm_fc_kernel, S=S, B=B, H=H, num_layers=num_layers
    )

    n_in = 1 + len(flat_params)
    out = pl.pallas_call(
        kernel,
        out_shape=jax.ShapeDtypeStruct((B, O), jnp.float32),
        in_specs=[pl.BlockSpec(memory_space=pltpu.MemorySpace.VMEM)] * n_in,
        out_specs=pl.BlockSpec(memory_space=pltpu.MemorySpace.VMEM),
    )(x.astype(jnp.float32), *flat_params)

    # .squeeze(-1): no-op for output_size=3 (kept for parity with PyTorch)
    return jnp.squeeze(out, axis=-1) if out.shape[-1] == 1 else out


# ---------------------------------------------------------------------------
# Parameter init (PyTorch-style uniform(-k, k), k = 1/sqrt(H)) and kernel prep
# ---------------------------------------------------------------------------
def init_torch_params(key, input_size, hidden_size, num_layers, output_size):
    """Raw PyTorch-layout parameters (gate row order [i, f, g, o])."""
    k = 1.0 / (hidden_size ** 0.5)
    layers = []
    for l in range(num_layers):
        in_sz = input_size if l == 0 else hidden_size
        key, k1, k2, k3, k4 = jax.random.split(key, 5)
        layers.append({
            "w_ih": jax.random.uniform(k1, (4 * hidden_size, in_sz), jnp.float32, -k, k),
            "w_hh": jax.random.uniform(k2, (4 * hidden_size, hidden_size), jnp.float32, -k, k),
            "b_ih": jax.random.uniform(k3, (4 * hidden_size,), jnp.float32, -k, k),
            "b_hh": jax.random.uniform(k4, (4 * hidden_size,), jnp.float32, -k, k),
        })
    key, k5, k6 = jax.random.split(key, 3)
    w_fc = jax.random.uniform(k5, (output_size, hidden_size), jnp.float32, -k, k)
    b_fc = jax.random.uniform(k6, (output_size,), jnp.float32, -k, k)
    return {"lstm": layers, "w_fc": w_fc, "b_fc": b_fc}


def prepare_kernel_params(tparams):
    """Transpose, combine biases, and permute gate columns [i,f,g,o] -> [i,f,o,g]."""
    H = tparams["lstm"][0]["w_hh"].shape[1]

    def reorder_cols(w_t):  # (*, 4H) columns [i, f, g, o] -> [i, f, o, g]
        return jnp.concatenate(
            [w_t[..., :2 * H], w_t[..., 3 * H:], w_t[..., 2 * H:3 * H]], axis=-1
        )

    layers = []
    for lyr in tparams["lstm"]:
        layers.append({
            "wih_t": reorder_cols(lyr["w_ih"].T),                          # (In, 4H)
            "whh_t": reorder_cols(lyr["w_hh"].T),                          # (H, 4H)
            "b": reorder_cols((lyr["b_ih"] + lyr["b_hh"]).reshape(1, -1)),  # (1, 4H)
        })
    return {
        "lstm": layers,
        "wfc_t": tparams["w_fc"].T,                 # (H, O)
        "bfc": tparams["b_fc"].reshape(1, -1),      # (1, O)
    }


# ---------------------------------------------------------------------------
# Pure-JAX reference (PyTorch gate order, for correctness check)
# ---------------------------------------------------------------------------
def reference_forward(x, tparams):
    x = x.astype(jnp.float32)
    B = x.shape[0]
    seq = jnp.transpose(x, (1, 0, 2))  # (S, B, In)
    for layer in tparams["lstm"]:
        H = layer["w_hh"].shape[1]
        h = jnp.zeros((B, H), jnp.float32)
        c = jnp.zeros((B, H), jnp.float32)
        outs = []
        for t in range(seq.shape[0]):
            gates = (seq[t] @ layer["w_ih"].T + h @ layer["w_hh"].T
                     + layer["b_ih"] + layer["b_hh"])
            i = jax.nn.sigmoid(gates[:, 0 * H:1 * H])
            f = jax.nn.sigmoid(gates[:, 1 * H:2 * H])
            g = jnp.tanh(gates[:, 2 * H:3 * H])
            o = jax.nn.sigmoid(gates[:, 3 * H:4 * H])
            c = f * c + i * g
            h = o * jnp.tanh(c)
            outs.append(h)
        seq = jnp.stack(outs, axis=0)
    out = seq[-1] @ tparams["w_fc"].T + tparams["b_fc"]
    return out


# ---------------------------------------------------------------------------
if __name__ == "__main__":
    INPUT_SIZE, HIDDEN_SIZE, NUM_LAYERS, OUTPUT_SIZE = 12, 128, 2, 3
    BATCH, SEQ = 2, 8

    key = jax.random.PRNGKey(0)
    pkey, xkey = jax.random.split(key)
    torch_params = init_torch_params(pkey, INPUT_SIZE, HIDDEN_SIZE, NUM_LAYERS, OUTPUT_SIZE)
    kernel_params = prepare_kernel_params(torch_params)
    x = jax.random.normal(xkey, (BATCH, SEQ, INPUT_SIZE), jnp.float32)

    out = jax.block_until_ready(lstm_model_forward(x, kernel_params))
    ref = jax.block_until_ready(reference_forward(x, torch_params))

    assert out.shape == (BATCH, OUTPUT_SIZE), out.shape
    assert jnp.allclose(out, ref, atol=1e-4, rtol=1e-4), (out, ref)
    print("KERNEL_OK")
</pallas_src>

<mosaic_0001>
module attributes {stable_mosaic.version = 11 : i64} {
  func.func @_fused_lstm_fc_kernel(%arg0: memref<2x8x12xf32, #tpu.memory_space<vmem>>, %arg1: memref<12x512xf32, #tpu.memory_space<vmem>>, %arg2: memref<128x512xf32, #tpu.memory_space<vmem>>, %arg3: memref<1x512xf32, #tpu.memory_space<vmem>>, %arg4: memref<128x512xf32, #tpu.memory_space<vmem>>, %arg5: memref<128x512xf32, #tpu.memory_space<vmem>>, %arg6: memref<1x512xf32, #tpu.memory_space<vmem>>, %arg7: memref<128x3xf32, #tpu.memory_space<vmem>>, %arg8: memref<1x3xf32, #tpu.memory_space<vmem>>, %arg9: memref<2x3xf32, #tpu.memory_space<vmem>>) attributes {dimension_semantics = [], scalar_prefetch = 0 : i64, scratch_operands = 0 : i64, tpu.core_type = #tpu.core_type<tc>} {
    %c0 = arith.constant 0 : index
    %c0_0 = arith.constant 0 : index
    %0 = vector.load %arg7[%c0, %c0_0] : memref<128x3xf32, #tpu.memory_space<vmem>>, vector<128x3xf32>
    %c0_1 = arith.constant 0 : index
    %c0_2 = arith.constant 0 : index
    %1 = vector.load %arg8[%c0_1, %c0_2] : memref<1x3xf32, #tpu.memory_space<vmem>>, vector<1x3xf32>
    %c0_3 = arith.constant 0 : index
    %c0_4 = arith.constant 0 : index
    %2 = vector.load %arg1[%c0_3, %c0_4] : memref<12x512xf32, #tpu.memory_space<vmem>>, vector<12x512xf32>
    %c0_5 = arith.constant 0 : index
    %c0_6 = arith.constant 0 : index
    %3 = vector.load %arg4[%c0_5, %c0_6] : memref<128x512xf32, #tpu.memory_space<vmem>>, vector<128x512xf32>
    %c0_7 = arith.constant 0 : index
    %c0_8 = arith.constant 0 : index
    %4 = vector.load %arg2[%c0_7, %c0_8] : memref<128x512xf32, #tpu.memory_space<vmem>>, vector<128x512xf32>
    %c0_9 = arith.constant 0 : index
    %c0_10 = arith.constant 0 : index
    %5 = vector.load %arg5[%c0_9, %c0_10] : memref<128x512xf32, #tpu.memory_space<vmem>>, vector<128x512xf32>
    %c0_11 = arith.constant 0 : index
    %c0_12 = arith.constant 0 : index
    %6 = vector.load %arg3[%c0_11, %c0_12] : memref<1x512xf32, #tpu.memory_space<vmem>>, vector<1x512xf32>
    %c0_13 = arith.constant 0 : index
    %c0_14 = arith.constant 0 : index
    %7 = vector.load %arg6[%c0_13, %c0_14] : memref<1x512xf32, #tpu.memory_space<vmem>>, vector<1x512xf32>
    %c0_15 = arith.constant 0 : index
    %c0_16 = arith.constant 0 : index
    %c0_17 = arith.constant 0 : index
    %8 = vector.load %arg0[%c0_15, %c0_16, %c0_17] : memref<2x8x12xf32, #tpu.memory_space<vmem>>, vector<2x8x12xf32>
    %cst = arith.constant 0.000000e+00 : f32
    %9 = vector.broadcast %cst : f32 to vector<2x128xf32>
    %10 = vector.extract_strided_slice %8 {offsets = [0, 0, 0], sizes = [2, 1, 12], strides = [1, 1, 1]} : vector<2x8x12xf32> to vector<2x1x12xf32>
    %11 = vector.shape_cast %10 : vector<2x1x12xf32> to vector<2x12xf32>
    %cst_18 = arith.constant dense<0.000000e+00> : vector<2x512xf32>
    %12 = tpu.matmul %11, %2, %cst_18 {dimension_numbers = #tpu.dot_dimension_numbers<[1], [0], [0], [1], [0, 0, 1, 1], [], []>} : vector<2x12xf32>, vector<12x512xf32>, vector<2x512xf32> -> vector<2x512xf32>
    %13 = vector.broadcast %6 : vector<1x512xf32> to vector<2x512xf32>
    %14 = arith.addf %12, %13 : vector<2x512xf32>
    %cst_19 = arith.constant dense<0.000000e+00> : vector<2x512xf32>
    %15 = tpu.matmul %9, %4, %cst_19 {dimension_numbers = #tpu.dot_dimension_numbers<[1], [0], [0], [1], [0, 0, 1, 1], [], []>} : vector<2x128xf32>, vector<128x512xf32>, vector<2x512xf32> -> vector<2x512xf32>
    %16 = arith.addf %14, %15 : vector<2x512xf32>
    %17 = vector.extract_strided_slice %16 {offsets = [0, 0], sizes = [2, 384], strides = [1, 1]} : vector<2x512xf32> to vector<2x384xf32>
    %18 = arith.negf %17 : vector<2x384xf32>
    %19 = math.exp %18 : vector<2x384xf32>
    %cst_20 = arith.constant 1.000000e+00 : f32
    %20 = vector.broadcast %cst_20 : f32 to vector<2x384xf32>
    %21 = arith.addf %20, %19 : vector<2x384xf32>
    %22 = arith.divf %20, %21 : vector<2x384xf32>
    %23 = vector.extract_strided_slice %16 {offsets = [0, 384], sizes = [2, 128], strides = [1, 1]} : vector<2x512xf32> to vector<2x128xf32>
    %24 = math.tanh %23 : vector<2x128xf32>
    %25 = vector.extract_strided_slice %22 {offsets = [0, 128], sizes = [2, 128], strides = [1, 1]} : vector<2x384xf32> to vector<2x128xf32>
    %26 = arith.mulf %25, %9 : vector<2x128xf32>
    %27 = vector.extract_strided_slice %22 {offsets = [0, 0], sizes = [2, 128], strides = [1, 1]} : vector<2x384xf32> to vector<2x128xf32>
    %28 = arith.mulf %27, %24 : vector<2x128xf32>
    %29 = arith.addf %26, %28 : vector<2x128xf32>
    %30 = vector.extract_strided_slice %22 {offsets = [0, 256], sizes = [2, 128], strides = [1, 1]} : vector<2x384xf32> to vector<2x128xf32>
    %31 = math.tanh %29 : vector<2x128xf32>
    %32 = arith.mulf %30, %31 : vector<2x128xf32>
    %cst_21 = arith.constant dense<0.000000e+00> : vector<2x512xf32>
    %33 = tpu.matmul %32, %3, %cst_21 {dimension_numbers = #tpu.dot_dimension_numbers<[1], [0], [0], [1], [0, 0, 1, 1], [], []>} : vector<2x128xf32>, vector<128x512xf32>, vector<2x512xf32> -> vector<2x512xf32>
    %34 = vector.broadcast %7 : vector<1x512xf32> to vector<2x512xf32>
    %35 = arith.addf %33, %34 : vector<2x512xf32>
    %cst_22 = arith.constant dense<0.000000e+00> : vector<2x512xf32>
    %36 = tpu.matmul %9, %5, %cst_22 {dimension_numbers = #tpu.dot_dimension_numbers<[1], [0], [0], [1], [0, 0, 1, 1], [], []>} : vector<2x128xf32>, vector<128x512xf32>, vector<2x512xf32> -> vector<2x512xf32>
    %37 = arith.addf %35, %36 : vector<2x512xf32>
    %38 = vector.extract_strided_slice %37 {offsets = [0, 0], sizes = [2, 384], strides = [1, 1]} : vector<2x512xf32> to vector<2x384xf32>
    %39 = arith.negf %38 : vector<2x384xf32>
    %40 = math.exp %39 : vector<2x384xf32>
    %cst_23 = arith.constant 1.000000e+00 : f32
    %41 = vector.broadcast %cst_23 : f32 to vector<2x384xf32>
    %42 = arith.addf %41, %40 : vector<2x384xf32>
    %43 = arith.divf %41, %42 : vector<2x384xf32>
    %44 = vector.extract_strided_slice %37 {offsets = [0, 384], sizes = [2, 128], strides = [1, 1]} : vector<2x512xf32> to vector<2x128xf32>
    %45 = math.tanh %44 : vector<2x128xf32>
    %46 = vector.extract_strided_slice %43 {offsets = [0, 128], sizes = [2, 128], strides = [1, 1]} : vector<2x384xf32> to vector<2x128xf32>
    %47 = arith.mulf %46, %9 : vector<2x128xf32>
    %48 = vector.extract_strided_slice %43 {offsets = [0, 0], sizes = [2, 128], strides = [1, 1]} : vector<2x384xf32> to vector<2x128xf32>
    %49 = arith.mulf %48, %45 : vector<2x128xf32>
    %50 = arith.addf %47, %49 : vector<2x128xf32>
    %51 = vector.extract_strided_slice %43 {offsets = [0, 256], sizes = [2, 128], strides = [1, 1]} : vector<2x384xf32> to vector<2x128xf32>
    %52 = math.tanh %50 : vector<2x128xf32>
    %53 = arith.mulf %51, %52 : vector<2x128xf32>
    %54 = vector.extract_strided_slice %8 {offsets = [0, 1, 0], sizes = [2, 1, 12], strides = [1, 1, 1]} : vector<2x8x12xf32> to vector<2x1x12xf32>
    %55 = vector.shape_cast %54 : vector<2x1x12xf32> to vector<2x12xf32>
    %cst_24 = arith.constant dense<0.000000e+00> : vector<2x512xf32>
    %56 = tpu.matmul %55, %2, %cst_24 {dimension_numbers = #tpu.dot_dimension_numbers<[1], [0], [0], [1], [0, 0, 1, 1], [], []>} : vector<2x12xf32>, vector<12x512xf32>, vector<2x512xf32> -> vector<2x512xf32>
    %57 = vector.broadcast %6 : vector<1x512xf32> to vector<2x512xf32>
    %58 = arith.addf %56, %57 : vector<2x512xf32>
    %cst_25 = arith.constant dense<0.000000e+00> : vector<2x512xf32>
    %59 = tpu.matmul %32, %4, %cst_25 {dimension_numbers = #tpu.dot_dimension_numbers<[1], [0], [0], [1], [0, 0, 1, 1], [], []>} : vector<2x128xf32>, vector<128x512xf32>, vector<2x512xf32> -> vector<2x512xf32>
    %60 = arith.addf %58, %59 : vector<2x512xf32>
    %61 = vector.extract_strided_slice %60 {offsets = [0, 0], sizes = [2, 384], strides = [1, 1]} : vector<2x512xf32> to vector<2x384xf32>
    %62 = arith.negf %61 : vector<2x384xf32>
    %63 = math.exp %62 : vector<2x384xf32>
    %cst_26 = arith.constant 1.000000e+00 : f32
    %64 = vector.broadcast %cst_26 : f32 to vector<2x384xf32>
    %65 = arith.addf %64, %63 : vector<2x384xf32>
    %66 = arith.divf %64, %65 : vector<2x384xf32>
    %67 = vector.extract_strided_slice %60 {offsets = [0, 384], sizes = [2, 128], strides = [1, 1]} : vector<2x512xf32> to vector<2x128xf32>
    %68 = math.tanh %67 : vector<2x128xf32>
    %69 = vector.extract_strided_slice %66 {offsets = [0, 128], sizes = [2, 128], strides = [1, 1]} : vector<2x384xf32> to vector<2x128xf32>
    %70 = arith.mulf %69, %29 : vector<2x128xf32>
    %71 = vector.extract_strided_slice %66 {offsets = [0, 0], sizes = [2, 128], strides = [1, 1]} : vector<2x384xf32> to vector<2x128xf32>
    %72 = arith.mulf %71, %68 : vector<2x128xf32>
    %73 = arith.addf %70, %72 : vector<2x128xf32>
    %74 = vector.extract_strided_slice %66 {offsets = [0, 256], sizes = [2, 128], strides = [1, 1]} : vector<2x384xf32> to vector<2x128xf32>
    %75 = math.tanh %73 : vector<2x128xf32>
    %76 = arith.mulf %74, %75 : vector<2x128xf32>
    %cst_27 = arith.constant dense<0.000000e+00> : vector<2x512xf32>
    %77 = tpu.matmul %76, %3, %cst_27 {dimension_numbers = #tpu.dot_dimension_numbers<[1], [0], [0], [1], [0, 0, 1, 1], [], []>} : vector<2x128xf32>, vector<128x512xf32>, vector<2x512xf32> -> vector<2x512xf32>
    %78 = vector.broadcast %7 : vector<1x512xf32> to vector<2x512xf32>
    %79 = arith.addf %77, %78 : vector<2x512xf32>
    %cst_28 = arith.constant dense<0.000000e+00> : vector<2x512xf32>
    %80 = tpu.matmul %53, %5, %cst_28 {dimension_numbers = #tpu.dot_dimension_numbers<[1], [0], [0], [1], [0, 0, 1, 1], [], []>} : vector<2x128xf32>, vector<128x512xf32>, vector<2x512xf32> -> vector<2x512xf32>
    %81 = arith.addf %79, %80 : vector<2x512xf32>
    %82 = vector.extract_strided_slice %81 {offsets = [0, 0], sizes = [2, 384], strides = [1, 1]} : vector<2x512xf32> to vector<2x384xf32>
    %83 = arith.negf %82 : vector<2x384xf32>
    %84 = math.exp %83 : vector<2x384xf32>
    %cst_29 = arith.constant 1.000000e+00 : f32
    %85 = vector.broadcast %cst_29 : f32 to vector<2x384xf32>
    %86 = arith.addf %85, %84 : vector<2x384xf32>
    %87 = arith.divf %85, %86 : vector<2x384xf32>
    %88 = vector.extract_strided_slice %81 {offsets = [0, 384], sizes = [2, 128], strides = [1, 1]} : vector<2x512xf32> to vector<2x128xf32>
    %89 = math.tanh %88 : vector<2x128xf32>
    %90 = vector.extract_strided_slice %87 {offsets = [0, 128], sizes = [2, 128], strides = [1, 1]} : vector<2x384xf32> to vector<2x128xf32>
    %91 = arith.mulf %90, %50 : vector<2x128xf32>
    %92 = vector.extract_strided_slice %87 {offsets = [0, 0], sizes = [2, 128], strides = [1, 1]} : vector<2x384xf32> to vector<2x128xf32>
    %93 = arith.mulf %92, %89 : vector<2x128xf32>
    %94 = arith.addf %91, %93 : vector<2x128xf32>
    %95 = vector.extract_strided_slice %87 {offsets = [0, 256], sizes = [2, 128], strides = [1, 1]} : vector<2x384xf32> to vector<2x128xf32>
    %96 = math.tanh %94 : vector<2x128xf32>
    %97 = arith.mulf %95, %96 : vector<2x128xf32>
    %98 = vector.extract_strided_slice %8 {offsets = [0, 2, 0], sizes = [2, 1, 12], strides = [1, 1, 1]} : vector<2x8x12xf32> to vector<2x1x12xf32>
    %99 = vector.shape_cast %98 : vector<2x1x12xf32> to vector<2x12xf32>
    %cst_30 = arith.constant dense<0.000000e+00> : vector<2x512xf32>
    %100 = tpu.matmul %99, %2, %cst_30 {dimension_numbers = #tpu.dot_dimension_numbers<[1], [0], [0], [1], [0, 0, 1, 1], [], []>} : vector<2x12xf32>, vector<12x512xf32>, vector<2x512xf32> -> vector<2x512xf32>
    %101 = vector.broadcast %6 : vector<1x512xf32> to vector<2x512xf32>
    %102 = arith.addf %100, %101 : vector<2x512xf32>
    %cst_31 = arith.constant dense<0.000000e+00> : vector<2x512xf32>
    %103 = tpu.matmul %76, %4, %cst_31 {dimension_numbers = #tpu.dot_dimension_numbers<[1], [0], [0], [1], [0, 0, 1, 1], [], []>} : vector<2x128xf32>, vector<128x512xf32>, vector<2x512xf32> -> vector<2x512xf32>
    %104 = arith.addf %102, %103 : vector<2x512xf32>
    %105 = vector.extract_strided_slice %104 {offsets = [0, 0], sizes = [2, 384], strides = [1, 1]} : vector<2x512xf32> to vector<2x384xf32>
    %106 = arith.negf %105 : vector<2x384xf32>
    %107 = math.exp %106 : vector<2x384xf32>
    %cst_32 = arith.constant 1.000000e+00 : f32
    %108 = vector.broadcast %cst_32 : f32 to vector<2x384xf32>
    %109 = arith.addf %108, %107 : vector<2x384xf32>
    %110 = arith.divf %108, %109 : vector<2x384xf32>
    %111 = vector.extract_strided_slice %104 {offsets = [0, 384], sizes = [2, 128], strides = [1, 1]} : vector<2x512xf32> to vector<2x128xf32>
    %112 = math.tanh %111 : vector<2x128xf32>
    %113 = vector.extract_strided_slice %110 {offsets = [0, 128], sizes = [2, 128], strides = [1, 1]} : vector<2x384xf32> to vector<2x128xf32>
    %114 = arith.mulf %113, %73 : vector<2x128xf32>
    %115 = vector.extract_strided_slice %110 {offsets = [0, 0], sizes = [2, 128], strides = [1, 1]} : vector<2x384xf32> to vector<2x128xf32>
    %116 = arith.mulf %115, %112 : vector<2x128xf32>
    %117 = arith.addf %114, %116 : vector<2x128xf32>
    %118 = vector.extract_strided_slice %110 {offsets = [0, 256], sizes = [2, 128], strides = [1, 1]} : vector<2x384xf32> to vector<2x128xf32>
    %119 = math.tanh %117 : vector<2x128xf32>
    %120 = arith.mulf %118, %119 : vector<2x128xf32>
    %cst_33 = arith.constant dense<0.000000e+00> : vector<2x512xf32>
    %121 = tpu.matmul %120, %3, %cst_33 {dimension_numbers = #tpu.dot_dimension_numbers<[1], [0], [0], [1], [0, 0, 1, 1], [], []>} : vector<2x128xf32>, vector<128x512xf32>, vector<2x512xf32> -> vector<2x512xf32>
    %122 = vector.broadcast %7 : vector<1x512xf32> to vector<2x512xf32>
    %123 = arith.addf %121, %122 : vector<2x512xf32>
    %cst_34 = arith.constant dense<0.000000e+00> : vector<2x512xf32>
    %124 = tpu.matmul %97, %5, %cst_34 {dimension_numbers = #tpu.dot_dimension_numbers<[1], [0], [0], [1], [0, 0, 1, 1], [], []>} : vector<2x128xf32>, vector<128x512xf32>, vector<2x512xf32> -> vector<2x512xf32>
    %125 = arith.addf %123, %124 : vector<2x512xf32>
    %126 = vector.extract_strided_slice %125 {offsets = [0, 0], sizes = [2, 384], strides = [1, 1]} : vector<2x512xf32> to vector<2x384xf32>
    %127 = arith.negf %126 : vector<2x384xf32>
    %128 = math.exp %127 : vector<2x384xf32>
    %cst_35 = arith.constant 1.000000e+00 : f32
    %129 = vector.broadcast %cst_35 : f32 to vector<2x384xf32>
    %130 = arith.addf %129, %128 : vector<2x384xf32>
    %131 = arith.divf %129, %130 : vector<2x384xf32>
    %132 = vector.extract_strided_slice %125 {offsets = [0, 384], sizes = [2, 128], strides = [1, 1]} : vector<2x512xf32> to vector<2x128xf32>
    %133 = math.tanh %132 : vector<2x128xf32>
    %134 = vector.extract_strided_slice %131 {offsets = [0, 128], sizes = [2, 128], strides = [1, 1]} : vector<2x384xf32> to vector<2x128xf32>
    %135 = arith.mulf %134, %94 : vector<2x128xf32>
    %136 = vector.extract_strided_slice %131 {offsets = [0, 0], sizes = [2, 128], strides = [1, 1]} : vector<2x384xf32> to vector<2x128xf32>
    %137 = arith.mulf %136, %133 : vector<2x128xf32>
    %138 = arith.addf %135, %137 : vector<2x128xf32>
    %139 = vector.extract_strided_slice %131 {offsets = [0, 256], sizes = [2, 128], strides = [1, 1]} : vector<2x384xf32> to vector<2x128xf32>
    %140 = math.tanh %138 : vector<2x128xf32>
    %141 = arith.mulf %139, %140 : vector<2x128xf32>
    %142 = vector.extract_strided_slice %8 {offsets = [0, 3, 0], sizes = [2, 1, 12], strides = [1, 1, 1]} : vector<2x8x12xf32> to vector<2x1x12xf32>
    %143 = vector.shape_cast %142 : vector<2x1x12xf32> to vector<2x12xf32>
    %cst_36 = arith.constant dense<0.000000e+00> : vector<2x512xf32>
    %144 = tpu.matmul %143, %2, %cst_36 {dimension_numbers = #tpu.dot_dimension_numbers<[1], [0], [0], [1], [0, 0, 1, 1], [], []>} : vector<2x12xf32>, vector<12x512xf32>, vector<2x512xf32> -> vector<2x512xf32>
    %145 = vector.broadcast %6 : vector<1x512xf32> to vector<2x512xf32>
    %146 = arith.addf %144, %145 : vector<2x512xf32>
    %cst_37 = arith.constant dense<0.000000e+00> : vector<2x512xf32>
    %147 = tpu.matmul %120, %4, %cst_37 {dimension_numbers = #tpu.dot_dimension_numbers<[1], [0], [0], [1], [0, 0, 1, 1], [], []>} : vector<2x128xf32>, vector<128x512xf32>, vector<2x512xf32> -> vector<2x512xf32>
    %148 = arith.addf %146, %147 : vector<2x512xf32>
    %149 = vector.extract_strided_slice %148 {offsets = [0, 0], sizes = [2, 384], strides = [1, 1]} : vector<2x512xf32> to vector<2x384xf32>
    %150 = arith.negf %149 : vector<2x384xf32>
    %151 = math.exp %150 : vector<2x384xf32>
    %cst_38 = arith.constant 1.000000e+00 : f32
    %152 = vector.broadcast %cst_38 : f32 to vector<2x384xf32>
    %153 = arith.addf %152, %151 : vector<2x384xf32>
    %154 = arith.divf %152, %153 : vector<2x384xf32>
    %155 = vector.extract_strided_slice %148 {offsets = [0, 384], sizes = [2, 128], strides = [1, 1]} : vector<2x512xf32> to vector<2x128xf32>
    %156 = math.tanh %155 : vector<2x128xf32>
    %157 = vector.extract_strided_slice %154 {offsets = [0, 128], sizes = [2, 128], strides = [1, 1]} : vector<2x384xf32> to vector<2x128xf32>
    %158 = arith.mulf %157, %117 : vector<2x128xf32>
    %159 = vector.extract_strided_slice %154 {offsets = [0, 0], sizes = [2, 128], strides = [1, 1]} : vector<2x384xf32> to vector<2x128xf32>
    %160 = arith.mulf %159, %156 : vector<2x128xf32>
    %161 = arith.addf %158, %160 : vector<2x128xf32>
    %162 = vector.extract_strided_slice %154 {offsets = [0, 256], sizes = [2, 128], strides = [1, 1]} : vector<2x384xf32> to vector<2x128xf32>
    %163 = math.tanh %161 : vector<2x128xf32>
    %164 = arith.mulf %162, %163 : vector<2x128xf32>
    %cst_39 = arith.constant dense<0.000000e+00> : vector<2x512xf32>
    %165 = tpu.matmul %164, %3, %cst_39 {dimension_numbers = #tpu.dot_dimension_numbers<[1], [0], [0], [1], [0, 0, 1, 1], [], []>} : vector<2x128xf32>, vector<128x512xf32>, vector<2x512xf32> -> vector<2x512xf32>
    %166 = vector.broadcast %7 : vector<1x512xf32> to vector<2x512xf32>
    %167 = arith.addf %165, %166 : vector<2x512xf32>
    %cst_40 = arith.constant dense<0.000000e+00> : vector<2x512xf32>
    %168 = tpu.matmul %141, %5, %cst_40 {dimension_numbers = #tpu.dot_dimension_numbers<[1], [0], [0], [1], [0, 0, 1, 1], [], []>} : vector<2x128xf32>, vector<128x512xf32>, vector<2x512xf32> -> vector<2x512xf32>
    %169 = arith.addf %167, %168 : vector<2x512xf32>
    %170 = vector.extract_strided_slice %169 {offsets = [0, 0], sizes = [2, 384], strides = [1, 1]} : vector<2x512xf32> to vector<2x384xf32>
    %171 = arith.negf %170 : vector<2x384xf32>
    %172 = math.exp %171 : vector<2x384xf32>
    %cst_41 = arith.constant 1.000000e+00 : f32
    %173 = vector.broadcast %cst_41 : f32 to vector<2x384xf32>
    %174 = arith.addf %173, %172 : vector<2x384xf32>
    %175 = arith.divf %173, %174 : vector<2x384xf32>
    %176 = vector.extract_strided_slice %169 {offsets = [0, 384], sizes = [2, 128], strides = [1, 1]} : vector<2x512xf32> to vector<2x128xf32>
    %177 = math.tanh %176 : vector<2x128xf32>
    %178 = vector.extract_strided_slice %175 {offsets = [0, 128], sizes = [2, 128], strides = [1, 1]} : vector<2x384xf32> to vector<2x128xf32>
    %179 = arith.mulf %178, %138 : vector<2x128xf32>
    %180 = vector.extract_strided_slice %175 {offsets = [0, 0], sizes = [2, 128], strides = [1, 1]} : vector<2x384xf32> to vector<2x128xf32>
    %181 = arith.mulf %180, %177 : vector<2x128xf32>
    %182 = arith.addf %179, %181 : vector<2x128xf32>
    %183 = vector.extract_strided_slice %175 {offsets = [0, 256], sizes = [2, 128], strides = [1, 1]} : vector<2x384xf32> to vector<2x128xf32>
    %184 = math.tanh %182 : vector<2x128xf32>
    %185 = arith.mulf %183, %184 : vector<2x128xf32>
    %186 = vector.extract_strided_slice %8 {offsets = [0, 4, 0], sizes = [2, 1, 12], strides = [1, 1, 1]} : vector<2x8x12xf32> to vector<2x1x12xf32>
    %187 = vector.shape_cast %186 : vector<2x1x12xf32> to vector<2x12xf32>
    %cst_42 = arith.constant dense<0.000000e+00> : vector<2x512xf32>
    %188 = tpu.matmul %187, %2, %cst_42 {dimension_numbers = #tpu.dot_dimension_numbers<[1], [0], [0], [1], [0, 0, 1, 1], [], []>} : vector<2x12xf32>, vector<12x512xf32>, vector<2x512xf32> -> vector<2x512xf32>
    %189 = vector.broadcast %6 : vector<1x512xf32> to vector<2x512xf32>
    %190 = arith.addf %188, %189 : vector<2x512xf32>
    %cst_43 = arith.constant dense<0.000000e+00> : vector<2x512xf32>
    %191 = tpu.matmul %164, %4, %cst_43 {dimension_numbers = #tpu.dot_dimension_numbers<[1], [0], [0], [1], [0, 0, 1, 1], [], []>} : vector<2x128xf32>, vector<128x512xf32>, vector<2x512xf32> -> vector<2x512xf32>
    %192 = arith.addf %190, %191 : vector<2x512xf32>
    %193 = vector.extract_strided_slice %192 {offsets = [0, 0], sizes = [2, 384], strides = [1, 1]} : vector<2x512xf32> to vector<2x384xf32>
    %194 = arith.negf %193 : vector<2x384xf32>
    %195 = math.exp %194 : vector<2x384xf32>
    %cst_44 = arith.constant 1.000000e+00 : f32
    %196 = vector.broadcast %cst_44 : f32 to vector<2x384xf32>
    %197 = arith.addf %196, %195 : vector<2x384xf32>
    %198 = arith.divf %196, %197 : vector<2x384xf32>
    %199 = vector.extract_strided_slice %192 {offsets = [0, 384], sizes = [2, 128], strides = [1, 1]} : vector<2x512xf32> to vector<2x128xf32>
    %200 = math.tanh %199 : vector<2x128xf32>
    %201 = vector.extract_strided_slice %198 {offsets = [0, 128], sizes = [2, 128], strides = [1, 1]} : vector<2x384xf32> to vector<2x128xf32>
    %202 = arith.mulf %201, %161 : vector<2x128xf32>
    %203 = vector.extract_strided_slice %198 {offsets = [0, 0], sizes = [2, 128], strides = [1, 1]} : vector<2x384xf32> to vector<2x128xf32>
    %204 = arith.mulf %203, %200 : vector<2x128xf32>
    %205 = arith.addf %202, %204 : vector<2x128xf32>
    %206 = vector.extract_strided_slice %198 {offsets = [0, 256], sizes = [2, 128], strides = [1, 1]} : vector<2x384xf32> to vector<2x128xf32>
    %207 = math.tanh %205 : vector<2x128xf32>
    %208 = arith.mulf %206, %207 : vector<2x128xf32>
    %cst_45 = arith.constant dense<0.000000e+00> : vector<2x512xf32>
    %209 = tpu.matmul %208, %3, %cst_45 {dimension_numbers = #tpu.dot_dimension_numbers<[1], [0], [0], [1], [0, 0, 1, 1], [], []>} : vector<2x128xf32>, vector<128x512xf32>, vector<2x512xf32> -> vector<2x512xf32>
    %210 = vector.broadcast %7 : vector<1x512xf32> to vector<2x512xf32>
    %211 = arith.addf %209, %210 : vector<2x512xf32>
    %cst_46 = arith.constant dense<0.000000e+00> : vector<2x512xf32>
    %212 = tpu.matmul %185, %5, %cst_46 {dimension_numbers = #tpu.dot_dimension_numbers<[1], [0], [0], [1], [0, 0, 1, 1], [], []>} : vector<2x128xf32>, vector<128x512xf32>, vector<2x512xf32> -> vector<2x512xf32>
    %213 = arith.addf %211, %212 : vector<2x512xf32>
    %214 = vector.extract_strided_slice %213 {offsets = [0, 0], sizes = [2, 384], strides = [1, 1]} : vector<2x512xf32> to vector<2x384xf32>
    %215 = arith.negf %214 : vector<2x384xf32>
    %216 = math.exp %215 : vector<2x384xf32>
    %cst_47 = arith.constant 1.000000e+00 : f32
    %217 = vector.broadcast %cst_47 : f32 to vector<2x384xf32>
    %218 = arith.addf %217, %216 : vector<2x384xf32>
    %219 = arith.divf %217, %218 : vector<2x384xf32>
    %220 = vector.extract_strided_slice %213 {offsets = [0, 384], sizes = [2, 128], strides = [1, 1]} : vector<2x512xf32> to vector<2x128xf32>
    %221 = math.tanh %220 : vector<2x128xf32>
    %222 = vector.extract_strided_slice %219 {offsets = [0, 128], sizes = [2, 128], strides = [1, 1]} : vector<2x384xf32> to vector<2x128xf32>
    %223 = arith.mulf %222, %182 : vector<2x128xf32>
    %224 = vector.extract_strided_slice %219 {offsets = [0, 0], sizes = [2, 128], strides = [1, 1]} : vector<2x384xf32> to vector<2x128xf32>
    %225 = arith.mulf %224, %221 : vector<2x128xf32>
    %226 = arith.addf %223, %225 : vector<2x128xf32>
    %227 = vector.extract_strided_slice %219 {offsets = [0, 256], sizes = [2, 128], strides = [1, 1]} : vector<2x384xf32> to vector<2x128xf32>
    %228 = math.tanh %226 : vector<2x128xf32>
    %229 = arith.mulf %227, %228 : vector<2x128xf32>
    %230 = vector.extract_strided_slice %8 {offsets = [0, 5, 0], sizes = [2, 1, 12], strides = [1, 1, 1]} : vector<2x8x12xf32> to vector<2x1x12xf32>
    %231 = vector.shape_cast %230 : vector<2x1x12xf32> to vector<2x12xf32>
    %cst_48 = arith.constant dense<0.000000e+00> : vector<2x512xf32>
    %232 = tpu.matmul %231, %2, %cst_48 {dimension_numbers = #tpu.dot_dimension_numbers<[1], [0], [0], [1], [0, 0, 1, 1], [], []>} : vector<2x12xf32>, vector<12x512xf32>, vector<2x512xf32> -> vector<2x512xf32>
    %233 = vector.broadcast %6 : vector<1x512xf32> to vector<2x512xf32>
    %234 = arith.addf %232, %233 : vector<2x512xf32>
    %cst_49 = arith.constant dense<0.000000e+00> : vector<2x512xf32>
    %235 = tpu.matmul %208, %4, %cst_49 {dimension_numbers = #tpu.dot_dimension_numbers<[1], [0], [0], [1], [0, 0, 1, 1], [], []>} : vector<2x128xf32>, vector<128x512xf32>, vector<2x512xf32> -> vector<2x512xf32>
    %236 = arith.addf %234, %235 : vector<2x512xf32>
    %237 = vector.extract_strided_slice %236 {offsets = [0, 0], sizes = [2, 384], strides = [1, 1]} : vector<2x512xf32> to vector<2x384xf32>
    %238 = arith.negf %237 : vector<2x384xf32>
    %239 = math.exp %238 : vector<2x384xf32>
    %cst_50 = arith.constant 1.000000e+00 : f32
    %240 = vector.broadcast %cst_50 : f32 to vector<2x384xf32>
    %241 = arith.addf %240, %239 : vector<2x384xf32>
    %242 = arith.divf %240, %241 : vector<2x384xf32>
    %243 = vector.extract_strided_slice %236 {offsets = [0, 384], sizes = [2, 128], strides = [1, 1]} : vector<2x512xf32> to vector<2x128xf32>
    %244 = math.tanh %243 : vector<2x128xf32>
    %245 = vector.extract_strided_slice %242 {offsets = [0, 128], sizes = [2, 128], strides = [1, 1]} : vector<2x384xf32> to vector<2x128xf32>
    %246 = arith.mulf %245, %205 : vector<2x128xf32>
    %247 = vector.extract_strided_slice %242 {offsets = [0, 0], sizes = [2, 128], strides = [1, 1]} : vector<2x384xf32> to vector<2x128xf32>
    %248 = arith.mulf %247, %244 : vector<2x128xf32>
    %249 = arith.addf %246, %248 : vector<2x128xf32>
    %250 = vector.extract_strided_slice %242 {offsets = [0, 256], sizes = [2, 128], strides = [1, 1]} : vector<2x384xf32> to vector<2x128xf32>
    %251 = math.tanh %249 : vector<2x128xf32>
    %252 = arith.mulf %250, %251 : vector<2x128xf32>
    %cst_51 = arith.constant dense<0.000000e+00> : vector<2x512xf32>
    %253 = tpu.matmul %252, %3, %cst_51 {dimension_numbers = #tpu.dot_dimension_numbers<[1], [0], [0], [1], [0, 0, 1, 1], [], []>} : vector<2x128xf32>, vector<128x512xf32>, vector<2x512xf32> -> vector<2x512xf32>
    %254 = vector.broadcast %7 : vector<1x512xf32> to vector<2x512xf32>
    %255 = arith.addf %253, %254 : vector<2x512xf32>
    %cst_52 = arith.constant dense<0.000000e+00> : vector<2x512xf32>
    %256 = tpu.matmul %229, %5, %cst_52 {dimension_numbers = #tpu.dot_dimension_numbers<[1], [0], [0], [1], [0, 0, 1, 1], [], []>} : vector<2x128xf32>, vector<128x512xf32>, vector<2x512xf32> -> vector<2x512xf32>
    %257 = arith.addf %255, %256 : vector<2x512xf32>
    %258 = vector.extract_strided_slice %257 {offsets = [0, 0], sizes = [2, 384], strides = [1, 1]} : vector<2x512xf32> to vector<2x384xf32>
    %259 = arith.negf %258 : vector<2x384xf32>
    %260 = math.exp %259 : vector<2x384xf32>
    %cst_53 = arith.constant 1.000000e+00 : f32
    %261 = vector.broadcast %cst_53 : f32 to vector<2x384xf32>
    %262 = arith.addf %261, %260 : vector<2x384xf32>
    %263 = arith.divf %261, %262 : vector<2x384xf32>
    %264 = vector.extract_strided_slice %257 {offsets = [0, 384], sizes = [2, 128], strides = [1, 1]} : vector<2x512xf32> to vector<2x128xf32>
    %265 = math.tanh %264 : vector<2x128xf32>
    %266 = vector.extract_strided_slice %263 {offsets = [0, 128], sizes = [2, 128], strides = [1, 1]} : vector<2x384xf32> to vector<2x128xf32>
    %267 = arith.mulf %266, %226 : vector<2x128xf32>
    %268 = vector.extract_strided_slice %263 {offsets = [0, 0], sizes = [2, 128], strides = [1, 1]} : vector<2x384xf32> to vector<2x128xf32>
    %269 = arith.mulf %268, %265 : vector<2x128xf32>
    %270 = arith.addf %267, %269 : vector<2x128xf32>
    %271 = vector.extract_strided_slice %263 {offsets = [0, 256], sizes = [2, 128], strides = [1, 1]} : vector<2x384xf32> to vector<2x128xf32>
    %272 = math.tanh %270 : vector<2x128xf32>
    %273 = arith.mulf %271, %272 : vector<2x128xf32>
    %274 = vector.extract_strided_slice %8 {offsets = [0, 6, 0], sizes = [2, 1, 12], strides = [1, 1, 1]} : vector<2x8x12xf32> to vector<2x1x12xf32>
    %275 = vector.shape_cast %274 : vector<2x1x12xf32> to vector<2x12xf32>
    %cst_54 = arith.constant dense<0.000000e+00> : vector<2x512xf32>
    %276 = tpu.matmul %275, %2, %cst_54 {dimension_numbers = #tpu.dot_dimension_numbers<[1], [0], [0], [1], [0, 0, 1, 1], [], []>} : vector<2x12xf32>, vector<12x512xf32>, vector<2x512xf32> -> vector<2x512xf32>
    %277 = vector.broadcast %6 : vector<1x512xf32> to vector<2x512xf32>
    %278 = arith.addf %276, %277 : vector<2x512xf32>
    %cst_55 = arith.constant dense<0.000000e+00> : vector<2x512xf32>
    %279 = tpu.matmul %252, %4, %cst_55 {dimension_numbers = #tpu.dot_dimension_numbers<[1], [0], [0], [1], [0, 0, 1, 1], [], []>} : vector<2x128xf32>, vector<128x512xf32>, vector<2x512xf32> -> vector<2x512xf32>
    %280 = arith.addf %278, %279 : vector<2x512xf32>
    %281 = vector.extract_strided_slice %280 {offsets = [0, 0], sizes = [2, 384], strides = [1, 1]} : vector<2x512xf32> to vector<2x384xf32>
    %282 = arith.negf %281 : vector<2x384xf32>
    %283 = math.exp %282 : vector<2x384xf32>
    %cst_56 = arith.constant 1.000000e+00 : f32
    %284 = vector.broadcast %cst_56 : f32 to vector<2x384xf32>
    %285 = arith.addf %284, %283 : vector<2x384xf32>
    %286 = arith.divf %284, %285 : vector<2x384xf32>
    %287 = vector.extract_strided_slice %280 {offsets = [0, 384], sizes = [2, 128], strides = [1, 1]} : vector<2x512xf32> to vector<2x128xf32>
    %288 = math.tanh %287 : vector<2x128xf32>
    %289 = vector.extract_strided_slice %286 {offsets = [0, 128], sizes = [2, 128], strides = [1, 1]} : vector<2x384xf32> to vector<2x128xf32>
    %290 = arith.mulf %289, %249 : vector<2x128xf32>
    %291 = vector.extract_strided_slice %286 {offsets = [0, 0], sizes = [2, 128], strides = [1, 1]} : vector<2x384xf32> to vector<2x128xf32>
    %292 = arith.mulf %291, %288 : vector<2x128xf32>
    %293 = arith.addf %290, %292 : vector<2x128xf32>
    %294 = vector.extract_strided_slice %286 {offsets = [0, 256], sizes = [2, 128], strides = [1, 1]} : vector<2x384xf32> to vector<2x128xf32>
    %295 = math.tanh %293 : vector<2x128xf32>
    %296 = arith.mulf %294, %295 : vector<2x128xf32>
    %cst_57 = arith.constant dense<0.000000e+00> : vector<2x512xf32>
    %297 = tpu.matmul %296, %3, %cst_57 {dimension_numbers = #tpu.dot_dimension_numbers<[1], [0], [0], [1], [0, 0, 1, 1], [], []>} : vector<2x128xf32>, vector<128x512xf32>, vector<2x512xf32> -> vector<2x512xf32>
    %298 = vector.broadcast %7 : vector<1x512xf32> to vector<2x512xf32>
    %299 = arith.addf %297, %298 : vector<2x512xf32>
    %cst_58 = arith.constant dense<0.000000e+00> : vector<2x512xf32>
    %300 = tpu.matmul %273, %5, %cst_58 {dimension_numbers = #tpu.dot_dimension_numbers<[1], [0], [0], [1], [0, 0, 1, 1], [], []>} : vector<2x128xf32>, vector<128x512xf32>, vector<2x512xf32> -> vector<2x512xf32>
    %301 = arith.addf %299, %300 : vector<2x512xf32>
    %302 = vector.extract_strided_slice %301 {offsets = [0, 0], sizes = [2, 384], strides = [1, 1]} : vector<2x512xf32> to vector<2x384xf32>
    %303 = arith.negf %302 : vector<2x384xf32>
    %304 = math.exp %303 : vector<2x384xf32>
    %cst_59 = arith.constant 1.000000e+00 : f32
    %305 = vector.broadcast %cst_59 : f32 to vector<2x384xf32>
    %306 = arith.addf %305, %304 : vector<2x384xf32>
    %307 = arith.divf %305, %306 : vector<2x384xf32>
    %308 = vector.extract_strided_slice %301 {offsets = [0, 384], sizes = [2, 128], strides = [1, 1]} : vector<2x512xf32> to vector<2x128xf32>
    %309 = math.tanh %308 : vector<2x128xf32>
    %310 = vector.extract_strided_slice %307 {offsets = [0, 128], sizes = [2, 128], strides = [1, 1]} : vector<2x384xf32> to vector<2x128xf32>
    %311 = arith.mulf %310, %270 : vector<2x128xf32>
    %312 = vector.extract_strided_slice %307 {offsets = [0, 0], sizes = [2, 128], strides = [1, 1]} : vector<2x384xf32> to vector<2x128xf32>
    %313 = arith.mulf %312, %309 : vector<2x128xf32>
    %314 = arith.addf %311, %313 : vector<2x128xf32>
    %315 = vector.extract_strided_slice %307 {offsets = [0, 256], sizes = [2, 128], strides = [1, 1]} : vector<2x384xf32> to vector<2x128xf32>
    %316 = math.tanh %314 : vector<2x128xf32>
    %317 = arith.mulf %315, %316 : vector<2x128xf32>
    %318 = vector.extract_strided_slice %8 {offsets = [0, 7, 0], sizes = [2, 1, 12], strides = [1, 1, 1]} : vector<2x8x12xf32> to vector<2x1x12xf32>
    %319 = vector.shape_cast %318 : vector<2x1x12xf32> to vector<2x12xf32>
    %cst_60 = arith.constant dense<0.000000e+00> : vector<2x512xf32>
    %320 = tpu.matmul %319, %2, %cst_60 {dimension_numbers = #tpu.dot_dimension_numbers<[1], [0], [0], [1], [0, 0, 1, 1], [], []>} : vector<2x12xf32>, vector<12x512xf32>, vector<2x512xf32> -> vector<2x512xf32>
    %321 = vector.broadcast %6 : vector<1x512xf32> to vector<2x512xf32>
    %322 = arith.addf %320, %321 : vector<2x512xf32>
    %cst_61 = arith.constant dense<0.000000e+00> : vector<2x512xf32>
    %323 = tpu.matmul %296, %4, %cst_61 {dimension_numbers = #tpu.dot_dimension_numbers<[1], [0], [0], [1], [0, 0, 1, 1], [], []>} : vector<2x128xf32>, vector<128x512xf32>, vector<2x512xf32> -> vector<2x512xf32>
    %324 = arith.addf %322, %323 : vector<2x512xf32>
    %325 = vector.extract_strided_slice %324 {offsets = [0, 0], sizes = [2, 384], strides = [1, 1]} : vector<2x512xf32> to vector<2x384xf32>
    %326 = arith.negf %325 : vector<2x384xf32>
    %327 = math.exp %326 : vector<2x384xf32>
    %cst_62 = arith.constant 1.000000e+00 : f32
    %328 = vector.broadcast %cst_62 : f32 to vector<2x384xf32>
    %329 = arith.addf %328, %327 : vector<2x384xf32>
    %330 = arith.divf %328, %329 : vector<2x384xf32>
    %331 = vector.extract_strided_slice %324 {offsets = [0, 384], sizes = [2, 128], strides = [1, 1]} : vector<2x512xf32> to vector<2x128xf32>
    %332 = math.tanh %331 : vector<2x128xf32>
    %333 = vector.extract_strided_slice %330 {offsets = [0, 128], sizes = [2, 128], strides = [1, 1]} : vector<2x384xf32> to vector<2x128xf32>
    %334 = arith.mulf %333, %293 : vector<2x128xf32>
    %335 = vector.extract_strided_slice %330 {offsets = [0, 0], sizes = [2, 128], strides = [1, 1]} : vector<2x384xf32> to vector<2x128xf32>
    %336 = arith.mulf %335, %332 : vector<2x128xf32>
    %337 = arith.addf %334, %336 : vector<2x128xf32>
    %338 = vector.extract_strided_slice %330 {offsets = [0, 256], sizes = [2, 128], strides = [1, 1]} : vector<2x384xf32> to vector<2x128xf32>
    %339 = math.tanh %337 : vector<2x128xf32>
    %340 = arith.mulf %338, %339 : vector<2x128xf32>
    %cst_63 = arith.constant dense<0.000000e+00> : vector<2x512xf32>
    %341 = tpu.matmul %340, %3, %cst_63 {dimension_numbers = #tpu.dot_dimension_numbers<[1], [0], [0], [1], [0, 0, 1, 1], [], []>} : vector<2x128xf32>, vector<128x512xf32>, vector<2x512xf32> -> vector<2x512xf32>
    %342 = vector.broadcast %7 : vector<1x512xf32> to vector<2x512xf32>
    %343 = arith.addf %341, %342 : vector<2x512xf32>
    %cst_64 = arith.constant dense<0.000000e+00> : vector<2x512xf32>
    %344 = tpu.matmul %317, %5, %cst_64 {dimension_numbers = #tpu.dot_dimension_numbers<[1], [0], [0], [1], [0, 0, 1, 1], [], []>} : vector<2x128xf32>, vector<128x512xf32>, vector<2x512xf32> -> vector<2x512xf32>
    %345 = arith.addf %343, %344 : vector<2x512xf32>
    %346 = vector.extract_strided_slice %345 {offsets = [0, 0], sizes = [2, 384], strides = [1, 1]} : vector<2x512xf32> to vector<2x384xf32>
    %347 = arith.negf %346 : vector<2x384xf32>
    %348 = math.exp %347 : vector<2x384xf32>
    %cst_65 = arith.constant 1.000000e+00 : f32
    %349 = vector.broadcast %cst_65 : f32 to vector<2x384xf32>
    %350 = arith.addf %349, %348 : vector<2x384xf32>
    %351 = arith.divf %349, %350 : vector<2x384xf32>
    %352 = vector.extract_strided_slice %345 {offsets = [0, 384], sizes = [2, 128], strides = [1, 1]} : vector<2x512xf32> to vector<2x128xf32>
    %353 = math.tanh %352 : vector<2x128xf32>
    %354 = vector.extract_strided_slice %351 {offsets = [0, 128], sizes = [2, 128], strides = [1, 1]} : vector<2x384xf32> to vector<2x128xf32>
    %355 = arith.mulf %354, %314 : vector<2x128xf32>
    %356 = vector.extract_strided_slice %351 {offsets = [0, 0], sizes = [2, 128], strides = [1, 1]} : vector<2x384xf32> to vector<2x128xf32>
    %357 = arith.mulf %356, %353 : vector<2x128xf32>
    %358 = arith.addf %355, %357 : vector<2x128xf32>
    %359 = vector.extract_strided_slice %351 {offsets = [0, 256], sizes = [2, 128], strides = [1, 1]} : vector<2x384xf32> to vector<2x128xf32>
    %360 = math.tanh %358 : vector<2x128xf32>
    %361 = arith.mulf %359, %360 : vector<2x128xf32>
    %cst_66 = arith.constant dense<0.000000e+00> : vector<2x3xf32>
    %362 = tpu.matmul %361, %0, %cst_66 {dimension_numbers = #tpu.dot_dimension_numbers<[1], [0], [0], [1], [0, 0, 1, 1], [], []>} : vector<2x128xf32>, vector<128x3xf32>, vector<2x3xf32> -> vector<2x3xf32>
    %363 = vector.broadcast %1 : vector<1x3xf32> to vector<2x3xf32>
    %364 = arith.addf %362, %363 : vector<2x3xf32>
    %c0_67 = arith.constant 0 : index
    %c0_68 = arith.constant 0 : index
    %365 = vector.load %arg9[%c0_67, %c0_68] : memref<2x3xf32, #tpu.memory_space<vmem>>, vector<2x3xf32>
    tpu.vector_store %arg9[%c0_67, %c0_68], %364 {strides = array<i32>} : memref<2x3xf32, #tpu.memory_space<vmem>>, vector<2x3xf32>,
    return
  }
}

</mosaic_0001>

<llo_original>
// kernel: tpu_custom_call.1
$region0: #{tpu_custom_call.1}
  #allocation0 [shape = 'u32[]', space=smem, size = 0x4, offset = 0x4, fixed_abs, tag = 'smem constant byte address 0x4 - core index']
  #allocation1 [shape = 'u32[144,128]{1,0:T(1,128)}', space=vmem, size = 0x12000, scoped, tag = 'internal scratch']
  %s0 = inlined_call_operand.vmem [shape: f32[2,8,12], index: 0, kind: input, shape index: {}]
  %s1 = inlined_call_operand.vmem [shape: f32[12,512], index: 1, kind: input, shape index: {}]
  %s2 = inlined_call_operand.hbm [shape: f32[128,512], index: 2, kind: input, shape index: {}]
  %s3 = inlined_call_operand.vmem [shape: f32[1,512], index: 3, kind: input, shape index: {}]
  %s4 = inlined_call_operand.hbm [shape: f32[128,512], index: 4, kind: input, shape index: {}]
  %s5 = inlined_call_operand.hbm [shape: f32[128,512], index: 5, kind: input, shape index: {}]
  %s6 = inlined_call_operand.vmem [shape: f32[1,512], index: 6, kind: input, shape index: {}]
  %s7 = inlined_call_operand.vmem [shape: f32[128,3], index: 7, kind: input, shape index: {}]
  %s8 = inlined_call_operand.vmem [shape: f32[1,3], index: 8, kind: input, shape index: {}]
  %s9 = inlined_call_operand.hbm [shape: f32[2,3], index: 9, kind: output, shape index: {}]
  %s10 = sld [smem:[#allocation0]]
  $region58: #{tpu_custom_call.1} parent=0
    _
  %s12 = ssub.s32 1, %s10
  %s13 = scalar_select 0, %s12, %s10
  $region1: #{tpu_custom_call.1} parent=0
    #allocation2 [shape = 'u8[262144]{0}', space=vmem, size = 0x40000, scoped, tag = 'input window, operand 2, single buffered']
    #allocation3 [shape = 's32[1]{0}', space=sflag, size = 0x4, scoped, tag = 'scoped memory for tpu_custom_call.1']
    #allocation4 [shape = 's32[1]{0}', space=sflag, size = 0x4, scoped, tag = 'scoped memory for tpu_custom_call.1']
    #allocation5 [shape = 'u8[262144]{0}', space=vmem, size = 0x40000, scoped, tag = 'input window, operand 4, single buffered']
    #allocation6 [shape = 's32[1]{0}', space=sflag, size = 0x4, scoped, tag = 'scoped memory for tpu_custom_call.1']
    #allocation7 [shape = 'u8[262144]{0}', space=vmem, size = 0x40000, scoped, tag = 'input window, operand 5, single buffered']
    #allocation8 [shape = 'u8[1024]{0}', space=vmem, size = 0x400, scoped, tag = 'output window, operand 0, single buffered']
    %14 = vsyncpa [#allocation3], 0
    %15 = vsyncpa [#allocation6], 0
    %16 = vsyncpa [#allocation4], 0
    // Predicated region
    $region2: #{tpu_custom_call.1} parent=1 // pred_check
      _
    $region3: #{tpu_custom_call.1} parent=1 // pred_check_branch
      %18 = sbr.rel (0) target = $region5
    $region4: #{tpu_custom_call.1} parent=1 // pred_region
      _
    $region5: #{tpu_custom_call.1} parent=1 // pred_fallthru
      _
    // Predicated region
    $region6: #{tpu_custom_call.1} parent=1 // pred_check
      _
    $region7: #{tpu_custom_call.1} parent=1 // pred_check_branch
      %20 = sbr.rel (0) target = $region9
    $region8: #{tpu_custom_call.1} parent=1 // pred_region
      _
    $region9: #{tpu_custom_call.1} parent=1 // pred_fallthru
      _
    // Predicated region
    $region10: #{tpu_custom_call.1} parent=1 // pred_check
      _
    $region11: #{tpu_custom_call.1} parent=1 // pred_check_branch
      %22 = sbr.rel (0) target = $region13
    $region12: #{tpu_custom_call.1} parent=1 // pred_region
      %s24 = ssub.s32 8192, 8192
      %25 = vsyncadd [#allocation3], %s24
      %s26 = sshll.u32 [#allocation2], 4
      %s27 = int_to_ptr.vmem [resolvable:$true] %s26
      %32 = dma.hbm_to_vmem [thread:$0]  %s2, 8192, %s27, [#allocation3], 512, 512, 32
    $region13: #{tpu_custom_call.1} parent=1 // pred_fallthru
      _
    // Predicated region
    $region14: #{tpu_custom_call.1} parent=1 // pred_check
      _
    $region15: #{tpu_custom_call.1} parent=1 // pred_check_branch
      %34 = sbr.rel (0) target = $region17
    $region16: #{tpu_custom_call.1} parent=1 // pred_region
      _
    $region17: #{tpu_custom_call.1} parent=1 // pred_fallthru
      _
    // Predicated region
    $region18: #{tpu_custom_call.1} parent=1 // pred_check
      _
    $region19: #{tpu_custom_call.1} parent=1 // pred_check_branch
      %36 = sbr.rel (0) target = $region21
    $region20: #{tpu_custom_call.1} parent=1 // pred_region
      %s38 = ssub.s32 8192, 8192
      %39 = vsyncadd [#allocation6], %s38
      %s40 = sshll.u32 [#allocation5], 4
      %s41 = int_to_ptr.vmem [resolvable:$true] %s40
      %46 = dma.hbm_to_vmem [thread:$0]  %s4, 8192, %s41, [#allocation6], 512, 512, 32
    $region21: #{tpu_custom_call.1} parent=1 // pred_fallthru
      _
    // Predicated region
    $region22: #{tpu_custom_call.1} parent=1 // pred_check
      _
    $region23: #{tpu_custom_call.1} parent=1 // pred_check_branch
      %48 = sbr.rel (0) target = $region25
    $region24: #{tpu_custom_call.1} parent=1 // pred_region
      %s50 = ssub.s32 8192, 8192
      %51 = vsyncadd [#allocation6], %s50
      %s52 = sshll.u32 [#allocation7], 4
      %s53 = int_to_ptr.vmem [resolvable:$true] %s52
      %58 = dma.hbm_to_vmem [thread:$0]  %s5, 8192, %s53, [#allocation6], 512, 512, 32
    $region25: #{tpu_custom_call.1} parent=1 // pred_fallthru
      _
    // Predicated region
    $region26: #{tpu_custom_call.1} parent=1 // pred_check
      _
    $region27: #{tpu_custom_call.1} parent=1 // pred_check_branch
      %60 = sbr.rel (0) target = $region29
    $region28: #{tpu_custom_call.1} parent=1 // pred_region
      _
    $region29: #{tpu_custom_call.1} parent=1 // pred_fallthru
      _
    // Predicated region
    $region30: #{tpu_custom_call.1} parent=1 // pred_check
      _
    $region31: #{tpu_custom_call.1} parent=1 // pred_check_branch
      %62 = sbr.rel (0) target = $region33
    $region32: #{tpu_custom_call.1} parent=1 // pred_region
      _
    $region33: #{tpu_custom_call.1} parent=1 // pred_fallthru
      _
    // Predicated region
    $region34: #{tpu_custom_call.1} parent=1 // pred_check
      _
    $region35: #{tpu_custom_call.1} parent=1 // pred_check_branch
      %64 = sbr.rel (0) target = $region37
    $region36: #{tpu_custom_call.1} parent=1 // pred_region
      _
    $region37: #{tpu_custom_call.1} parent=1 // pred_fallthru
      _
    // Predicated region
    $region38: #{tpu_custom_call.1} parent=1 // pred_check
      _
    $region39: #{tpu_custom_call.1} parent=1 // pred_check_branch
      %66 = sbr.rel (0) target = $region41
    $region40: #{tpu_custom_call.1} parent=1 // pred_region
      %67 = dma.done [#allocation3], 8192
    $region41: #{tpu_custom_call.1} parent=1 // pred_fallthru
      _
    // Predicated region
    $region42: #{tpu_custom_call.1} parent=1 // pred_check
      _
    $region43: #{tpu_custom_call.1} parent=1 // pred_check_branch
      %69 = sbr.rel (0) target = $region45
    $region44: #{tpu_custom_call.1} parent=1 // pred_region
      %70 = dma.done [#allocation6], 8192
    $region45: #{tpu_custom_call.1} parent=1 // pred_fallthru
      _
    // Predicated region
    $region46: #{tpu_custom_call.1} parent=1 // pred_check
      _
    $region47: #{tpu_custom_call.1} parent=1 // pred_check_branch
      %72 = sbr.rel (0) target = $region49
    $region48: #{tpu_custom_call.1} parent=1 // pred_region
      %73 = dma.done [#allocation6], 8192
    $region49: #{tpu_custom_call.1} parent=1 // pred_fallthru
      _
    %v74 = vld [vmem:[%s7] sm:$0xff]
    %v75 = vld [vmem:[%s7 + $0x8] sm:$0xff]
    %v76 = vld [vmem:[%s7 + $0x10] sm:$0xff]
    %v77 = vld [vmem:[%s7 + $0x18] sm:$0xff]
    %v78 = vld [vmem:[%s7 + $0x20] sm:$0xff]
    %v79 = vld [vmem:[%s7 + $0x28] sm:$0xff]
    %v80 = vld [vmem:[%s7 + $0x30] sm:$0xff]
    %v81 = vld [vmem:[%s7 + $0x38] sm:$0xff]
    %v82 = vld [vmem:[%s7 + $0x40] sm:$0xff]
    %v83 = vld [vmem:[%s7 + $0x48] sm:$0xff]
    %v84 = vld [vmem:[%s7 + $0x50] sm:$0xff]
    %v85 = vld [vmem:[%s7 + $0x58] sm:$0xff]
    %v86 = vld [vmem:[%s7 + $0x60] sm:$0xff]
    %v87 = vld [vmem:[%s7 + $0x68] sm:$0xff]
    %v88 = vld [vmem:[%s7 + $0x70] sm:$0xff]
    %v89 = vld [vmem:[%s7 + $0x78] sm:$0xff]
    %v90 = vld [vmem:[%s8] sm:$0x1]
    %v91 = vld [vmem:[%s1] sm:$0xff]
    %v92 = vld [vmem:[%s1 + $0x8] sm:$0xff]
    %v93 = vld [vmem:[%s1 + $0x10] sm:$0xff]
    %v94 = vld [vmem:[%s1 + $0x18] sm:$0xff]
    %v95 = vld [vmem:[%s1 + $0x20] sm:$0xf]
    %v96 = vld [vmem:[%s1 + $0x28] sm:$0xf]
    %v97 = vld [vmem:[%s1 + $0x30] sm:$0xf]
    %v98 = vld [vmem:[%s1 + $0x38] sm:$0xf]
    %v99 = vld [vmem:[#allocation5] sm:$0xff]
    %v100 = vld [vmem:[#allocation5 + $0x8] sm:$0xff]
    %v101 = vld [vmem:[#allocation5 + $0x10] sm:$0xff]
    %v102 = vld [vmem:[#allocation5 + $0x18] sm:$0xff]
    %v103 = vld [vmem:[#allocation5 + $0x20] sm:$0xff]
    %v104 = vld [vmem:[#allocation5 + $0x28] sm:$0xff]
    %v105 = vld [vmem:[#allocation5 + $0x30] sm:$0xff]
    %v106 = vld [vmem:[#allocation5 + $0x38] sm:$0xff]
    %v107 = vld [vmem:[#allocation5 + $0x40] sm:$0xff]
    %v108 = vld [vmem:[#allocation5 + $0x48] sm:$0xff]
    %v109 = vld [vmem:[#allocation5 + $0x50] sm:$0xff]
    %v110 = vld [vmem:[#allocation5 + $0x58] sm:$0xff]
    %v111 = vld [vmem:[#allocation5 + $0x60] sm:$0xff]
    %v112 = vld [vmem:[#allocation5 + $0x68] sm:$0xff]
    %v113 = vld [vmem:[#allocation5 + $0x70] sm:$0xff]
    %v114 = vld [vmem:[#allocation5 + $0x78] sm:$0xff]
    %v115 = vld [vmem:[#allocation5 + $0x80] sm:$0xff]
    %v116 = vld [vmem:[#allocation5 + $0x88] sm:$0xff]
    %v117 = vld [vmem:[#allocation5 + $0x90] sm:$0xff]
    %v118 = vld [vmem:[#allocation5 + $0x98] sm:$0xff]
    %v119 = vld [vmem:[#allocation5 + $0xa0] sm:$0xff]
    %v120 = vld [vmem:[#allocation5 + $0xa8] sm:$0xff]
    %v121 = vld [vmem:[#allocation5 + $0xb0] sm:$0xff]
    %v122 = vld [vmem:[#allocation5 + $0xb8] sm:$0xff]
    %v123 = vld [vmem:[#allocation5 + $0xc0] sm:$0xff]
    %v124 = vld [vmem:[#allocation5 + $0xc8] sm:$0xff]
    %v125 = vld [vmem:[#allocation5 + $0xd0] sm:$0xff]
    %v126 = vld [vmem:[#allocation5 + $0xd8] sm:$0xff]
    %v127 = vld [vmem:[#allocation5 + $0xe0] sm:$0xff]
    %v128 = vld [vmem:[#allocation5 + $0xe8] sm:$0xff]
    %v129 = vld [vmem:[#allocation5 + $0xf0] sm:$0xff]
    %v130 = vld [vmem:[#allocation5 + $0xf8] sm:$0xff]
    %v131 = vld [vmem:[#allocation5 + $0x100] sm:$0xff]
    %v132 = vld [vmem:[#allocation5 + $0x108] sm:$0xff]
    %v133 = vld [vmem:[#allocation5 + $0x110] sm:$0xff]
    %v134 = vld [vmem:[#allocation5 + $0x118] sm:$0xff]
    %v135 = vld [vmem:[#allocation5 + $0x120] sm:$0xff]
    %v136 = vld [vmem:[#allocation5 + $0x128] sm:$0xff]
    %v137 = vld [vmem:[#allocation5 + $0x130] sm:$0xff]
    %v138 = vld [vmem:[#allocation5 + $0x138] sm:$0xff]
    %v139 = vld [vmem:[#allocation5 + $0x140] sm:$0xff]
    %v140 = vld [vmem:[#allocation5 + $0x148] sm:$0xff]
    %v141 = vld [vmem:[#allocation5 + $0x150] sm:$0xff]
    %v142 = vld [vmem:[#allocation5 + $0x158] sm:$0xff]
    %v143 = vld [vmem:[#allocation5 + $0x160] sm:$0xff]
    %v144 = vld [vmem:[#allocation5 + $0x168] sm:$0xff]
    %v145 = vld [vmem:[#allocation5 + $0x170] sm:$0xff]
    %v146 = vld [vmem:[#allocation5 + $0x178] sm:$0xff]
    %v147 = vld [vmem:[#allocation5 + $0x180] sm:$0xff]
    %v148 = vld [vmem:[#allocation5 + $0x188] sm:$0xff]
    %v149 = vld [vmem:[#allocation5 + $0x190] sm:$0xff]
    %v150 = vld [vmem:[#allocation5 + $0x198] sm:$0xff]
    %v151 = vld [vmem:[#allocation5 + $0x1a0] sm:$0xff]
    %v152 = vld [vmem:[#allocation5 + $0x1a8] sm:$0xff]
    %v153 = vld [vmem:[#allocation5 + $0x1b0] sm:$0xff]
    %v154 = vld [vmem:[#allocation5 + $0x1b8] sm:$0xff]
    %v155 = vld [vmem:[#allocation5 + $0x1c0] sm:$0xff]
    %v156 = vld [vmem:[#allocation5 + $0x1c8] sm:$0xff]
    %v157 = vld [vmem:[#allocation5 + $0x1d0] sm:$0xff]
    %v158 = vld [vmem:[#allocation5 + $0x1d8] sm:$0xff]
    %v159 = vld [vmem:[#allocation5 + $0x1e0] sm:$0xff]
    %v160 = vld [vmem:[#allocation5 + $0x1e8] sm:$0xff]
    %v161 = vld [vmem:[#allocation5 + $0x1f0] sm:$0xff]
    %v162 = vld [vmem:[#allocation5 + $0x1f8] sm:$0xff]
    %v163 = vld [vmem:[#allocation2] sm:$0xff]
    %v164 = vld [vmem:[#allocation2 + $0x8] sm:$0xff]
    %v165 = vld [vmem:[#allocation2 + $0x10] sm:$0xff]
    %v166 = vld [vmem:[#allocation2 + $0x18] sm:$0xff]
    %v167 = vld [vmem:[#allocation2 + $0x20] sm:$0xff]
    %v168 = vld [vmem:[#allocation2 + $0x28] sm:$0xff]
    %v169 = vld [vmem:[#allocation2 + $0x30] sm:$0xff]
    %v170 = vld [vmem:[#allocation2 + $0x38] sm:$0xff]
    %v171 = vld [vmem:[#allocation2 + $0x40] sm:$0xff]
    %v172 = vld [vmem:[#allocation2 + $0x48] sm:$0xff]
    %v173 = vld [vmem:[#allocation2 + $0x50] sm:$0xff]
    %v174 = vld [vmem:[#allocation2 + $0x58] sm:$0xff]
    %v175 = vld [vmem:[#allocation2 + $0x60] sm:$0xff]
    %v176 = vld [vmem:[#allocation2 + $0x68] sm:$0xff]
    %v177 = vld [vmem:[#allocation2 + $0x70] sm:$0xff]
    %v178 = vld [vmem:[#allocation2 + $0x78] sm:$0xff]
    %v179 = vld [vmem:[#allocation2 + $0x80] sm:$0xff]
    %v180 = vld [vmem:[#allocation2 + $0x88] sm:$0xff]
    %v181 = vld [vmem:[#allocation2 + $0x90] sm:$0xff]
    %v182 = vld [vmem:[#allocation2 + $0x98] sm:$0xff]
    %v183 = vld [vmem:[#allocation2 + $0xa0] sm:$0xff]
    %v184 = vld [vmem:[#allocation2 + $0xa8] sm:$0xff]
    %v185 = vld [vmem:[#allocation2 + $0xb0] sm:$0xff]
    %v186 = vld [vmem:[#allocation2 + $0xb8] sm:$0xff]
    %v187 = vld [vmem:[#allocation2 + $0xc0] sm:$0xff]
    %v188 = vld [vmem:[#allocation2 + $0xc8] sm:$0xff]
    %v189 = vld [vmem:[#allocation2 + $0xd0] sm:$0xff]
    %v190 = vld [vmem:[#allocation2 + $0xd8] sm:$0xff]
    %v191 = vld [vmem:[#allocation2 + $0xe0] sm:$0xff]
    %v192 = vld [vmem:[#allocation2 + $0xe8] sm:$0xff]
    %v193 = vld [vmem:[#allocation2 + $0xf0] sm:$0xff]
    %v194 = vld [vmem:[#allocation2 + $0xf8] sm:$0xff]
    %v195 = vld [vmem:[#allocation2 + $0x100] sm:$0xff]
    %v196 = vld [vmem:[#allocation2 + $0x108] sm:$0xff]
    %v197 = vld [vmem:[#allocation2 + $0x110] sm:$0xff]
    %v198 = vld [vmem:[#allocation2 + $0x118] sm:$0xff]
    %v199 = vld [vmem:[#allocation2 + $0x120] sm:$0xff]
    %v200 = vld [vmem:[#allocation2 + $0x128] sm:$0xff]
    %v201 = vld [vmem:[#allocation2 + $0x130] sm:$0xff]
    %v202 = vld [vmem:[#allocation2 + $0x138] sm:$0xff]
    %v203 = vld [vmem:[#allocation2 + $0x140] sm:$0xff]
    %v204 = vld [vmem:[#allocation2 + $0x148] sm:$0xff]
    %v205 = vld [vmem:[#allocation2 + $0x150] sm:$0xff]
    %v206 = vld [vmem:[#allocation2 + $0x158] sm:$0xff]
    %v207 = vld [vmem:[#allocation2 + $0x160] sm:$0xff]
    %v208 = vld [vmem:[#allocation2 + $0x168] sm:$0xff]
    %v209 = vld [vmem:[#allocation2 + $0x170] sm:$0xff]
    %v210 = vld [vmem:[#allocation2 + $0x178] sm:$0xff]
    %v211 = vld [vmem:[#allocation2 + $0x180] sm:$0xff]
    %v212 = vld [vmem:[#allocation2 + $0x188] sm:$0xff]
    %v213 = vld [vmem:[#allocation2 + $0x190] sm:$0xff]
    %v214 = vld [vmem:[#allocation2 + $0x198] sm:$0xff]
    %v215 = vld [vmem:[#allocation2 + $0x1a0] sm:$0xff]
    %v216 = vld [vmem:[#allocation2 + $0x1a8] sm:$0xff]
    %v217 = vld [vmem:[#allocation2 + $0x1b0] sm:$0xff]
    %v218 = vld [vmem:[#allocation2 + $0x1b8] sm:$0xff]
    %v219 = vld [vmem:[#allocation2 + $0x1c0] sm:$0xff]
    %v220 = vld [vmem:[#allocation2 + $0x1c8] sm:$0xff]
    %v221 = vld [vmem:[#allocation2 + $0x1d0] sm:$0xff]
    %v222 = vld [vmem:[#allocation2 + $0x1d8] sm:$0xff]
    %v223 = vld [vmem:[#allocation2 + $0x1e0] sm:$0xff]
    %v224 = vld [vmem:[#allocation2 + $0x1e8] sm:$0xff]
    %v225 = vld [vmem:[#allocation2 + $0x1f0] sm:$0xff]
    %v226 = vld [vmem:[#allocation2 + $0x1f8] sm:$0xff]
    %v227 = vld [vmem:[#allocation7] sm:$0xff]
    %v228 = vld [vmem:[#allocation7 + $0x8] sm:$0xff]
    %v229 = vld [vmem:[#allocation7 + $0x10] sm:$0xff]
    %v230 = vld [vmem:[#allocation7 + $0x18] sm:$0xff]
    %v231 = vld [vmem:[#allocation7 + $0x20] sm:$0xff]
    %v232 = vld [vmem:[#allocation7 + $0x28] sm:$0xff]
    %v233 = vld [vmem:[#allocation7 + $0x30] sm:$0xff]
    %v234 = vld [vmem:[#allocation7 + $0x38] sm:$0xff]
    %v235 = vld [vmem:[#allocation7 + $0x40] sm:$0xff]
    %v236 = vld [vmem:[#allocation7 + $0x48] sm:$0xff]
    %v237 = vld [vmem:[#allocation7 + $0x50] sm:$0xff]
    %v238 = vld [vmem:[#allocation7 + $0x58] sm:$0xff]
    %v239 = vld [vmem:[#allocation7 + $0x60] sm:$0xff]
    %v240 = vld [vmem:[#allocation7 + $0x68] sm:$0xff]
    %v241 = vld [vmem:[#allocation7 + $0x70] sm:$0xff]
    %v242 = vld [vmem:[#allocation7 + $0x78] sm:$0xff]
    %v243 = vld [vmem:[#allocation7 + $0x80] sm:$0xff]
    %v244 = vld [vmem:[#allocation7 + $0x88] sm:$0xff]
    %v245 = vld [vmem:[#allocation7 + $0x90] sm:$0xff]
    %v246 = vld [vmem:[#allocation7 + $0x98] sm:$0xff]
    %v247 = vld [vmem:[#allocation7 + $0xa0] sm:$0xff]
    %v248 = vld [vmem:[#allocation7 + $0xa8] sm:$0xff]
    %v249 = vld [vmem:[#allocation7 + $0xb0] sm:$0xff]
    %v250 = vld [vmem:[#allocation7 + $0xb8] sm:$0xff]
    %v251 = vld [vmem:[#allocation7 + $0xc0] sm:$0xff]
    %v252 = vld [vmem:[#allocation7 + $0xc8] sm:$0xff]
    %v253 = vld [vmem:[#allocation7 + $0xd0] sm:$0xff]
    %v254 = vld [vmem:[#allocation7 + $0xd8] sm:$0xff]
    %v255 = vld [vmem:[#allocation7 + $0xe0] sm:$0xff]
    %v256 = vld [vmem:[#allocation7 + $0xe8] sm:$0xff]
    %v257 = vld [vmem:[#allocation7 + $0xf0] sm:$0xff]
    %v258 = vld [vmem:[#allocation7 + $0xf8] sm:$0xff]
    %v259 = vld [vmem:[#allocation7 + $0x100] sm:$0xff]
    %v260 = vld [vmem:[#allocation7 + $0x108] sm:$0xff]
    %v261 = vld [vmem:[#allocation7 + $0x110] sm:$0xff]
    %v262 = vld [vmem:[#allocation7 + $0x118] sm:$0xff]
    %v263 = vld [vmem:[#allocation7 + $0x120] sm:$0xff]
    %v264 = vld [vmem:[#allocation7 + $0x128] sm:$0xff]
    %v265 = vld [vmem:[#allocation7 + $0x130] sm:$0xff]
    %v266 = vld [vmem:[#allocation7 + $0x138] sm:$0xff]
    %v267 = vld [vmem:[#allocation7 + $0x140] sm:$0xff]
    %v268 = vld [vmem:[#allocation7 + $0x148] sm:$0xff]
    %v269 = vld [vmem:[#allocation7 + $0x150] sm:$0xff]
    %v270 = vld [vmem:[#allocation7 + $0x158] sm:$0xff]
    %v271 = vld [vmem:[#allocation7 + $0x160] sm:$0xff]
    %v272 = vld [vmem:[#allocation7 + $0x168] sm:$0xff]
    %v273 = vld [vmem:[#allocation7 + $0x170] sm:$0xff]
    %v274 = vld [vmem:[#allocation7 + $0x178] sm:$0xff]
    %v275 = vld [vmem:[#allocation7 + $0x180] sm:$0xff]
    %v276 = vld [vmem:[#allocation7 + $0x188] sm:$0xff]
    %v277 = vld [vmem:[#allocation7 + $0x190] sm:$0xff]
    %v278 = vld [vmem:[#allocation7 + $0x198] sm:$0xff]
    %v279 = vld [vmem:[#allocation7 + $0x1a0] sm:$0xff]
    %v280 = vld [vmem:[#allocation7 + $0x1a8] sm:$0xff]
    %v281 = vld [vmem:[#allocation7 + $0x1b0] sm:$0xff]
    %v282 = vld [vmem:[#allocation7 + $0x1b8] sm:$0xff]
    %v283 = vld [vmem:[#allocation7 + $0x1c0] sm:$0xff]
    %v284 = vld [vmem:[#allocation7 + $0x1c8] sm:$0xff]
    %v285 = vld [vmem:[#allocation7 + $0x1d0] sm:$0xff]
    %v286 = vld [vmem:[#allocation7 + $0x1d8] sm:$0xff]
    %v287 = vld [vmem:[#allocation7 + $0x1e0] sm:$0xff]
    %v288 = vld [vmem:[#allocation7 + $0x1e8] sm:$0xff]
    %v289 = vld [vmem:[#allocation7 + $0x1f0] sm:$0xff]
    %v290 = vld [vmem:[#allocation7 + $0x1f8] sm:$0xff]
    %v291 = vld [vmem:[%s3] sm:$0xf]
    %v292 = vld [vmem:[%s6] sm:$0xf]
    %v293 = vld [vmem:[%s0] sm:$0xff]
    %v294 = vld [vmem:[%s0 + $0x8] sm:$0xff]
    %v296 = vlaneseq
    %v297 = vshrl.u32 %v296, 7
    %v298 = vsub.s32 0, %v297
    %v299 = vrot.slane %v291, %v298
    %v300 = vlaneseq
    %v301 = vshrl.u32 %v300, 7
    %v302 = vsub.s32 1, %v301
    %v303 = vrot.slane %v291, %v302
    %v304 = vlaneseq
    %v305 = vshrl.u32 %v304, 7
    %v306 = vsub.s32 2, %v305
    %v307 = vrot.slane %v291, %v306
    %v308 = vlaneseq
    %v309 = vshrl.u32 %v308, 7
    %v310 = vsub.s32 3, %v309
    %v311 = vrot.slane %v291, %v310
    %v318 = vrot.slane %v294, 7
    %vm319 = vcmask 1041409
    %v320 = vsel %vm319, %v318, %v293
    %vm321 = vcmask 97280
    %v322 = vsel %vm321, %v320, 0
    %vm324 = vcmask 1043456
    %v326 = vsel %vm324, %v95, 0
    %v329 = vsel %vm324, %v96, 0
    %v332 = vsel %vm324, %v97, 0
    %v335 = vsel %vm324, %v98, 0
    %337 = vmatprep.subr.mxu0 %v92
    %338 = vmatpush1.msra.mxu0 %v91
    %339 = vmatprep.subr.mxu0 %v329
    %340 = vmatpush1.msra.mxu0 %v326
    %341 = vmatprep.subr.mxu0 0.0
    %342 = vmatpush1.msra.mxu0 0.0
    %343 = vmatprep.subr.mxu0 0.0
    %344 = vmatpush1.msra.mxu0 0.0
    %345 = vmatprep.subr.mxu0 0.0
    %346 = vmatpush1.msra.mxu0 0.0
    %347 = vmatprep.subr.mxu0 0.0
    %348 = vmatpush1.msra.mxu0 0.0
    %349 = vmatprep.subr.mxu0 0.0
    %350 = vmatpush1.msra.mxu0 0.0
    %351 = vmatprep.subr.mxu0 0.0
    %352 = vmatpush1.msra.mxu0 0.0
    %353 = vmatprep.subr.mxu0 0.0
    %354 = vmatpush1.msra.mxu0 0.0
    %355 = vmatprep.subr.mxu0 0.0
    %356 = vmatpush1.msra.mxu0 0.0
    %357 = vmatprep.subr.mxu0 0.0
    %358 = vmatpush1.msra.mxu0 0.0
    %359 = vmatprep.subr.mxu0 0.0
    %360 = vmatpush1.msra.mxu0 0.0
    %361 = vmatprep.subr.mxu0 0.0
    %362 = vmatpush1.msra.mxu0 0.0
    %363 = vmatprep.subr.mxu0 0.0
    %364 = vmatpush1.msra.mxu0 0.0
    %365 = vmatprep.subr.mxu0 0.0
    %366 = vmatpush1.msra.mxu0 0.0
    %367 = vmatprep.subr.mxu0 0.0
    %368 = vmatpush1.msra.mxu0 0.0
    %369 = vmatprep.subr.mxu0 0.0
    %370 = vmatpush1.msra.mxu0 0.0
    %371 = vmatprep.subr.mxu0 0.0
    %372 = vmatpush1.msra.mxu0 0.0
    %373 = vmatprep.subr.mxu0 0.0
    %374 = vmatpush1.msra.mxu0 0.0
    %375 = vmatprep.subr.mxu0 0.0
    %376 = vmatpush1.msra.mxu0 0.0
    %377 = vmatprep.subr.mxu0 0.0
    %378 = vmatpush1.msra.mxu0 0.0
    %379 = vmatprep.subr.mxu0 0.0
    %380 = vmatpush1.msra.mxu0 0.0
    %381 = vmatprep.subr.mxu0 0.0
    %382 = vmatpush1.msra.mxu0 0.0
    %383 = vmatprep.subr.mxu0 0.0
    %384 = vmatpush1.msra.mxu0 0.0
    %385 = vmatprep.subr.mxu0 0.0
    %386 = vmatpush1.msra.mxu0 0.0
    %387 = vmatprep.subr.mxu0 0.0
    %388 = vmatpush1.msra.mxu0 0.0
    %389 = vmatprep.subr.mxu0 0.0
    %390 = vmatpush1.msra.mxu0 0.0
    %391 = vmatprep.subr.mxu0 0.0
    %392 = vmatpush1.msra.mxu0 0.0
    %393 = vmatprep.subr.mxu0 0.0
    %394 = vmatpush1.msra.mxu0 0.0
    %395 = vmatprep.subr.mxu0 0.0
    %396 = vmatpush1.msra.mxu0 0.0
    %397 = vmatprep.subr.mxu0 0.0
    %398 = vmatpush1.msra.mxu0 0.0
    %399 = vmatprep.subr.mxu0 0.0
    %400 = vmatpush1.msra.mxu0 0.0
    %401 = vmatprep.mubr.f32.mxu0 0.0
    %402 = vmatmul.mubr.f32.gmra.mrb[0].mxu0 %v322
    %v403 = vpop.f32.mrb[0].mxu0
    %v404 = vadd.f32 %v299, %v403
    %v405 = vpop.f32.mrb[0].mxu0
    %v406 = vadd.f32 %v303, %v405
    %407 = vdwg.mxu0
    %408 = vmatprep.subr.mxu0 %v94
    %409 = vmatpush1.msra.mxu0 %v93
    %410 = vmatprep.subr.mxu0 %v335
    %411 = vmatpush1.msra.mxu0 %v332
    %412 = vmatprep.subr.mxu0 0.0
    %413 = vmatpush1.msra.mxu0 0.0
    %414 = vmatprep.subr.mxu0 0.0
    %415 = vmatpush1.msra.mxu0 0.0
    %416 = vmatprep.subr.mxu0 0.0
    %417 = vmatpush1.msra.mxu0 0.0
    %418 = vmatprep.subr.mxu0 0.0
    %419 = vmatpush1.msra.mxu0 0.0
    %420 = vmatprep.subr.mxu0 0.0
    %421 = vmatpush1.msra.mxu0 0.0
    %422 = vmatprep.subr.mxu0 0.0
    %423 = vmatpush1.msra.mxu0 0.0
    %424 = vmatprep.subr.mxu0 0.0
    %425 = vmatpush1.msra.mxu0 0.0
    %426 = vmatprep.subr.mxu0 0.0
    %427 = vmatpush1.msra.mxu0 0.0
    %428 = vmatprep.subr.mxu0 0.0
    %429 = vmatpush1.msra.mxu0 0.0
    %430 = vmatprep.subr.mxu0 0.0
    %431 = vmatpush1.msra.mxu0 0.0
    %432 = vmatprep.subr.mxu0 0.0
    %433 = vmatpush1.msra.mxu0 0.0
    %434 = vmatprep.subr.mxu0 0.0
    %435 = vmatpush1.msra.mxu0 0.0
    %436 = vmatprep.subr.mxu0 0.0
    %437 = vmatpush1.msra.mxu0 0.0
    %438 = vmatprep.subr.mxu0 0.0
    %439 = vmatpush1.msra.mxu0 0.0
    %440 = vmatprep.subr.mxu0 0.0
    %441 = vmatpush1.msra.mxu0 0.0
    %442 = vmatprep.subr.mxu0 0.0
    %443 = vmatpush1.msra.mxu0 0.0
    %444 = vmatprep.subr.mxu0 0.0
    %445 = vmatpush1.msra.mxu0 0.0
    %446 = vmatprep.subr.mxu0 0.0
    %447 = vmatpush1.msra.mxu0 0.0
    %448 = vmatprep.subr.mxu0 0.0
    %449 = vmatpush1.msra.mxu0 0.0
    %450 = vmatprep.subr.mxu0 0.0
    %451 = vmatpush1.msra.mxu0 0.0
    %452 = vmatprep.subr.mxu0 0.0
    %453 = vmatpush1.msra.mxu0 0.0
    %454 = vmatprep.subr.mxu0 0.0
    %455 = vmatpush1.msra.mxu0 0.0
    %456 = vmatprep.subr.mxu0 0.0
    %457 = vmatpush1.msra.mxu0 0.0
    %458 = vmatprep.subr.mxu0 0.0
    %459 = vmatpush1.msra.mxu0 0.0
    %460 = vmatprep.subr.mxu0 0.0
    %461 = vmatpush1.msra.mxu0 0.0
    %462 = vmatprep.subr.mxu0 0.0
    %463 = vmatpush1.msra.mxu0 0.0
    %464 = vmatprep.subr.mxu0 0.0
    %465 = vmatpush1.msra.mxu0 0.0
    %466 = vmatprep.subr.mxu0 0.0
    %467 = vmatpush1.msra.mxu0 0.0
    %468 = vmatprep.subr.mxu0 0.0
    %469 = vmatpush1.msra.mxu0 0.0
    %470 = vmatprep.subr.mxu0 0.0
    %471 = vmatpush1.msra.mxu0 0.0
    %472 = vmatprep.mubr.f32.mxu0 0.0
    %473 = vmatmul.mubr.f32.gmra.mrb[0].mxu0 %v322
    %v474 = vpop.f32.mrb[0].mxu0
    %v475 = vadd.f32 %v307, %v474
    %v476 = vpop.f32.mrb[0].mxu0
    %v477 = vadd.f32 %v311, %v476
    %478 = vdwg.mxu0
    %479 = vmatprep.subr.mxu0 %v164
    %480 = vmatpush1.msra.mxu0 %v163
    %481 = vmatprep.subr.mxu0 %v168
    %482 = vmatpush1.msra.mxu0 %v167
    %483 = vmatprep.subr.mxu0 %v172
    %484 = vmatpush1.msra.mxu0 %v171
    %485 = vmatprep.subr.mxu0 %v176
    %486 = vmatpush1.msra.mxu0 %v175
    %487 = vmatprep.subr.mxu0 %v180
    %488 = vmatpush1.msra.mxu0 %v179
    %489 = vmatprep.subr.mxu0 %v184
    %490 = vmatpush1.msra.mxu0 %v183
    %491 = vmatprep.subr.mxu0 %v188
    %492 = vmatpush1.msra.mxu0 %v187
    %493 = vmatprep.subr.mxu0 %v192
    %494 = vmatpush1.msra.mxu0 %v191
    %495 = vmatprep.subr.mxu0 %v196
    %496 = vmatpush1.msra.mxu0 %v195
    %497 = vmatprep.subr.mxu0 %v200
    %498 = vmatpush1.msra.mxu0 %v199
    %499 = vmatprep.subr.mxu0 %v204
    %500 = vmatpush1.msra.mxu0 %v203
    %501 = vmatprep.subr.mxu0 %v208
    %502 = vmatpush1.msra.mxu0 %v207
    %503 = vmatprep.subr.mxu0 %v212
    %504 = vmatpush1.msra.mxu0 %v211
    %505 = vmatprep.subr.mxu0 %v216
    %506 = vmatpush1.msra.mxu0 %v215
    %507 = vmatprep.subr.mxu0 %v220
    %508 = vmatpush1.msra.mxu0 %v219
    %509 = vmatprep.subr.mxu0 %v224
    %510 = vmatpush1.msra.mxu0 %v223
    %511 = vmatprep.subr.mxu0 0.0
    %512 = vmatpush1.msra.mxu0 0.0
    %513 = vmatprep.subr.mxu0 0.0
    %514 = vmatpush1.msra.mxu0 0.0
    %515 = vmatprep.subr.mxu0 0.0
    %516 = vmatpush1.msra.mxu0 0.0
    %517 = vmatprep.subr.mxu0 0.0
    %518 = vmatpush1.msra.mxu0 0.0
    %519 = vmatprep.subr.mxu0 0.0
    %520 = vmatpush1.msra.mxu0 0.0
    %521 = vmatprep.subr.mxu0 0.0
    %522 = vmatpush1.msra.mxu0 0.0
    %523 = vmatprep.subr.mxu0 0.0
    %524 = vmatpush1.msra.mxu0 0.0
    %525 = vmatprep.subr.mxu0 0.0
    %526 = vmatpush1.msra.mxu0 0.0
    %527 = vmatprep.subr.mxu0 0.0
    %528 = vmatpush1.msra.mxu0 0.0
    %529 = vmatprep.subr.mxu0 0.0
    %530 = vmatpush1.msra.mxu0 0.0
    %531 = vmatprep.subr.mxu0 0.0
    %532 = vmatpush1.msra.mxu0 0.0
    %533 = vmatprep.subr.mxu0 0.0
    %534 = vmatpush1.msra.mxu0 0.0
    %535 = vmatprep.subr.mxu0 0.0
    %536 = vmatpush1.msra.mxu0 0.0
    %537 = vmatprep.subr.mxu0 0.0
    %538 = vmatpush1.msra.mxu0 0.0
    %539 = vmatprep.subr.mxu0 0.0
    %540 = vmatpush1.msra.mxu0 0.0
    %541 = vmatprep.subr.mxu0 0.0
    %542 = vmatpush1.msra.mxu0 0.0
    %543 = vmatprep.mubr.f32.mxu0 0.0
    %544 = vmatmul.mubr.f32.gmra.mrb[0].mxu0 0.0
    %v545 = vpop.f32.mrb[0].mxu0
    %v546 = vadd.f32 0.0, %v545
    %v547 = vpop.f32.mrb[0].mxu0
    %v548 = vadd.f32 0.0, %v547
    %549 = vdwg.mxu0
    %550 = vmatprep.subr.mxu0 %v166
    %551 = vmatpush1.msra.mxu0 %v165
    %552 = vmatprep.subr.mxu0 %v170
    %553 = vmatpush1.msra.mxu0 %v169
    %554 = vmatprep.subr.mxu0 %v174
    %555 = vmatpush1.msra.mxu0 %v173
    %556 = vmatprep.subr.mxu0 %v178
    %557 = vmatpush1.msra.mxu0 %v177
    %558 = vmatprep.subr.mxu0 %v182
    %559 = vmatpush1.msra.mxu0 %v181
    %560 = vmatprep.subr.mxu0 %v186
    %561 = vmatpush1.msra.mxu0 %v185
    %562 = vmatprep.subr.mxu0 %v190
    %563 = vmatpush1.msra.mxu0 %v189
    %564 = vmatprep.subr.mxu0 %v194
    %565 = vmatpush1.msra.mxu0 %v193
    %566 = vmatprep.subr.mxu0 %v198
    %567 = vmatpush1.msra.mxu0 %v197
    %568 = vmatprep.subr.mxu0 %v202
    %569 = vmatpush1.msra.mxu0 %v201
    %570 = vmatprep.subr.mxu0 %v206
    %571 = vmatpush1.msra.mxu0 %v205
    %572 = vmatprep.subr.mxu0 %v210
    %573 = vmatpush1.msra.mxu0 %v209
    %574 = vmatprep.subr.mxu0 %v214
    %575 = vmatpush1.msra.mxu0 %v213
    %576 = vmatprep.subr.mxu0 %v218
    %577 = vmatpush1.msra.mxu0 %v217
    %578 = vmatprep.subr.mxu0 %v222
    %579 = vmatpush1.msra.mxu0 %v221
    %580 = vmatprep.subr.mxu0 %v226
    %581 = vmatpush1.msra.mxu0 %v225
    %582 = vmatprep.subr.mxu0 0.0
    %583 = vmatpush1.msra.mxu0 0.0
    %584 = vmatprep.subr.mxu0 0.0
    %585 = vmatpush1.msra.mxu0 0.0
    %586 = vmatprep.subr.mxu0 0.0
    %587 = vmatpush1.msra.mxu0 0.0
    %588 = vmatprep.subr.mxu0 0.0
    %589 = vmatpush1.msra.mxu0 0.0
    %590 = vmatprep.subr.mxu0 0.0
    %591 = vmatpush1.msra.mxu0 0.0
    %592 = vmatprep.subr.mxu0 0.0
    %593 = vmatpush1.msra.mxu0 0.0
    %594 = vmatprep.subr.mxu0 0.0
    %595 = vmatpush1.msra.mxu0 0.0
    %596 = vmatprep.subr.mxu0 0.0
    %597 = vmatpush1.msra.mxu0 0.0
    %598 = vmatprep.subr.mxu0 0.0
    %599 = vmatpush1.msra.mxu0 0.0
    %600 = vmatprep.subr.mxu0 0.0
    %601 = vmatpush1.msra.mxu0 0.0
    %602 = vmatprep.subr.mxu0 0.0
    %603 = vmatpush1.msra.mxu0 0.0
    %604 = vmatprep.subr.mxu0 0.0
    %605 = vmatpush1.msra.mxu0 0.0
    %606 = vmatprep.subr.mxu0 0.0
    %607 = vmatpush1.msra.mxu0 0.0
    %608 = vmatprep.subr.mxu0 0.0
    %609 = vmatpush1.msra.mxu0 0.0
    %610 = vmatprep.subr.mxu0 0.0
    %611 = vmatpush1.msra.mxu0 0.0
    %612 = vmatprep.subr.mxu0 0.0
    %613 = vmatpush1.msra.mxu0 0.0
    %614 = vmatprep.mubr.f32.mxu0 0.0
    %615 = vmatmul.mubr.f32.gmra.mrb[0].mxu0 0.0
    %v616 = vpop.f32.mrb[0].mxu0
    %v617 = vadd.f32 0.0, %v616
    %v618 = vpop.f32.mrb[0].mxu0
    %v619 = vadd.f32 0.0, %v618
    %620 = vdwg.mxu0
    %v621 = vadd.f32 %v404, %v546
    %v622 = vadd.f32 %v406, %v548
    %v623 = vadd.f32 %v475, %v617
    %v624 = vadd.f32 %v477, %v619
    %v625 = vxor.u32 %v621, 2147483648
    %v626 = vxor.u32 %v622, 2147483648
    %v627 = vxor.u32 %v623, 2147483648
    %v628 = vmul.f32 %v625, 1.442695
    %v629 = vpow.pop %v628
    %v630 = vmul.f32 %v626, 1.442695
    %v631 = vpow.pop %v630
    %v632 = vmul.f32 %v627, 1.442695
    %v633 = vpow.pop %v632
    %v634 = vadd.f32 %v629, 1.0
    %v635 = vadd.f32 %v631, 1.0
    %v636 = vadd.f32 %v633, 1.0
    %v637 = vrcp.pop %v634
    %v638 = vmul.f32 1.0, %v637
    %v639 = vrcp.pop %v635
    %v640 = vmul.f32 1.0, %v639
    %v641 = vrcp.pop %v636
    %v642 = vmul.f32 1.0, %v641
    %v643 = vtanh.pop %v624
    %v644 = vmul.f32 %v640, 0.0
    %v645 = vmul.f32 %v638, %v643
    %v646 = vadd.f32 %v644, %v645
    %v647 = vtanh.pop %v646
    %v648 = vmul.f32 %v642, %v647
    %v650 = vlaneseq
    %v651 = vshrl.u32 %v650, 7
    %v652 = vsub.s32 0, %v651
    %v653 = vrot.slane %v292, %v652
    %v654 = vlaneseq
    %v655 = vshrl.u32 %v654, 7
    %v656 = vsub.s32 1, %v655
    %v657 = vrot.slane %v292, %v656
    %v658 = vlaneseq
    %v659 = vshrl.u32 %v658, 7
    %v660 = vsub.s32 2, %v659
    %v661 = vrot.slane %v292, %v660
    %v662 = vlaneseq
    %v663 = vshrl.u32 %v662, 7
    %v664 = vsub.s32 3, %v663
    %v665 = vrot.slane %v292, %v664
    %670 = vmatprep.subr.mxu0 %v100
    %671 = vmatpush1.msra.mxu0 %v99
    %672 = vmatprep.subr.mxu0 %v104
    %673 = vmatpush1.msra.mxu0 %v103
    %674 = vmatprep.subr.mxu0 %v108
    %675 = vmatpush1.msra.mxu0 %v107
    %676 = vmatprep.subr.mxu0 %v112
    %677 = vmatpush1.msra.mxu0 %v111
    %678 = vmatprep.subr.mxu0 %v116
    %679 = vmatpush1.msra.mxu0 %v115
    %680 = vmatprep.subr.mxu0 %v120
    %681 = vmatpush1.msra.mxu0 %v119
    %682 = vmatprep.subr.mxu0 %v124
    %683 = vmatpush1.msra.mxu0 %v123
    %684 = vmatprep.subr.mxu0 %v128
    %685 = vmatpush1.msra.mxu0 %v127
    %686 = vmatprep.subr.mxu0 %v132
    %687 = vmatpush1.msra.mxu0 %v131
    %688 = vmatprep.subr.mxu0 %v136
    %689 = vmatpush1.msra.mxu0 %v135
    %690 = vmatprep.subr.mxu0 %v140
    %691 = vmatpush1.msra.mxu0 %v139
    %692 = vmatprep.subr.mxu0 %v144
    %693 = vmatpush1.msra.mxu0 %v143
    %694 = vmatprep.subr.mxu0 %v148
    %695 = vmatpush1.msra.mxu0 %v147
    %696 = vmatprep.subr.mxu0 %v152
    %697 = vmatpush1.msra.mxu0 %v151
    %698 = vmatprep.subr.mxu0 %v156
    %699 = vmatpush1.msra.mxu0 %v155
    %700 = vmatprep.subr.mxu0 %v160
    %701 = vmatpush1.msra.mxu0 %v159
    %702 = vmatprep.subr.mxu0 0.0
    %703 = vmatpush1.msra.mxu0 0.0
    %704 = vmatprep.subr.mxu0 0.0
    %705 = vmatpush1.msra.mxu0 0.0
    %706 = vmatprep.subr.mxu0 0.0
    %707 = vmatpush1.msra.mxu0 0.0
    %708 = vmatprep.subr.mxu0 0.0
    %709 = vmatpush1.msra.mxu0 0.0
    %710 = vmatprep.subr.mxu0 0.0
    %711 = vmatpush1.msra.mxu0 0.0
    %712 = vmatprep.subr.mxu0 0.0
    %713 = vmatpush1.msra.mxu0 0.0
    %714 = vmatprep.subr.mxu0 0.0
    %715 = vmatpush1.msra.mxu0 0.0
    %716 = vmatprep.subr.mxu0 0.0
    %717 = vmatpush1.msra.mxu0 0.0
    %718 = vmatprep.subr.mxu0 0.0
    %719 = vmatpush1.msra.mxu0 0.0
    %720 = vmatprep.subr.mxu0 0.0
    %721 = vmatpush1.msra.mxu0 0.0
    %722 = vmatprep.subr.mxu0 0.0
    %723 = vmatpush1.msra.mxu0 0.0
    %724 = vmatprep.subr.mxu0 0.0
    %725 = vmatpush1.msra.mxu0 0.0
    %726 = vmatprep.subr.mxu0 0.0
    %727 = vmatpush1.msra.mxu0 0.0
    %728 = vmatprep.subr.mxu0 0.0
    %729 = vmatpush1.msra.mxu0 0.0
    %730 = vmatprep.subr.mxu0 0.0
    %731 = vmatpush1.msra.mxu0 0.0
    %732 = vmatprep.subr.mxu0 0.0
    %733 = vmatpush1.msra.mxu0 0.0
    %734 = vmatprep.mubr.f32.mxu0 0.0
    %735 = vmatmul.mubr.f32.gmra.mrb[0].mxu0 %v648
    %v736 = vpop.f32.mrb[0].mxu0
    %v737 = vadd.f32 %v653, %v736
    %v738 = vpop.f32.mrb[0].mxu0
    %v739 = vadd.f32 %v657, %v738
    %740 = vdwg.mxu0
    %741 = vmatprep.subr.mxu0 %v102
    %742 = vmatpush1.msra.mxu0 %v101
    %743 = vmatprep.subr.mxu0 %v106
    %744 = vmatpush1.msra.mxu0 %v105
    %745 = vmatprep.subr.mxu0 %v110
    %746 = vmatpush1.msra.mxu0 %v109
    %747 = vmatprep.subr.mxu0 %v114
    %748 = vmatpush1.msra.mxu0 %v113
    %749 = vmatprep.subr.mxu0 %v118
    %750 = vmatpush1.msra.mxu0 %v117
    %751 = vmatprep.subr.mxu0 %v122
    %752 = vmatpush1.msra.mxu0 %v121
    %753 = vmatprep.subr.mxu0 %v126
    %754 = vmatpush1.msra.mxu0 %v125
    %755 = vmatprep.subr.mxu0 %v130
    %756 = vmatpush1.msra.mxu0 %v129
    %757 = vmatprep.subr.mxu0 %v134
    %758 = vmatpush1.msra.mxu0 %v133
    %759 = vmatprep.subr.mxu0 %v138
    %760 = vmatpush1.msra.mxu0 %v137
    %761 = vmatprep.subr.mxu0 %v142
    %762 = vmatpush1.msra.mxu0 %v141
    %763 = vmatprep.subr.mxu0 %v146
    %764 = vmatpush1.msra.mxu0 %v145
    %765 = vmatprep.subr.mxu0 %v150
    %766 = vmatpush1.msra.mxu0 %v149
    %767 = vmatprep.subr.mxu0 %v154
    %768 = vmatpush1.msra.mxu0 %v153
    %769 = vmatprep.subr.mxu0 %v158
    %770 = vmatpush1.msra.mxu0 %v157
    %771 = vmatprep.subr.mxu0 %v162
    %772 = vmatpush1.msra.mxu0 %v161
    %773 = vmatprep.subr.mxu0 0.0
    %774 = vmatpush1.msra.mxu0 0.0
    %775 = vmatprep.subr.mxu0 0.0
    %776 = vmatpush1.msra.mxu0 0.0
    %777 = vmatprep.subr.mxu0 0.0
    %778 = vmatpush1.msra.mxu0 0.0
    %779 = vmatprep.subr.mxu0 0.0
    %780 = vmatpush1.msra.mxu0 0.0
    %781 = vmatprep.subr.mxu0 0.0
    %782 = vmatpush1.msra.mxu0 0.0
    %783 = vmatprep.subr.mxu0 0.0
    %784 = vmatpush1.msra.mxu0 0.0
    %785 = vmatprep.subr.mxu0 0.0
    %786 = vmatpush1.msra.mxu0 0.0
    %787 = vmatprep.subr.mxu0 0.0
    %788 = vmatpush1.msra.mxu0 0.0
    %789 = vmatprep.subr.mxu0 0.0
    %790 = vmatpush1.msra.mxu0 0.0
    %791 = vmatprep.subr.mxu0 0.0
    %792 = vmatpush1.msra.mxu0 0.0
    %793 = vmatprep.subr.mxu0 0.0
    %794 = vmatpush1.msra.mxu0 0.0
    %795 = vmatprep.subr.mxu0 0.0
    %796 = vmatpush1.msra.mxu0 0.0
    %797 = vmatprep.subr.mxu0 0.0
    %798 = vmatpush1.msra.mxu0 0.0
    %799 = vmatprep.subr.mxu0 0.0
    %800 = vmatpush1.msra.mxu0 0.0
    %801 = vmatprep.subr.mxu0 0.0
    %802 = vmatpush1.msra.mxu0 0.0
    %803 = vmatprep.subr.mxu0 0.0
    %804 = vmatpush1.msra.mxu0 0.0
    %805 = vmatprep.mubr.f32.mxu0 0.0
    %806 = vmatmul.mubr.f32.gmra.mrb[0].mxu0 %v648
    %v807 = vpop.f32.mrb[0].mxu0
    %v808 = vadd.f32 %v661, %v807
    %v809 = vpop.f32.mrb[0].mxu0
    %v810 = vadd.f32 %v665, %v809
    %811 = vdwg.mxu0
    %812 = vmatprep.subr.mxu0 %v228
    %813 = vmatpush1.msra.mxu0 %v227
    %814 = vmatprep.subr.mxu0 %v232
    %815 = vmatpush1.msra.mxu0 %v231
    %816 = vmatprep.subr.mxu0 %v236
    %817 = vmatpush1.msra.mxu0 %v235
    %818 = vmatprep.subr.mxu0 %v240
    %819 = vmatpush1.msra.mxu0 %v239
    %820 = vmatprep.subr.mxu0 %v244
    %821 = vmatpush1.msra.mxu0 %v243
    %822 = vmatprep.subr.mxu0 %v248
    %823 = vmatpush1.msra.mxu0 %v247
    %824 = vmatprep.subr.mxu0 %v252
    %825 = vmatpush1.msra.mxu0 %v251
    %826 = vmatprep.subr.mxu0 %v256
    %827 = vmatpush1.msra.mxu0 %v255
    %828 = vmatprep.subr.mxu0 %v260
    %829 = vmatpush1.msra.mxu0 %v259
    %830 = vmatprep.subr.mxu0 %v264
    %831 = vmatpush1.msra.mxu0 %v263
    %832 = vmatprep.subr.mxu0 %v268
    %833 = vmatpush1.msra.mxu0 %v267
    %834 = vmatprep.subr.mxu0 %v272
    %835 = vmatpush1.msra.mxu0 %v271
    %836 = vmatprep.subr.mxu0 %v276
    %837 = vmatpush1.msra.mxu0 %v275
    %838 = vmatprep.subr.mxu0 %v280
    %839 = vmatpush1.msra.mxu0 %v279
    %840 = vmatprep.subr.mxu0 %v284
    %841 = vmatpush1.msra.mxu0 %v283
    %842 = vmatprep.subr.mxu0 %v288
    %843 = vmatpush1.msra.mxu0 %v287
    %844 = vmatprep.subr.mxu0 0.0
    %845 = vmatpush1.msra.mxu0 0.0
    %846 = vmatprep.subr.mxu0 0.0
    %847 = vmatpush1.msra.mxu0 0.0
    %848 = vmatprep.subr.mxu0 0.0
    %849 = vmatpush1.msra.mxu0 0.0
    %850 = vmatprep.subr.mxu0 0.0
    %851 = vmatpush1.msra.mxu0 0.0
    %852 = vmatprep.subr.mxu0 0.0
    %853 = vmatpush1.msra.mxu0 0.0
    %854 = vmatprep.subr.mxu0 0.0
    %855 = vmatpush1.msra.mxu0 0.0
    %856 = vmatprep.subr.mxu0 0.0
    %857 = vmatpush1.msra.mxu0 0.0
    %858 = vmatprep.subr.mxu0 0.0
    %859 = vmatpush1.msra.mxu0 0.0
    %860 = vmatprep.subr.mxu0 0.0
    %861 = vmatpush1.msra.mxu0 0.0
    %862 = vmatprep.subr.mxu0 0.0
    %863 = vmatpush1.msra.mxu0 0.0
    %864 = vmatprep.subr.mxu0 0.0
    %865 = vmatpush1.msra.mxu0 0.0
    %866 = vmatprep.subr.mxu0 0.0
    %867 = vmatpush1.msra.mxu0 0.0
    %868 = vmatprep.subr.mxu0 0.0
    %869 = vmatpush1.msra.mxu0 0.0
    %870 = vmatprep.subr.mxu0 0.0
    %871 = vmatpush1.msra.mxu0 0.0
    %872 = vmatprep.subr.mxu0 0.0
    %873 = vmatpush1.msra.mxu0 0.0
    %874 = vmatprep.subr.mxu0 0.0
    %875 = vmatpush1.msra.mxu0 0.0
    %876 = vmatprep.mubr.f32.mxu0 0.0
    %877 = vmatmul.mubr.f32.gmra.mrb[0].mxu0 0.0
    %v878 = vpop.f32.mrb[0].mxu0
    %v879 = vadd.f32 0.0, %v878
    %v880 = vpop.f32.mrb[0].mxu0
    %v881 = vadd.f32 0.0, %v880
    %882 = vdwg.mxu0
    %883 = vmatprep.subr.mxu0 %v230
    %884 = vmatpush1.msra.mxu0 %v229
    %885 = vmatprep.subr.mxu0 %v234
    %886 = vmatpush1.msra.mxu0 %v233
    %887 = vmatprep.subr.mxu0 %v238
    %888 = vmatpush1.msra.mxu0 %v237
    %889 = vmatprep.subr.mxu0 %v242
    %890 = vmatpush1.msra.mxu0 %v241
    %891 = vmatprep.subr.mxu0 %v246
    %892 = vmatpush1.msra.mxu0 %v245
    %893 = vmatprep.subr.mxu0 %v250
    %894 = vmatpush1.msra.mxu0 %v249
    %895 = vmatprep.subr.mxu0 %v254
    %896 = vmatpush1.msra.mxu0 %v253
    %897 = vmatprep.subr.mxu0 %v258
    %898 = vmatpush1.msra.mxu0 %v257
    %899 = vmatprep.subr.mxu0 %v262
    %900 = vmatpush1.msra.mxu0 %v261
    %901 = vmatprep.subr.mxu0 %v266
    %902 = vmatpush1.msra.mxu0 %v265
    %903 = vmatprep.subr.mxu0 %v270
    %904 = vmatpush1.msra.mxu0 %v269
    %905 = vmatprep.subr.mxu0 %v274
    %906 = vmatpush1.msra.mxu0 %v273
    %907 = vmatprep.subr.mxu0 %v278
    %908 = vmatpush1.msra.mxu0 %v277
    %909 = vmatprep.subr.mxu0 %v282
    %910 = vmatpush1.msra.mxu0 %v281
    %911 = vmatprep.subr.mxu0 %v286
    %912 = vmatpush1.msra.mxu0 %v285
    %913 = vmatprep.subr.mxu0 %v290
    %914 = vmatpush1.msra.mxu0 %v289
    %915 = vmatprep.subr.mxu0 0.0
    %916 = vmatpush1.msra.mxu0 0.0
    %917 = vmatprep.subr.mxu0 0.0
    %918 = vmatpush1.msra.mxu0 0.0
    %919 = vmatprep.subr.mxu0 0.0
    %920 = vmatpush1.msra.mxu0 0.0
    %921 = vmatprep.subr.mxu0 0.0
    %922 = vmatpush1.msra.mxu0 0.0
    %923 = vmatprep.subr.mxu0 0.0
    %924 = vmatpush1.msra.mxu0 0.0
    %925 = vmatprep.subr.mxu0 0.0
    %926 = vmatpush1.msra.mxu0 0.0
    %927 = vmatprep.subr.mxu0 0.0
    %928 = vmatpush1.msra.mxu0 0.0
    %929 = vmatprep.subr.mxu0 0.0
    %930 = vmatpush1.msra.mxu0 0.0
    %931 = vmatprep.subr.mxu0 0.0
    %932 = vmatpush1.msra.mxu0 0.0
    %933 = vmatprep.subr.mxu0 0.0
    %934 = vmatpush1.msra.mxu0 0.0
    %935 = vmatprep.subr.mxu0 0.0
    %936 = vmatpush1.msra.mxu0 0.0
    %937 = vmatprep.subr.mxu0 0.0
    %938 = vmatpush1.msra.mxu0 0.0
    %939 = vmatprep.subr.mxu0 0.0
    %940 = vmatpush1.msra.mxu0 0.0
    %941 = vmatprep.subr.mxu0 0.0
    %942 = vmatpush1.msra.mxu0 0.0
    %943 = vmatprep.subr.mxu0 0.0
    %944 = vmatpush1.msra.mxu0 0.0
    %945 = vmatprep.subr.mxu0 0.0
    %946 = vmatpush1.msra.mxu0 0.0
    %947 = vmatprep.mubr.f32.mxu0 0.0
    %948 = vmatmul.mubr.f32.gmra.mrb[0].mxu0 0.0
    %v949 = vpop.f32.mrb[0].mxu0
    %v950 = vadd.f32 0.0, %v949
    %v951 = vpop.f32.mrb[0].mxu0
    %v952 = vadd.f32 0.0, %v951
    %953 = vdwg.mxu0
    %v954 = vadd.f32 %v737, %v879
    %v955 = vadd.f32 %v739, %v881
    %v956 = vadd.f32 %v808, %v950
    %v957 = vadd.f32 %v810, %v952
    %v958 = vxor.u32 %v954, 2147483648
    %v959 = vxor.u32 %v955, 2147483648
    %v960 = vxor.u32 %v956, 2147483648
    %v961 = vmul.f32 %v958, 1.442695
    %v962 = vpow.pop %v961
    %v963 = vmul.f32 %v959, 1.442695
    %v964 = vpow.pop %v963
    %v965 = vmul.f32 %v960, 1.442695
    %v966 = vpow.pop %v965
    %v967 = vadd.f32 %v962, 1.0
    %v968 = vadd.f32 %v964, 1.0
    %v969 = vadd.f32 %v966, 1.0
    %v970 = vrcp.pop %v967
    %v971 = vmul.f32 1.0, %v970
    %v972 = vrcp.pop %v968
    %v973 = vmul.f32 1.0, %v972
    %v974 = vrcp.pop %v969
    %v975 = vmul.f32 1.0, %v974
    %v976 = vtanh.pop %v957
    %v977 = vmul.f32 %v973, 0.0
    %v978 = vmul.f32 %v971, %v976
    %v979 = vadd.f32 %v977, %v978
    %v980 = vtanh.pop %v979
    %v981 = vmul.f32 %v975, %v980
    %v982 = vrot.slane %v293, 1
    %v983 = vsel %vm319, %v294, %v982
    %v984 = vsel %vm321, %v983, 0
    %986 = vmatprep.subr.mxu0 %v92
    %987 = vmatpush1.msra.mxu0 %v91
    %988 = vmatprep.subr.mxu0 %v329
    %989 = vmatpush1.msra.mxu0 %v326
    %990 = vmatprep.subr.mxu0 0.0
    %991 = vmatpush1.msra.mxu0 0.0
    %992 = vmatprep.subr.mxu0 0.0
    %993 = vmatpush1.msra.mxu0 0.0
    %994 = vmatprep.subr.mxu0 0.0
    %995 = vmatpush1.msra.mxu0 0.0
    %996 = vmatprep.subr.mxu0 0.0
    %997 = vmatpush1.msra.mxu0 0.0
    %998 = vmatprep.subr.mxu0 0.0
    %999 = vmatpush1.msra.mxu0 0.0
    %1000 = vmatprep.subr.mxu0 0.0
    %1001 = vmatpush1.msra.mxu0 0.0
    %1002 = vmatprep.subr.mxu0 0.0
    %1003 = vmatpush1.msra.mxu0 0.0
    %1004 = vmatprep.subr.mxu0 0.0
    %1005 = vmatpush1.msra.mxu0 0.0
    %1006 = vmatprep.subr.mxu0 0.0
    %1007 = vmatpush1.msra.mxu0 0.0
    %1008 = vmatprep.subr.mxu0 0.0
    %1009 = vmatpush1.msra.mxu0 0.0
    %1010 = vmatprep.subr.mxu0 0.0
    %1011 = vmatpush1.msra.mxu0 0.0
    %1012 = vmatprep.subr.mxu0 0.0
    %1013 = vmatpush1.msra.mxu0 0.0
    %1014 = vmatprep.subr.mxu0 0.0
    %1015 = vmatpush1.msra.mxu0 0.0
    %1016 = vmatprep.subr.mxu0 0.0
    %1017 = vmatpush1.msra.mxu0 0.0
    %1018 = vmatprep.subr.mxu0 0.0
    %1019 = vmatpush1.msra.mxu0 0.0
    %1020 = vmatprep.subr.mxu0 0.0
    %1021 = vmatpush1.msra.mxu0 0.0
    %1022 = vmatprep.subr.mxu0 0.0
    %1023 = vmatpush1.msra.mxu0 0.0
    %1024 = vmatprep.subr.mxu0 0.0
    %1025 = vmatpush1.msra.mxu0 0.0
    %1026 = vmatprep.subr.mxu0 0.0
    %1027 = vmatpush1.msra.mxu0 0.0
    %1028 = vmatprep.subr.mxu0 0.0
    %1029 = vmatpush1.msra.mxu0 0.0
    %1030 = vmatprep.subr.mxu0 0.0
    %1031 = vmatpush1.msra.mxu0 0.0
    %1032 = vmatprep.subr.mxu0 0.0
    %1033 = vmatpush1.msra.mxu0 0.0
    %1034 = vmatprep.subr.mxu0 0.0
    %1035 = vmatpush1.msra.mxu0 0.0
    %1036 = vmatprep.subr.mxu0 0.0
    %1037 = vmatpush1.msra.mxu0 0.0
    %1038 = vmatprep.subr.mxu0 0.0
    %1039 = vmatpush1.msra.mxu0 0.0
    %1040 = vmatprep.subr.mxu0 0.0
    %1041 = vmatpush1.msra.mxu0 0.0
    %1042 = vmatprep.subr.mxu0 0.0
    %1043 = vmatpush1.msra.mxu0 0.0
    %1044 = vmatprep.subr.mxu0 0.0
    %1045 = vmatpush1.msra.mxu0 0.0
    %1046 = vmatprep.subr.mxu0 0.0
    %1047 = vmatpush1.msra.mxu0 0.0
    %1048 = vmatprep.subr.mxu0 0.0
    %1049 = vmatpush1.msra.mxu0 0.0
    %1050 = vmatprep.mubr.f32.mxu0 0.0
    %1051 = vmatmul.mubr.f32.gmra.mrb[0].mxu0 %v984
    %v1052 = vpop.f32.mrb[0].mxu0
    %v1053 = vadd.f32 %v299, %v1052
    %v1054 = vpop.f32.mrb[0].mxu0
    %v1055 = vadd.f32 %v303, %v1054
    %1056 = vdwg.mxu0
    %1057 = vmatprep.subr.mxu0 %v94
    %1058 = vmatpush1.msra.mxu0 %v93
    %1059 = vmatprep.subr.mxu0 %v335
    %1060 = vmatpush1.msra.mxu0 %v332
    %1061 = vmatprep.subr.mxu0 0.0
    %1062 = vmatpush1.msra.mxu0 0.0
    %1063 = vmatprep.subr.mxu0 0.0
    %1064 = vmatpush1.msra.mxu0 0.0
    %1065 = vmatprep.subr.mxu0 0.0
    %1066 = vmatpush1.msra.mxu0 0.0
    %1067 = vmatprep.subr.mxu0 0.0
    %1068 = vmatpush1.msra.mxu0 0.0
    %1069 = vmatprep.subr.mxu0 0.0
    %1070 = vmatpush1.msra.mxu0 0.0
    %1071 = vmatprep.subr.mxu0 0.0
    %1072 = vmatpush1.msra.mxu0 0.0
    %1073 = vmatprep.subr.mxu0 0.0
    %1074 = vmatpush1.msra.mxu0 0.0
    %1075 = vmatprep.subr.mxu0 0.0
    %1076 = vmatpush1.msra.mxu0 0.0
    %1077 = vmatprep.subr.mxu0 0.0
    %1078 = vmatpush1.msra.mxu0 0.0
    %1079 = vmatprep.subr.mxu0 0.0
    %1080 = vmatpush1.msra.mxu0 0.0
    %1081 = vmatprep.subr.mxu0 0.0
    %1082 = vmatpush1.msra.mxu0 0.0
    %1083 = vmatprep.subr.mxu0 0.0
    %1084 = vmatpush1.msra.mxu0 0.0
    %1085 = vmatprep.subr.mxu0 0.0
    %1086 = vmatpush1.msra.mxu0 0.0
    %1087 = vmatprep.subr.mxu0 0.0
    %1088 = vmatpush1.msra.mxu0 0.0
    %1089 = vmatprep.subr.mxu0 0.0
    %1090 = vmatpush1.msra.mxu0 0.0
    %1091 = vmatprep.subr.mxu0 0.0
    %1092 = vmatpush1.msra.mxu0 0.0
    %1093 = vmatprep.subr.mxu0 0.0
    %1094 = vmatpush1.msra.mxu0 0.0
    %1095 = vmatprep.subr.mxu0 0.0
    %1096 = vmatpush1.msra.mxu0 0.0
    %1097 = vmatprep.subr.mxu0 0.0
    %1098 = vmatpush1.msra.mxu0 0.0
    %1099 = vmatprep.subr.mxu0 0.0
    %1100 = vmatpush1.msra.mxu0 0.0
    %1101 = vmatprep.subr.mxu0 0.0
    %1102 = vmatpush1.msra.mxu0 0.0
    %1103 = vmatprep.subr.mxu0 0.0
    %1104 = vmatpush1.msra.mxu0 0.0
    %1105 = vmatprep.subr.mxu0 0.0
    %1106 = vmatpush1.msra.mxu0 0.0
    %1107 = vmatprep.subr.mxu0 0.0
    %1108 = vmatpush1.msra.mxu0 0.0
    %1109 = vmatprep.subr.mxu0 0.0
    %1110 = vmatpush1.msra.mxu0 0.0
    %1111 = vmatprep.subr.mxu0 0.0
    %1112 = vmatpush1.msra.mxu0 0.0
    %1113 = vmatprep.subr.mxu0 0.0
    %1114 = vmatpush1.msra.mxu0 0.0
    %1115 = vmatprep.subr.mxu0 0.0
    %1116 = vmatpush1.msra.mxu0 0.0
    %1117 = vmatprep.subr.mxu0 0.0
    %1118 = vmatpush1.msra.mxu0 0.0
    %1119 = vmatprep.subr.mxu0 0.0
    %1120 = vmatpush1.msra.mxu0 0.0
    %1121 = vmatprep.mubr.f32.mxu0 0.0
    %1122 = vmatmul.mubr.f32.gmra.mrb[0].mxu0 %v984
    %v1123 = vpop.f32.mrb[0].mxu0
    %v1124 = vadd.f32 %v307, %v1123
    %v1125 = vpop.f32.mrb[0].mxu0
    %v1126 = vadd.f32 %v311, %v1125
    %1127 = vdwg.mxu0
    %1128 = vmatprep.subr.mxu0 %v164
    %1129 = vmatpush1.msra.mxu0 %v163
    %1130 = vmatprep.subr.mxu0 %v168
    %1131 = vmatpush1.msra.mxu0 %v167
    %1132 = vmatprep.subr.mxu0 %v172
    %1133 = vmatpush1.msra.mxu0 %v171
    %1134 = vmatprep.subr.mxu0 %v176
    %1135 = vmatpush1.msra.mxu0 %v175
    %1136 = vmatprep.subr.mxu0 %v180
    %1137 = vmatpush1.msra.mxu0 %v179
    %1138 = vmatprep.subr.mxu0 %v184
    %1139 = vmatpush1.msra.mxu0 %v183
    %1140 = vmatprep.subr.mxu0 %v188
    %1141 = vmatpush1.msra.mxu0 %v187
    %1142 = vmatprep.subr.mxu0 %v192
    %1143 = vmatpush1.msra.mxu0 %v191
    %1144 = vmatprep.subr.mxu0 %v196
    %1145 = vmatpush1.msra.mxu0 %v195
    %1146 = vmatprep.subr.mxu0 %v200
    %1147 = vmatpush1.msra.mxu0 %v199
    %1148 = vmatprep.subr.mxu0 %v204
    %1149 = vmatpush1.msra.mxu0 %v203
    %1150 = vmatprep.subr.mxu0 %v208
    %1151 = vmatpush1.msra.mxu0 %v207
    %1152 = vmatprep.subr.mxu0 %v212
    %1153 = vmatpush1.msra.mxu0 %v211
    %1154 = vmatprep.subr.mxu0 %v216
    %1155 = vmatpush1.msra.mxu0 %v215
    %1156 = vmatprep.subr.mxu0 %v220
    %1157 = vmatpush1.msra.mxu0 %v219
    %1158 = vmatprep.subr.mxu0 %v224
    %1159 = vmatpush1.msra.mxu0 %v223
    %1160 = vmatprep.subr.mxu0 0.0
    %1161 = vmatpush1.msra.mxu0 0.0
    %1162 = vmatprep.subr.mxu0 0.0
    %1163 = vmatpush1.msra.mxu0 0.0
    %1164 = vmatprep.subr.mxu0 0.0
    %1165 = vmatpush1.msra.mxu0 0.0
    %1166 = vmatprep.subr.mxu0 0.0
    %1167 = vmatpush1.msra.mxu0 0.0
    %1168 = vmatprep.subr.mxu0 0.0
    %1169 = vmatpush1.msra.mxu0 0.0
    %1170 = vmatprep.subr.mxu0 0.0
    %1171 = vmatpush1.msra.mxu0 0.0
    %1172 = vmatprep.subr.mxu0 0.0
    %1173 = vmatpush1.msra.mxu0 0.0
    %1174 = vmatprep.subr.mxu0 0.0
    %1175 = vmatpush1.msra.mxu0 0.0
    %1176 = vmatprep.subr.mxu0 0.0
    %1177 = vmatpush1.msra.mxu0 0.0
    %1178 = vmatprep.subr.mxu0 0.0
    %1179 = vmatpush1.msra.mxu0 0.0
    %1180 = vmatprep.subr.mxu0 0.0
    %1181 = vmatpush1.msra.mxu0 0.0
    %1182 = vmatprep.subr.mxu0 0.0
    %1183 = vmatpush1.msra.mxu0 0.0
    %1184 = vmatprep.subr.mxu0 0.0
    %1185 = vmatpush1.msra.mxu0 0.0
    %1186 = vmatprep.subr.mxu0 0.0
    %1187 = vmatpush1.msra.mxu0 0.0
    %1188 = vmatprep.subr.mxu0 0.0
    %1189 = vmatpush1.msra.mxu0 0.0
    %1190 = vmatprep.subr.mxu0 0.0
    %1191 = vmatpush1.msra.mxu0 0.0
    %1192 = vmatprep.mubr.f32.mxu0 0.0
    %1193 = vmatmul.mubr.f32.gmra.mrb[0].mxu0 %v648
    %v1194 = vpop.f32.mrb[0].mxu0
    %v1195 = vadd.f32 0.0, %v1194
    %v1196 = vpop.f32.mrb[0].mxu0
    %v1197 = vadd.f32 0.0, %v1196
    %1198 = vdwg.mxu0
    %1199 = vmatprep.subr.mxu0 %v166
    %1200 = vmatpush1.msra.mxu0 %v165
    %1201 = vmatprep.subr.mxu0 %v170
    %1202 = vmatpush1.msra.mxu0 %v169
    %1203 = vmatprep.subr.mxu0 %v174
    %1204 = vmatpush1.msra.mxu0 %v173
    %1205 = vmatprep.subr.mxu0 %v178
    %1206 = vmatpush1.msra.mxu0 %v177
    %1207 = vmatprep.subr.mxu0 %v182
    %1208 = vmatpush1.msra.mxu0 %v181
    %1209 = vmatprep.subr.mxu0 %v186
    %1210 = vmatpush1.msra.mxu0 %v185
    %1211 = vmatprep.subr.mxu0 %v190
    %1212 = vmatpush1.msra.mxu0 %v189
    %1213 = vmatprep.subr.mxu0 %v194
    %1214 = vmatpush1.msra.mxu0 %v193
    %1215 = vmatprep.subr.mxu0 %v198
    %1216 = vmatpush1.msra.mxu0 %v197
    %1217 = vmatprep.subr.mxu0 %v202
    %1218 = vmatpush1.msra.mxu0 %v201
    %1219 = vmatprep.subr.mxu0 %v206
    %1220 = vmatpush1.msra.mxu0 %v205
    %1221 = vmatprep.subr.mxu0 %v210
    %1222 = vmatpush1.msra.mxu0 %v209
    %1223 = vmatprep.subr.mxu0 %v214
    %1224 = vmatpush1.msra.mxu0 %v213
    %1225 = vmatprep.subr.mxu0 %v218
    %1226 = vmatpush1.msra.mxu0 %v217
    %1227 = vmatprep.subr.mxu0 %v222
    %1228 = vmatpush1.msra.mxu0 %v221
    %1229 = vmatprep.subr.mxu0 %v226
    %1230 = vmatpush1.msra.mxu0 %v225
    %1231 = vmatprep.subr.mxu0 0.0
    %1232 = vmatpush1.msra.mxu0 0.0
    %1233 = vmatprep.subr.mxu0 0.0
    %1234 = vmatpush1.msra.mxu0 0.0
    %1235 = vmatprep.subr.mxu0 0.0
    %1236 = vmatpush1.msra.mxu0 0.0
    %1237 = vmatprep.subr.mxu0 0.0
    %1238 = vmatpush1.msra.mxu0 0.0
    %1239 = vmatprep.subr.mxu0 0.0
    %1240 = vmatpush1.msra.mxu0 0.0
    %1241 = vmatprep.subr.mxu0 0.0
    %1242 = vmatpush1.msra.mxu0 0.0
    %1243 = vmatprep.subr.mxu0 0.0
    %1244 = vmatpush1.msra.mxu0 0.0
    %1245 = vmatprep.subr.mxu0 0.0
    %1246 = vmatpush1.msra.mxu0 0.0
    %1247 = vmatprep.subr.mxu0 0.0
    %1248 = vmatpush1.msra.mxu0 0.0
    %1249 = vmatprep.subr.mxu0 0.0
    %1250 = vmatpush1.msra.mxu0 0.0
    %1251 = vmatprep.subr.mxu0 0.0
    %1252 = vmatpush1.msra.mxu0 0.0
    %1253 = vmatprep.subr.mxu0 0.0
    %1254 = vmatpush1.msra.mxu0 0.0
    %1255 = vmatprep.subr.mxu0 0.0
    %1256 = vmatpush1.msra.mxu0 0.0
    %1257 = vmatprep.subr.mxu0 0.0
    %1258 = vmatpush1.msra.mxu0 0.0
    %1259 = vmatprep.subr.mxu0 0.0
    %1260 = vmatpush1.msra.mxu0 0.0
    %1261 = vmatprep.subr.mxu0 0.0
    %1262 = vmatpush1.msra.mxu0 0.0
    %1263 = vmatprep.mubr.f32.mxu0 0.0
    %1264 = vmatmul.mubr.f32.gmra.mrb[0].mxu0 %v648
    %v1265 = vpop.f32.mrb[0].mxu0
    %v1266 = vadd.f32 0.0, %v1265
    %v1267 = vpop.f32.mrb[0].mxu0
    %v1268 = vadd.f32 0.0, %v1267
    %1269 = vdwg.mxu0
    %v1270 = vadd.f32 %v1053, %v1195
    %v1271 = vadd.f32 %v1055, %v1197
    %v1272 = vadd.f32 %v1124, %v1266
    %v1273 = vadd.f32 %v1126, %v1268
    %v1274 = vxor.u32 %v1270, 2147483648
    %v1275 = vxor.u32 %v1271, 2147483648
    %v1276 = vxor.u32 %v1272, 2147483648
    %v1277 = vmul.f32 %v1274, 1.442695
    %v1278 = vpow.pop %v1277
    %v1279 = vmul.f32 %v1275, 1.442695
    %v1280 = vpow.pop %v1279
    %v1281 = vmul.f32 %v1276, 1.442695
    %v1282 = vpow.pop %v1281
    %v1283 = vadd.f32 %v1278, 1.0
    %v1284 = vadd.f32 %v1280, 1.0
    %v1285 = vadd.f32 %v1282, 1.0
    %v1286 = vrcp.pop %v1283
    %v1287 = vmul.f32 1.0, %v1286
    %v1288 = vrcp.pop %v1284
    %v1289 = vmul.f32 1.0, %v1288
    %v1290 = vrcp.pop %v1285
    %v1291 = vmul.f32 1.0, %v1290
    %v1292 = vtanh.pop %v1273
    %v1293 = vmul.f32 %v1289, %v646
    %v1294 = vmul.f32 %v1287, %v1292
    %v1295 = vadd.f32 %v1293, %v1294
    %v1296 = vtanh.pop %v1295
    %v1297 = vmul.f32 %v1291, %v1296
    %1298 = vmatprep.subr.mxu0 %v100
    %1299 = vmatpush1.msra.mxu0 %v99
    %1300 = vmatprep.subr.mxu0 %v104
    %1301 = vmatpush1.msra.mxu0 %v103
    %1302 = vmatprep.subr.mxu0 %v108
    %1303 = vmatpush1.msra.mxu0 %v107
    %1304 = vmatprep.subr.mxu0 %v112
    %1305 = vmatpush1.msra.mxu0 %v111
    %1306 = vmatprep.subr.mxu0 %v116
    %1307 = vmatpush1.msra.mxu0 %v115
    %1308 = vmatprep.subr.mxu0 %v120
    %1309 = vmatpush1.msra.mxu0 %v119
    %1310 = vmatprep.subr.mxu0 %v124
    %1311 = vmatpush1.msra.mxu0 %v123
    %1312 = vmatprep.subr.mxu0 %v128
    %1313 = vmatpush1.msra.mxu0 %v127
    %1314 = vmatprep.subr.mxu0 %v132
    %1315 = vmatpush1.msra.mxu0 %v131
    %1316 = vmatprep.subr.mxu0 %v136
    %1317 = vmatpush1.msra.mxu0 %v135
    %1318 = vmatprep.subr.mxu0 %v140
    %1319 = vmatpush1.msra.mxu0 %v139
    %1320 = vmatprep.subr.mxu0 %v144
    %1321 = vmatpush1.msra.mxu0 %v143
    %1322 = vmatprep.subr.mxu0 %v148
    %1323 = vmatpush1.msra.mxu0 %v147
    %1324 = vmatprep.subr.mxu0 %v152
    %1325 = vmatpush1.msra.mxu0 %v151
    %1326 = vmatprep.subr.mxu0 %v156
    %1327 = vmatpush1.msra.mxu0 %v155
    %1328 = vmatprep.subr.mxu0 %v160
    %1329 = vmatpush1.msra.mxu0 %v159
    %1330 = vmatprep.subr.mxu0 0.0
    %1331 = vmatpush1.msra.mxu0 0.0
    %1332 = vmatprep.subr.mxu0 0.0
    %1333 = vmatpush1.msra.mxu0 0.0
    %1334 = vmatprep.subr.mxu0 0.0
    %1335 = vmatpush1.msra.mxu0 0.0
    %1336 = vmatprep.subr.mxu0 0.0
    %1337 = vmatpush1.msra.mxu0 0.0
    %1338 = vmatprep.subr.mxu0 0.0
    %1339 = vmatpush1.msra.mxu0 0.0
    %1340 = vmatprep.subr.mxu0 0.0
    %1341 = vmatpush1.msra.mxu0 0.0
    %1342 = vmatprep.subr.mxu0 0.0
    %1343 = vmatpush1.msra.mxu0 0.0
    %1344 = vmatprep.subr.mxu0 0.0
    %1345 = vmatpush1.msra.mxu0 0.0
    %1346 = vmatprep.subr.mxu0 0.0
    %1347 = vmatpush1.msra.mxu0 0.0
    %1348 = vmatprep.subr.mxu0 0.0
    %1349 = vmatpush1.msra.mxu0 0.0
    %1350 = vmatprep.subr.mxu0 0.0
    %1351 = vmatpush1.msra.mxu0 0.0
    %1352 = vmatprep.subr.mxu0 0.0
    %1353 = vmatpush1.msra.mxu0 0.0
    %1354 = vmatprep.subr.mxu0 0.0
    %1355 = vmatpush1.msra.mxu0 0.0
    %1356 = vmatprep.subr.mxu0 0.0
    %1357 = vmatpush1.msra.mxu0 0.0
    %1358 = vmatprep.subr.mxu0 0.0
    %1359 = vmatpush1.msra.mxu0 0.0
    %1360 = vmatprep.subr.mxu0 0.0
    %1361 = vmatpush1.msra.mxu0 0.0
    %1362 = vmatprep.mubr.f32.mxu0 0.0
    %1363 = vmatmul.mubr.f32.gmra.mrb[0].mxu0 %v1297
    %v1364 = vpop.f32.mrb[0].mxu0
    %v1365 = vadd.f32 %v653, %v1364
    %v1366 = vpop.f32.mrb[0].mxu0
    %v1367 = vadd.f32 %v657, %v1366
    %1368 = vdwg.mxu0
    %1369 = vmatprep.subr.mxu0 %v102
    %1370 = vmatpush1.msra.mxu0 %v101
    %1371 = vmatprep.subr.mxu0 %v106
    %1372 = vmatpush1.msra.mxu0 %v105
    %1373 = vmatprep.subr.mxu0 %v110
    %1374 = vmatpush1.msra.mxu0 %v109
    %1375 = vmatprep.subr.mxu0 %v114
    %1376 = vmatpush1.msra.mxu0 %v113
    %1377 = vmatprep.subr.mxu0 %v118
    %1378 = vmatpush1.msra.mxu0 %v117
    %1379 = vmatprep.subr.mxu0 %v122
    %1380 = vmatpush1.msra.mxu0 %v121
    %1381 = vmatprep.subr.mxu0 %v126
    %1382 = vmatpush1.msra.mxu0 %v125
    %1383 = vmatprep.subr.mxu0 %v130
    %1384 = vmatpush1.msra.mxu0 %v129
    %1385 = vmatprep.subr.mxu0 %v134
    %1386 = vmatpush1.msra.mxu0 %v133
    %1387 = vmatprep.subr.mxu0 %v138
    %1388 = vmatpush1.msra.mxu0 %v137
    %1389 = vmatprep.subr.mxu0 %v142
    %1390 = vmatpush1.msra.mxu0 %v141
    %1391 = vmatprep.subr.mxu0 %v146
    %1392 = vmatpush1.msra.mxu0 %v145
    %1393 = vmatprep.subr.mxu0 %v150
    %1394 = vmatpush1.msra.mxu0 %v149
    %1395 = vmatprep.subr.mxu0 %v154
    %1396 = vmatpush1.msra.mxu0 %v153
    %1397 = vmatprep.subr.mxu0 %v158
    %1398 = vmatpush1.msra.mxu0 %v157
    %1399 = vmatprep.subr.mxu0 %v162
    %1400 = vmatpush1.msra.mxu0 %v161
    %1401 = vmatprep.subr.mxu0 0.0
    %1402 = vmatpush1.msra.mxu0 0.0
    %1403 = vmatprep.subr.mxu0 0.0
    %1404 = vmatpush1.msra.mxu0 0.0
    %1405 = vmatprep.subr.mxu0 0.0
    %1406 = vmatpush1.msra.mxu0 0.0
    %1407 = vmatprep.subr.mxu0 0.0
    %1408 = vmatpush1.msra.mxu0 0.0
    %1409 = vmatprep.subr.mxu0 0.0
    %1410 = vmatpush1.msra.mxu0 0.0
    %1411 = vmatprep.subr.mxu0 0.0
    %1412 = vmatpush1.msra.mxu0 0.0
    %1413 = vmatprep.subr.mxu0 0.0
    %1414 = vmatpush1.msra.mxu0 0.0
    %1415 = vmatprep.subr.mxu0 0.0
    %1416 = vmatpush1.msra.mxu0 0.0
    %1417 = vmatprep.subr.mxu0 0.0
    %1418 = vmatpush1.msra.mxu0 0.0
    %1419 = vmatprep.subr.mxu0 0.0
    %1420 = vmatpush1.msra.mxu0 0.0
    %1421 = vmatprep.subr.mxu0 0.0
    %1422 = vmatpush1.msra.mxu0 0.0
    %1423 = vmatprep.subr.mxu0 0.0
    %1424 = vmatpush1.msra.mxu0 0.0
    %1425 = vmatprep.subr.mxu0 0.0
    %1426 = vmatpush1.msra.mxu0 0.0
    %1427 = vmatprep.subr.mxu0 0.0
    %1428 = vmatpush1.msra.mxu0 0.0
    %1429 = vmatprep.subr.mxu0 0.0
    %1430 = vmatpush1.msra.mxu0 0.0
    %1431 = vmatprep.subr.mxu0 0.0
    %1432 = vmatpush1.msra.mxu0 0.0
    %1433 = vmatprep.mubr.f32.mxu0 0.0
    %1434 = vmatmul.mubr.f32.gmra.mrb[0].mxu0 %v1297
    %v1435 = vpop.f32.mrb[0].mxu0
    %v1436 = vadd.f32 %v661, %v1435
    %v1437 = vpop.f32.mrb[0].mxu0
    %v1438 = vadd.f32 %v665, %v1437
    %1439 = vdwg.mxu0
    %1440 = vmatprep.subr.mxu0 %v228
    %1441 = vmatpush1.msra.mxu0 %v227
    %1442 = vmatprep.subr.mxu0 %v232
    %1443 = vmatpush1.msra.mxu0 %v231
    %1444 = vmatprep.subr.mxu0 %v236
    %1445 = vmatpush1.msra.mxu0 %v235
    %1446 = vmatprep.subr.mxu0 %v240
    %1447 = vmatpush1.msra.mxu0 %v239
    %1448 = vmatprep.subr.mxu0 %v244
    %1449 = vmatpush1.msra.mxu0 %v243
    %1450 = vmatprep.subr.mxu0 %v248
    %1451 = vmatpush1.msra.mxu0 %v247
    %1452 = vmatprep.subr.mxu0 %v252
    %1453 = vmatpush1.msra.mxu0 %v251
    %1454 = vmatprep.subr.mxu0 %v256
    %1455 = vmatpush1.msra.mxu0 %v255
    %1456 = vmatprep.subr.mxu0 %v260
    %1457 = vmatpush1.msra.mxu0 %v259
    %1458 = vmatprep.subr.mxu0 %v264
    %1459 = vmatpush1.msra.mxu0 %v263
    %1460 = vmatprep.subr.mxu0 %v268
    %1461 = vmatpush1.msra.mxu0 %v267
    %1462 = vmatprep.subr.mxu0 %v272
    %1463 = vmatpush1.msra.mxu0 %v271
    %1464 = vmatprep.subr.mxu0 %v276
    %1465 = vmatpush1.msra.mxu0 %v275
    %1466 = vmatprep.subr.mxu0 %v280
    %1467 = vmatpush1.msra.mxu0 %v279
    %1468 = vmatprep.subr.mxu0 %v284
    %1469 = vmatpush1.msra.mxu0 %v283
    %1470 = vmatprep.subr.mxu0 %v288
    %1471 = vmatpush1.msra.mxu0 %v287
    %1472 = vmatprep.subr.mxu0 0.0
    %1473 = vmatpush1.msra.mxu0 0.0
    %1474 = vmatprep.subr.mxu0 0.0
    %1475 = vmatpush1.msra.mxu0 0.0
    %1476 = vmatprep.subr.mxu0 0.0
    %1477 = vmatpush1.msra.mxu0 0.0
    %1478 = vmatprep.subr.mxu0 0.0
    %1479 = vmatpush1.msra.mxu0 0.0
    %1480 = vmatprep.subr.mxu0 0.0
    %1481 = vmatpush1.msra.mxu0 0.0
    %1482 = vmatprep.subr.mxu0 0.0
    %1483 = vmatpush1.msra.mxu0 0.0
    %1484 = vmatprep.subr.mxu0 0.0
    %1485 = vmatpush1.msra.mxu0 0.0
    %1486 = vmatprep.subr.mxu0 0.0
    %1487 = vmatpush1.msra.mxu0 0.0
    %1488 = vmatprep.subr.mxu0 0.0
    %1489 = vmatpush1.msra.mxu0 0.0
    %1490 = vmatprep.subr.mxu0 0.0
    %1491 = vmatpush1.msra.mxu0 0.0
    %1492 = vmatprep.subr.mxu0 0.0
    %1493 = vmatpush1.msra.mxu0 0.0
    %1494 = vmatprep.subr.mxu0 0.0
    %1495 = vmatpush1.msra.mxu0 0.0
    %1496 = vmatprep.subr.mxu0 0.0
    %1497 = vmatpush1.msra.mxu0 0.0
    %1498 = vmatprep.subr.mxu0 0.0
    %1499 = vmatpush1.msra.mxu0 0.0
    %1500 = vmatprep.subr.mxu0 0.0
    %1501 = vmatpush1.msra.mxu0 0.0
    %1502 = vmatprep.subr.mxu0 0.0
    %1503 = vmatpush1.msra.mxu0 0.0
    %1504 = vmatprep.mubr.f32.mxu0 0.0
    %1505 = vmatmul.mubr.f32.gmra.mrb[0].mxu0 %v981
    %v1506 = vpop.f32.mrb[0].mxu0
    %v1507 = vadd.f32 0.0, %v1506
    %v1508 = vpop.f32.mrb[0].mxu0
    %v1509 = vadd.f32 0.0, %v1508
    %1510 = vdwg.mxu0
    %1511 = vmatprep.subr.mxu0 %v230
    %1512 = vmatpush1.msra.mxu0 %v229
    %1513 = vmatprep.subr.mxu0 %v234
    %1514 = vmatpush1.msra.mxu0 %v233
    %1515 = vmatprep.subr.mxu0 %v238
    %1516 = vmatpush1.msra.mxu0 %v237
    %1517 = vmatprep.subr.mxu0 %v242
    %1518 = vmatpush1.msra.mxu0 %v241
    %1519 = vmatprep.subr.mxu0 %v246
    %1520 = vmatpush1.msra.mxu0 %v245
    %1521 = vmatprep.subr.mxu0 %v250
    %1522 = vmatpush1.msra.mxu0 %v249
    %1523 = vmatprep.subr.mxu0 %v254
    %1524 = vmatpush1.msra.mxu0 %v253
    %1525 = vmatprep.subr.mxu0 %v258
    %1526 = vmatpush1.msra.mxu0 %v257
    %1527 = vmatprep.subr.mxu0 %v262
    %1528 = vmatpush1.msra.mxu0 %v261
    %1529 = vmatprep.subr.mxu0 %v266
    %1530 = vmatpush1.msra.mxu0 %v265
    %1531 = vmatprep.subr.mxu0 %v270
    %1532 = vmatpush1.msra.mxu0 %v269
    %1533 = vmatprep.subr.mxu0 %v274
    %1534 = vmatpush1.msra.mxu0 %v273
    %1535 = vmatprep.subr.mxu0 %v278
    %1536 = vmatpush1.msra.mxu0 %v277
    %1537 = vmatprep.subr.mxu0 %v282
    %1538 = vmatpush1.msra.mxu0 %v281
    %1539 = vmatprep.subr.mxu0 %v286
    %1540 = vmatpush1.msra.mxu0 %v285
    %1541 = vmatprep.subr.mxu0 %v290
    %1542 = vmatpush1.msra.mxu0 %v289
    %1543 = vmatprep.subr.mxu0 0.0
    %1544 = vmatpush1.msra.mxu0 0.0
    %1545 = vmatprep.subr.mxu0 0.0
    %1546 = vmatpush1.msra.mxu0 0.0
    %1547 = vmatprep.subr.mxu0 0.0
    %1548 = vmatpush1.msra.mxu0 0.0
    %1549 = vmatprep.subr.mxu0 0.0
    %1550 = vmatpush1.msra.mxu0 0.0
    %1551 = vmatprep.subr.mxu0 0.0
    %1552 = vmatpush1.msra.mxu0 0.0
    %1553 = vmatprep.subr.mxu0 0.0
    %1554 = vmatpush1.msra.mxu0 0.0
    %1555 = vmatprep.subr.mxu0 0.0
    %1556 = vmatpush1.msra.mxu0 0.0
    %1557 = vmatprep.subr.mxu0 0.0
    %1558 = vmatpush1.msra.mxu0 0.0
    %1559 = vmatprep.subr.mxu0 0.0
    %1560 = vmatpush1.msra.mxu0 0.0
    %1561 = vmatprep.subr.mxu0 0.0
    %1562 = vmatpush1.msra.mxu0 0.0
    %1563 = vmatprep.subr.mxu0 0.0
    %1564 = vmatpush1.msra.mxu0 0.0
    %1565 = vmatprep.subr.mxu0 0.0
    %1566 = vmatpush1.msra.mxu0 0.0
    %1567 = vmatprep.subr.mxu0 0.0
    %1568 = vmatpush1.msra.mxu0 0.0
    %1569 = vmatprep.subr.mxu0 0.0
    %1570 = vmatpush1.msra.mxu0 0.0
    %1571 = vmatprep.subr.mxu0 0.0
    %1572 = vmatpush1.msra.mxu0 0.0
    %1573 = vmatprep.subr.mxu0 0.0
    %1574 = vmatpush1.msra.mxu0 0.0
    %1575 = vmatprep.mubr.f32.mxu0 0.0
    %1576 = vmatmul.mubr.f32.gmra.mrb[0].mxu0 %v981
    %v1577 = vpop.f32.mrb[0].mxu0
    %v1578 = vadd.f32 0.0, %v1577
    %v1579 = vpop.f32.mrb[0].mxu0
    %v1580 = vadd.f32 0.0, %v1579
    %1581 = vdwg.mxu0
    %v1582 = vadd.f32 %v1365, %v1507
    %v1583 = vadd.f32 %v1367, %v1509
    %v1584 = vadd.f32 %v1436, %v1578
    %v1585 = vadd.f32 %v1438, %v1580
    %v1586 = vxor.u32 %v1582, 2147483648
    %v1587 = vxor.u32 %v1583, 2147483648
    %v1588 = vxor.u32 %v1584, 2147483648
    %v1589 = vmul.f32 %v1586, 1.442695
    %v1590 = vpow.pop %v1589
    %v1591 = vmul.f32 %v1587, 1.442695
    %v1592 = vpow.pop %v1591
    %v1593 = vmul.f32 %v1588, 1.442695
    %v1594 = vpow.pop %v1593
    %v1595 = vadd.f32 %v1590, 1.0
    %v1596 = vadd.f32 %v1592, 1.0
    %v1597 = vadd.f32 %v1594, 1.0
    %v1598 = vrcp.pop %v1595
    %v1599 = vmul.f32 1.0, %v1598
    %v1600 = vrcp.pop %v1596
    %v1601 = vmul.f32 1.0, %v1600
    %v1602 = vrcp.pop %v1597
    %v1603 = vmul.f32 1.0, %v1602
    %v1604 = vtanh.pop %v1585
    %v1605 = vmul.f32 %v1601, %v979
    %v1606 = vmul.f32 %v1599, %v1604
    %v1607 = vadd.f32 %v1605, %v1606
    %v1608 = vtanh.pop %v1607
    %v1609 = vmul.f32 %v1603, %v1608
    %v1610 = vrot.slane %v293, 2
    %v1611 = vrot.slane %v294, 1
    %v1612 = vsel %vm319, %v1611, %v1610
    %v1613 = vsel %vm321, %v1612, 0
    %1615 = vmatprep.subr.mxu0 %v92
    %1616 = vmatpush1.msra.mxu0 %v91
    %1617 = vmatprep.subr.mxu0 %v329
    %1618 = vmatpush1.msra.mxu0 %v326
    %1619 = vmatprep.subr.mxu0 0.0
    %1620 = vmatpush1.msra.mxu0 0.0
    %1621 = vmatprep.subr.mxu0 0.0
    %1622 = vmatpush1.msra.mxu0 0.0
    %1623 = vmatprep.subr.mxu0 0.0
    %1624 = vmatpush1.msra.mxu0 0.0
    %1625 = vmatprep.subr.mxu0 0.0
    %1626 = vmatpush1.msra.mxu0 0.0
    %1627 = vmatprep.subr.mxu0 0.0
    %1628 = vmatpush1.msra.mxu0 0.0
    %1629 = vmatprep.subr.mxu0 0.0
    %1630 = vmatpush1.msra.mxu0 0.0
    %1631 = vmatprep.subr.mxu0 0.0
    %1632 = vmatpush1.msra.mxu0 0.0
    %1633 = vmatprep.subr.mxu0 0.0
    %1634 = vmatpush1.msra.mxu0 0.0
    %1635 = vmatprep.subr.mxu0 0.0
    %1636 = vmatpush1.msra.mxu0 0.0
    %1637 = vmatprep.subr.mxu0 0.0
    %1638 = vmatpush1.msra.mxu0 0.0
    %1639 = vmatprep.subr.mxu0 0.0
    %1640 = vmatpush1.msra.mxu0 0.0
    %1641 = vmatprep.subr.mxu0 0.0
    %1642 = vmatpush1.msra.mxu0 0.0
    %1643 = vmatprep.subr.mxu0 0.0
    %1644 = vmatpush1.msra.mxu0 0.0
    %1645 = vmatprep.subr.mxu0 0.0
    %1646 = vmatpush1.msra.mxu0 0.0
    %1647 = vmatprep.subr.mxu0 0.0
    %1648 = vmatpush1.msra.mxu0 0.0
    %1649 = vmatprep.subr.mxu0 0.0
    %1650 = vmatpush1.msra.mxu0 0.0
    %1651 = vmatprep.subr.mxu0 0.0
    %1652 = vmatpush1.msra.mxu0 0.0
    %1653 = vmatprep.subr.mxu0 0.0
    %1654 = vmatpush1.msra.mxu0 0.0
    %1655 = vmatprep.subr.mxu0 0.0
    %1656 = vmatpush1.msra.mxu0 0.0
    %1657 = vmatprep.subr.mxu0 0.0
    %1658 = vmatpush1.msra.mxu0 0.0
    %1659 = vmatprep.subr.mxu0 0.0
    %1660 = vmatpush1.msra.mxu0 0.0
    %1661 = vmatprep.subr.mxu0 0.0
    %1662 = vmatpush1.msra.mxu0 0.0
    %1663 = vmatprep.subr.mxu0 0.0
    %1664 = vmatpush1.msra.mxu0 0.0
    %1665 = vmatprep.subr.mxu0 0.0
    %1666 = vmatpush1.msra.mxu0 0.0
    %1667 = vmatprep.subr.mxu0 0.0
    %1668 = vmatpush1.msra.mxu0 0.0
    %1669 = vmatprep.subr.mxu0 0.0
    %1670 = vmatpush1.msra.mxu0 0.0
    %1671 = vmatprep.subr.mxu0 0.0
    %1672 = vmatpush1.msra.mxu0 0.0
    %1673 = vmatprep.subr.mxu0 0.0
    %1674 = vmatpush1.msra.mxu0 0.0
    %1675 = vmatprep.subr.mxu0 0.0
    %1676 = vmatpush1.msra.mxu0 0.0
    %1677 = vmatprep.subr.mxu0 0.0
    %1678 = vmatpush1.msra.mxu0 0.0
    %1679 = vmatprep.mubr.f32.mxu0 0.0
    %1680 = vmatmul.mubr.f32.gmra.mrb[0].mxu0 %v1613
    %v1681 = vpop.f32.mrb[0].mxu0
    %v1682 = vadd.f32 %v299, %v1681
    %v1683 = vpop.f32.mrb[0].mxu0
    %v1684 = vadd.f32 %v303, %v1683
    %1685 = vdwg.mxu0
    %1686 = vmatprep.subr.mxu0 %v94
    %1687 = vmatpush1.msra.mxu0 %v93
    %1688 = vmatprep.subr.mxu0 %v335
    %1689 = vmatpush1.msra.mxu0 %v332
    %1690 = vmatprep.subr.mxu0 0.0
    %1691 = vmatpush1.msra.mxu0 0.0
    %1692 = vmatprep.subr.mxu0 0.0
    %1693 = vmatpush1.msra.mxu0 0.0
    %1694 = vmatprep.subr.mxu0 0.0
    %1695 = vmatpush1.msra.mxu0 0.0
    %1696 = vmatprep.subr.mxu0 0.0
    %1697 = vmatpush1.msra.mxu0 0.0
    %1698 = vmatprep.subr.mxu0 0.0
    %1699 = vmatpush1.msra.mxu0 0.0
    %1700 = vmatprep.subr.mxu0 0.0
    %1701 = vmatpush1.msra.mxu0 0.0
    %1702 = vmatprep.subr.mxu0 0.0
    %1703 = vmatpush1.msra.mxu0 0.0
    %1704 = vmatprep.subr.mxu0 0.0
    %1705 = vmatpush1.msra.mxu0 0.0
    %1706 = vmatprep.subr.mxu0 0.0
    %1707 = vmatpush1.msra.mxu0 0.0
    %1708 = vmatprep.subr.mxu0 0.0
    %1709 = vmatpush1.msra.mxu0 0.0
    %1710 = vmatprep.subr.mxu0 0.0
    %1711 = vmatpush1.msra.mxu0 0.0
    %1712 = vmatprep.subr.mxu0 0.0
    %1713 = vmatpush1.msra.mxu0 0.0
    %1714 = vmatprep.subr.mxu0 0.0
    %1715 = vmatpush1.msra.mxu0 0.0
    %1716 = vmatprep.subr.mxu0 0.0
    %1717 = vmatpush1.msra.mxu0 0.0
    %1718 = vmatprep.subr.mxu0 0.0
    %1719 = vmatpush1.msra.mxu0 0.0
    %1720 = vmatprep.subr.mxu0 0.0
    %1721 = vmatpush1.msra.mxu0 0.0
    %1722 = vmatprep.subr.mxu0 0.0
    %1723 = vmatpush1.msra.mxu0 0.0
    %1724 = vmatprep.subr.mxu0 0.0
    %1725 = vmatpush1.msra.mxu0 0.0
    %1726 = vmatprep.subr.mxu0 0.0
    %1727 = vmatpush1.msra.mxu0 0.0
    %1728 = vmatprep.subr.mxu0 0.0
    %1729 = vmatpush1.msra.mxu0 0.0
    %1730 = vmatprep.subr.mxu0 0.0
    %1731 = vmatpush1.msra.mxu0 0.0
    %1732 = vmatprep.subr.mxu0 0.0
    %1733 = vmatpush1.msra.mxu0 0.0
    %1734 = vmatprep.subr.mxu0 0.0
    %1735 = vmatpush1.msra.mxu0 0.0
    %1736 = vmatprep.subr.mxu0 0.0
    %1737 = vmatpush1.msra.mxu0 0.0
    %1738 = vmatprep.subr.mxu0 0.0
    %1739 = vmatpush1.msra.mxu0 0.0
    %1740 = vmatprep.subr.mxu0 0.0
    %1741 = vmatpush1.msra.mxu0 0.0
    %1742 = vmatprep.subr.mxu0 0.0
    %1743 = vmatpush1.msra.mxu0 0.0
    %1744 = vmatprep.subr.mxu0 0.0
    %1745 = vmatpush1.msra.mxu0 0.0
    %1746 = vmatprep.subr.mxu0 0.0
    %1747 = vmatpush1.msra.mxu0 0.0
    %1748 = vmatprep.subr.mxu0 0.0
    %1749 = vmatpush1.msra.mxu0 0.0
    %1750 = vmatprep.mubr.f32.mxu0 0.0
    %1751 = vmatmul.mubr.f32.gmra.mrb[0].mxu0 %v1613
    %v1752 = vpop.f32.mrb[0].mxu0
    %v1753 = vadd.f32 %v307, %v1752
    %v1754 = vpop.f32.mrb[0].mxu0
    %v1755 = vadd.f32 %v311, %v1754
    %1756 = vdwg.mxu0
    %1757 = vmatprep.subr.mxu0 %v164
    %1758 = vmatpush1.msra.mxu0 %v163
    %1759 = vmatprep.subr.mxu0 %v168
    %1760 = vmatpush1.msra.mxu0 %v167
    %1761 = vmatprep.subr.mxu0 %v172
    %1762 = vmatpush1.msra.mxu0 %v171
    %1763 = vmatprep.subr.mxu0 %v176
    %1764 = vmatpush1.msra.mxu0 %v175
    %1765 = vmatprep.subr.mxu0 %v180
    %1766 = vmatpush1.msra.mxu0 %v179
    %1767 = vmatprep.subr.mxu0 %v184
    %1768 = vmatpush1.msra.mxu0 %v183
    %1769 = vmatprep.subr.mxu0 %v188
    %1770 = vmatpush1.msra.mxu0 %v187
    %1771 = vmatprep.subr.mxu0 %v192
    %1772 = vmatpush1.msra.mxu0 %v191
    %1773 = vmatprep.subr.mxu0 %v196
    %1774 = vmatpush1.msra.mxu0 %v195
    %1775 = vmatprep.subr.mxu0 %v200
    %1776 = vmatpush1.msra.mxu0 %v199
    %1777 = vmatprep.subr.mxu0 %v204
    %1778 = vmatpush1.msra.mxu0 %v203
    %1779 = vmatprep.subr.mxu0 %v208
    %1780 = vmatpush1.msra.mxu0 %v207
    %1781 = vmatprep.subr.mxu0 %v212
    %1782 = vmatpush1.msra.mxu0 %v211
    %1783 = vmatprep.subr.mxu0 %v216
    %1784 = vmatpush1.msra.mxu0 %v215
    %1785 = vmatprep.subr.mxu0 %v220
    %1786 = vmatpush1.msra.mxu0 %v219
    %1787 = vmatprep.subr.mxu0 %v224
    %1788 = vmatpush1.msra.mxu0 %v223
    %1789 = vmatprep.subr.mxu0 0.0
    %1790 = vmatpush1.msra.mxu0 0.0
    %1791 = vmatprep.subr.mxu0 0.0
    %1792 = vmatpush1.msra.mxu0 0.0
    %1793 = vmatprep.subr.mxu0 0.0
    %1794 = vmatpush1.msra.mxu0 0.0
    %1795 = vmatprep.subr.mxu0 0.0
    %1796 = vmatpush1.msra.mxu0 0.0
    %1797 = vmatprep.subr.mxu0 0.0
    %1798 = vmatpush1.msra.mxu0 0.0
    %1799 = vmatprep.subr.mxu0 0.0
    %1800 = vmatpush1.msra.mxu0 0.0
    %1801 = vmatprep.subr.mxu0 0.0
    %1802 = vmatpush1.msra.mxu0 0.0
    %1803 = vmatprep.subr.mxu0 0.0
    %1804 = vmatpush1.msra.mxu0 0.0
    %1805 = vmatprep.subr.mxu0 0.0
    %1806 = vmatpush1.msra.mxu0 0.0
    %1807 = vmatprep.subr.mxu0 0.0
    %1808 = vmatpush1.msra.mxu0 0.0
    %1809 = vmatprep.subr.mxu0 0.0
    %1810 = vmatpush1.msra.mxu0 0.0
    %1811 = vmatprep.subr.mxu0 0.0
    %1812 = vmatpush1.msra.mxu0 0.0
    %1813 = vmatprep.subr.mxu0 0.0
    %1814 = vmatpush1.msra.mxu0 0.0
    %1815 = vmatprep.subr.mxu0 0.0
    %1816 = vmatpush1.msra.mxu0 0.0
    %1817 = vmatprep.subr.mxu0 0.0
    %1818 = vmatpush1.msra.mxu0 0.0
    %1819 = vmatprep.subr.mxu0 0.0
    %1820 = vmatpush1.msra.mxu0 0.0
    %1821 = vmatprep.mubr.f32.mxu0 0.0
    %1822 = vmatmul.mubr.f32.gmra.mrb[0].mxu0 %v1297
    %v1823 = vpop.f32.mrb[0].mxu0
    %v1824 = vadd.f32 0.0, %v1823
    %v1825 = vpop.f32.mrb[0].mxu0
    %v1826 = vadd.f32 0.0, %v1825
    %1827 = vdwg.mxu0
    %1828 = vmatprep.subr.mxu0 %v166
    %1829 = vmatpush1.msra.mxu0 %v165
    %1830 = vmatprep.subr.mxu0 %v170
    %1831 = vmatpush1.msra.mxu0 %v169
    %1832 = vmatprep.subr.mxu0 %v174
    %1833 = vmatpush1.msra.mxu0 %v173
    %1834 = vmatprep.subr.mxu0 %v178
    %1835 = vmatpush1.msra.mxu0 %v177
    %1836 = vmatprep.subr.mxu0 %v182
    %1837 = vmatpush1.msra.mxu0 %v181
    %1838 = vmatprep.subr.mxu0 %v186
    %1839 = vmatpush1.msra.mxu0 %v185
    %1840 = vmatprep.subr.mxu0 %v190
    %1841 = vmatpush1.msra.mxu0 %v189
    %1842 = vmatprep.subr.mxu0 %v194
    %1843 = vmatpush1.msra.mxu0 %v193
    %1844 = vmatprep.subr.mxu0 %v198
    %1845 = vmatpush1.msra.mxu0 %v197
    %1846 = vmatprep.subr.mxu0 %v202
    %1847 = vmatpush1.msra.mxu0 %v201
    %1848 = vmatprep.subr.mxu0 %v206
    %1849 = vmatpush1.msra.mxu0 %v205
    %1850 = vmatprep.subr.mxu0 %v210
    %1851 = vmatpush1.msra.mxu0 %v209
    %1852 = vmatprep.subr.mxu0 %v214
    %1853 = vmatpush1.msra.mxu0 %v213
    %1854 = vmatprep.subr.mxu0 %v218
    %1855 = vmatpush1.msra.mxu0 %v217
    %1856 = vmatprep.subr.mxu0 %v222
    %1857 = vmatpush1.msra.mxu0 %v221
    %1858 = vmatprep.subr.mxu0 %v226
    %1859 = vmatpush1.msra.mxu0 %v225
    %1860 = vmatprep.subr.mxu0 0.0
    %1861 = vmatpush1.msra.mxu0 0.0
    %1862 = vmatprep.subr.mxu0 0.0
    %1863 = vmatpush1.msra.mxu0 0.0
    %1864 = vmatprep.subr.mxu0 0.0
    %1865 = vmatpush1.msra.mxu0 0.0
    %1866 = vmatprep.subr.mxu0 0.0
    %1867 = vmatpush1.msra.mxu0 0.0
    %1868 = vmatprep.subr.mxu0 0.0
    %1869 = vmatpush1.msra.mxu0 0.0
    %1870 = vmatprep.subr.mxu0 0.0
    %1871 = vmatpush1.msra.mxu0 0.0
    %1872 = vmatprep.subr.mxu0 0.0
    %1873 = vmatpush1.msra.mxu0 0.0
    %1874 = vmatprep.subr.mxu0 0.0
    %1875 = vmatpush1.msra.mxu0 0.0
    %1876 = vmatprep.subr.mxu0 0.0
    %1877 = vmatpush1.msra.mxu0 0.0
    %1878 = vmatprep.subr.mxu0 0.0
    %1879 = vmatpush1.msra.mxu0 0.0
    %1880 = vmatprep.subr.mxu0 0.0
    %1881 = vmatpush1.msra.mxu0 0.0
    %1882 = vmatprep.subr.mxu0 0.0
    %1883 = vmatpush1.msra.mxu0 0.0
    %1884 = vmatprep.subr.mxu0 0.0
    %1885 = vmatpush1.msra.mxu0 0.0
    %1886 = vmatprep.subr.mxu0 0.0
    %1887 = vmatpush1.msra.mxu0 0.0
    %1888 = vmatprep.subr.mxu0 0.0
    %1889 = vmatpush1.msra.mxu0 0.0
    %1890 = vmatprep.subr.mxu0 0.0
    %1891 = vmatpush1.msra.mxu0 0.0
    %1892 = vmatprep.mubr.f32.mxu0 0.0
    %1893 = vmatmul.mubr.f32.gmra.mrb[0].mxu0 %v1297
    %v1894 = vpop.f32.mrb[0].mxu0
    %v1895 = vadd.f32 0.0, %v1894
    %v1896 = vpop.f32.mrb[0].mxu0
    %v1897 = vadd.f32 0.0, %v1896
    %1898 = vdwg.mxu0
    %v1899 = vadd.f32 %v1682, %v1824
    %v1900 = vadd.f32 %v1684, %v1826
    %v1901 = vadd.f32 %v1753, %v1895
    %v1902 = vadd.f32 %v1755, %v1897
    %v1903 = vxor.u32 %v1899, 2147483648
    %v1904 = vxor.u32 %v1900, 2147483648
    %v1905 = vxor.u32 %v1901, 2147483648
    %v1906 = vmul.f32 %v1903, 1.442695
    %v1907 = vpow.pop %v1906
    %v1908 = vmul.f32 %v1904, 1.442695
    %v1909 = vpow.pop %v1908
    %v1910 = vmul.f32 %v1905, 1.442695
    %v1911 = vpow.pop %v1910
    %v1912 = vadd.f32 %v1907, 1.0
    %v1913 = vadd.f32 %v1909, 1.0
    %v1914 = vadd.f32 %v1911, 1.0
    %v1915 = vrcp.pop %v1912
    %v1916 = vmul.f32 1.0, %v1915
    %v1917 = vrcp.pop %v1913
    %v1918 = vmul.f32 1.0, %v1917
    %v1919 = vrcp.pop %v1914
    %v1920 = vmul.f32 1.0, %v1919
    %v1921 = vtanh.pop %v1902
    %v1922 = vmul.f32 %v1918, %v1295
    %v1923 = vmul.f32 %v1916, %v1921
    %v1924 = vadd.f32 %v1922, %v1923
    %v1925 = vtanh.pop %v1924
    %v1926 = vmul.f32 %v1920, %v1925
    %1927 = vmatprep.subr.mxu0 %v100
    %1928 = vmatpush1.msra.mxu0 %v99
    %1929 = vmatprep.subr.mxu0 %v104
    %1930 = vmatpush1.msra.mxu0 %v103
    %1931 = vmatprep.subr.mxu0 %v108
    %1932 = vmatpush1.msra.mxu0 %v107
    %1933 = vmatprep.subr.mxu0 %v112
    %1934 = vmatpush1.msra.mxu0 %v111
    %1935 = vmatprep.subr.mxu0 %v116
    %1936 = vmatpush1.msra.mxu0 %v115
    %1937 = vmatprep.subr.mxu0 %v120
    %1938 = vmatpush1.msra.mxu0 %v119
    %1939 = vmatprep.subr.mxu0 %v124
    %1940 = vmatpush1.msra.mxu0 %v123
    %1941 = vmatprep.subr.mxu0 %v128
    %1942 = vmatpush1.msra.mxu0 %v127
    %1943 = vmatprep.subr.mxu0 %v132
    %1944 = vmatpush1.msra.mxu0 %v131
    %1945 = vmatprep.subr.mxu0 %v136
    %1946 = vmatpush1.msra.mxu0 %v135
    %1947 = vmatprep.subr.mxu0 %v140
    %1948 = vmatpush1.msra.mxu0 %v139
    %1949 = vmatprep.subr.mxu0 %v144
    %1950 = vmatpush1.msra.mxu0 %v143
    %1951 = vmatprep.subr.mxu0 %v148
    %1952 = vmatpush1.msra.mxu0 %v147
    %1953 = vmatprep.subr.mxu0 %v152
    %1954 = vmatpush1.msra.mxu0 %v151
    %1955 = vmatprep.subr.mxu0 %v156
    %1956 = vmatpush1.msra.mxu0 %v155
    %1957 = vmatprep.subr.mxu0 %v160
    %1958 = vmatpush1.msra.mxu0 %v159
    %1959 = vmatprep.subr.mxu0 0.0
    %1960 = vmatpush1.msra.mxu0 0.0
    %1961 = vmatprep.subr.mxu0 0.0
    %1962 = vmatpush1.msra.mxu0 0.0
    %1963 = vmatprep.subr.mxu0 0.0
    %1964 = vmatpush1.msra.mxu0 0.0
    %1965 = vmatprep.subr.mxu0 0.0
    %1966 = vmatpush1.msra.mxu0 0.0
    %1967 = vmatprep.subr.mxu0 0.0
    %1968 = vmatpush1.msra.mxu0 0.0
    %1969 = vmatprep.subr.mxu0 0.0
    %1970 = vmatpush1.msra.mxu0 0.0
    %1971 = vmatprep.subr.mxu0 0.0
    %1972 = vmatpush1.msra.mxu0 0.0
    %1973 = vmatprep.subr.mxu0 0.0
    %1974 = vmatpush1.msra.mxu0 0.0
    %1975 = vmatprep.subr.mxu0 0.0
    %1976 = vmatpush1.msra.mxu0 0.0
    %1977 = vmatprep.subr.mxu0 0.0
    %1978 = vmatpush1.msra.mxu0 0.0
    %1979 = vmatprep.subr.mxu0 0.0
    %1980 = vmatpush1.msra.mxu0 0.0
    %1981 = vmatprep.subr.mxu0 0.0
    %1982 = vmatpush1.msra.mxu0 0.0
    %1983 = vmatprep.subr.mxu0 0.0
    %1984 = vmatpush1.msra.mxu0 0.0
    %1985 = vmatprep.subr.mxu0 0.0
    %1986 = vmatpush1.msra.mxu0 0.0
    %1987 = vmatprep.subr.mxu0 0.0
    %1988 = vmatpush1.msra.mxu0 0.0
    %1989 = vmatprep.subr.mxu0 0.0
    %1990 = vmatpush1.msra.mxu0 0.0
    %1991 = vmatprep.mubr.f32.mxu0 0.0
    %1992 = vmatmul.mubr.f32.gmra.mrb[0].mxu0 %v1926
    %v1993 = vpop.f32.mrb[0].mxu0
    %v1994 = vadd.f32 %v653, %v1993
    %v1995 = vpop.f32.mrb[0].mxu0
    %v1996 = vadd.f32 %v657, %v1995
    %1997 = vdwg.mxu0
    %1998 = vmatprep.subr.mxu0 %v102
    %1999 = vmatpush1.msra.mxu0 %v101
    %2000 = vmatprep.subr.mxu0 %v106
    %2001 = vmatpush1.msra.mxu0 %v105
    %2002 = vmatprep.subr.mxu0 %v110
    %2003 = vmatpush1.msra.mxu0 %v109
    %2004 = vmatprep.subr.mxu0 %v114
    %2005 = vmatpush1.msra.mxu0 %v113
    %2006 = vmatprep.subr.mxu0 %v118
    %2007 = vmatpush1.msra.mxu0 %v117
    %2008 = vmatprep.subr.mxu0 %v122
    %2009 = vmatpush1.msra.mxu0 %v121
    %2010 = vmatprep.subr.mxu0 %v126
    %2011 = vmatpush1.msra.mxu0 %v125
    %2012 = vmatprep.subr.mxu0 %v130
    %2013 = vmatpush1.msra.mxu0 %v129
    %2014 = vmatprep.subr.mxu0 %v134
    %2015 = vmatpush1.msra.mxu0 %v133
    %2016 = vmatprep.subr.mxu0 %v138
    %2017 = vmatpush1.msra.mxu0 %v137
    %2018 = vmatprep.subr.mxu0 %v142
    %2019 = vmatpush1.msra.mxu0 %v141
    %2020 = vmatprep.subr.mxu0 %v146
    %2021 = vmatpush1.msra.mxu0 %v145
    %2022 = vmatprep.subr.mxu0 %v150
    %2023 = vmatpush1.msra.mxu0 %v149
    %2024 = vmatprep.subr.mxu0 %v154
    %2025 = vmatpush1.msra.mxu0 %v153
    %2026 = vmatprep.subr.mxu0 %v158
    %2027 = vmatpush1.msra.mxu0 %v157
    %2028 = vmatprep.subr.mxu0 %v162
    %2029 = vmatpush1.msra.mxu0 %v161
    %2030 = vmatprep.subr.mxu0 0.0
    %2031 = vmatpush1.msra.mxu0 0.0
    %2032 = vmatprep.subr.mxu0 0.0
    %2033 = vmatpush1.msra.mxu0 0.0
    %2034 = vmatprep.subr.mxu0 0.0
    %2035 = vmatpush1.msra.mxu0 0.0
    %2036 = vmatprep.subr.mxu0 0.0
    %2037 = vmatpush1.msra.mxu0 0.0
    %2038 = vmatprep.subr.mxu0 0.0
    %2039 = vmatpush1.msra.mxu0 0.0
    %2040 = vmatprep.subr.mxu0 0.0
    %2041 = vmatpush1.msra.mxu0 0.0
    %2042 = vmatprep.subr.mxu0 0.0
    %2043 = vmatpush1.msra.mxu0 0.0
    %2044 = vmatprep.subr.mxu0 0.0
    %2045 = vmatpush1.msra.mxu0 0.0
    %2046 = vmatprep.subr.mxu0 0.0
    %2047 = vmatpush1.msra.mxu0 0.0
    %2048 = vmatprep.subr.mxu0 0.0
    %2049 = vmatpush1.msra.mxu0 0.0
    %2050 = vmatprep.subr.mxu0 0.0
    %2051 = vmatpush1.msra.mxu0 0.0
    %2052 = vmatprep.subr.mxu0 0.0
    %2053 = vmatpush1.msra.mxu0 0.0
    %2054 = vmatprep.subr.mxu0 0.0
    %2055 = vmatpush1.msra.mxu0 0.0
    %2056 = vmatprep.subr.mxu0 0.0
    %2057 = vmatpush1.msra.mxu0 0.0
    %2058 = vmatprep.subr.mxu0 0.0
    %2059 = vmatpush1.msra.mxu0 0.0
    %2060 = vmatprep.subr.mxu0 0.0
    %2061 = vmatpush1.msra.mxu0 0.0
    %2062 = vmatprep.mubr.f32.mxu0 0.0
    %2063 = vmatmul.mubr.f32.gmra.mrb[0].mxu0 %v1926
    %v2064 = vpop.f32.mrb[0].mxu0
    %v2065 = vadd.f32 %v661, %v2064
    %v2066 = vpop.f32.mrb[0].mxu0
    %v2067 = vadd.f32 %v665, %v2066
    %2068 = vdwg.mxu0
    %2069 = vmatprep.subr.mxu0 %v228
    %2070 = vmatpush1.msra.mxu0 %v227
    %2071 = vmatprep.subr.mxu0 %v232
    %2072 = vmatpush1.msra.mxu0 %v231
    %2073 = vmatprep.subr.mxu0 %v236
    %2074 = vmatpush1.msra.mxu0 %v235
    %2075 = vmatprep.subr.mxu0 %v240
    %2076 = vmatpush1.msra.mxu0 %v239
    %2077 = vmatprep.subr.mxu0 %v244
    %2078 = vmatpush1.msra.mxu0 %v243
    %2079 = vmatprep.subr.mxu0 %v248
    %2080 = vmatpush1.msra.mxu0 %v247
    %2081 = vmatprep.subr.mxu0 %v252
    %2082 = vmatpush1.msra.mxu0 %v251
    %2083 = vmatprep.subr.mxu0 %v256
    %2084 = vmatpush1.msra.mxu0 %v255
    %2085 = vmatprep.subr.mxu0 %v260
    %2086 = vmatpush1.msra.mxu0 %v259
    %2087 = vmatprep.subr.mxu0 %v264
    %2088 = vmatpush1.msra.mxu0 %v263
    %2089 = vmatprep.subr.mxu0 %v268
    %2090 = vmatpush1.msra.mxu0 %v267
    %2091 = vmatprep.subr.mxu0 %v272
    %2092 = vmatpush1.msra.mxu0 %v271
    %2093 = vmatprep.subr.mxu0 %v276
    %2094 = vmatpush1.msra.mxu0 %v275
    %2095 = vmatprep.subr.mxu0 %v280
    %2096 = vmatpush1.msra.mxu0 %v279
    %2097 = vmatprep.subr.mxu0 %v284
    %2098 = vmatpush1.msra.mxu0 %v283
    %2099 = vmatprep.subr.mxu0 %v288
    %2100 = vmatpush1.msra.mxu0 %v287
    %2101 = vmatprep.subr.mxu0 0.0
    %2102 = vmatpush1.msra.mxu0 0.0
    %2103 = vmatprep.subr.mxu0 0.0
    %2104 = vmatpush1.msra.mxu0 0.0
    %2105 = vmatprep.subr.mxu0 0.0
    %2106 = vmatpush1.msra.mxu0 0.0
    %2107 = vmatprep.subr.mxu0 0.0
    %2108 = vmatpush1.msra.mxu0 0.0
    %2109 = vmatprep.subr.mxu0 0.0
    %2110 = vmatpush1.msra.mxu0 0.0
    %2111 = vmatprep.subr.mxu0 0.0
    %2112 = vmatpush1.msra.mxu0 0.0
    %2113 = vmatprep.subr.mxu0 0.0
    %2114 = vmatpush1.msra.mxu0 0.0
    %2115 = vmatprep.subr.mxu0 0.0
    %2116 = vmatpush1.msra.mxu0 0.0
    %2117 = vmatprep.subr.mxu0 0.0
    %2118 = vmatpush1.msra.mxu0 0.0
    %2119 = vmatprep.subr.mxu0 0.0
    %2120 = vmatpush1.msra.mxu0 0.0
    %2121 = vmatprep.subr.mxu0 0.0
    %2122 = vmatpush1.msra.mxu0 0.0
    %2123 = vmatprep.subr.mxu0 0.0
    %2124 = vmatpush1.msra.mxu0 0.0
    %2125 = vmatprep.subr.mxu0 0.0
    %2126 = vmatpush1.msra.mxu0 0.0
    %2127 = vmatprep.subr.mxu0 0.0
    %2128 = vmatpush1.msra.mxu0 0.0
    %2129 = vmatprep.subr.mxu0 0.0
    %2130 = vmatpush1.msra.mxu0 0.0
    %2131 = vmatprep.subr.mxu0 0.0
    %2132 = vmatpush1.msra.mxu0 0.0
    %2133 = vmatprep.mubr.f32.mxu0 0.0
    %2134 = vmatmul.mubr.f32.gmra.mrb[0].mxu0 %v1609
    %v2135 = vpop.f32.mrb[0].mxu0
    %v2136 = vadd.f32 0.0, %v2135
    %v2137 = vpop.f32.mrb[0].mxu0
    %v2138 = vadd.f32 0.0, %v2137
    %2139 = vdwg.mxu0
    %2140 = vmatprep.subr.mxu0 %v230
    %2141 = vmatpush1.msra.mxu0 %v229
    %2142 = vmatprep.subr.mxu0 %v234
    %2143 = vmatpush1.msra.mxu0 %v233
    %2144 = vmatprep.subr.mxu0 %v238
    %2145 = vmatpush1.msra.mxu0 %v237
    %2146 = vmatprep.subr.mxu0 %v242
    %2147 = vmatpush1.msra.mxu0 %v241
    %2148 = vmatprep.subr.mxu0 %v246
    %2149 = vmatpush1.msra.mxu0 %v245
    %2150 = vmatprep.subr.mxu0 %v250
    %2151 = vmatpush1.msra.mxu0 %v249
    %2152 = vmatprep.subr.mxu0 %v254
    %2153 = vmatpush1.msra.mxu0 %v253
    %2154 = vmatprep.subr.mxu0 %v258
    %2155 = vmatpush1.msra.mxu0 %v257
    %2156 = vmatprep.subr.mxu0 %v262
    %2157 = vmatpush1.msra.mxu0 %v261
    %2158 = vmatprep.subr.mxu0 %v266
    %2159 = vmatpush1.msra.mxu0 %v265
    %2160 = vmatprep.subr.mxu0 %v270
    %2161 = vmatpush1.msra.mxu0 %v269
    %2162 = vmatprep.subr.mxu0 %v274
    %2163 = vmatpush1.msra.mxu0 %v273
    %2164 = vmatprep.subr.mxu0 %v278
    %2165 = vmatpush1.msra.mxu0 %v277
    %2166 = vmatprep.subr.mxu0 %v282
    %2167 = vmatpush1.msra.mxu0 %v281
    %2168 = vmatprep.subr.mxu0 %v286
    %2169 = vmatpush1.msra.mxu0 %v285
    %2170 = vmatprep.subr.mxu0 %v290
    %2171 = vmatpush1.msra.mxu0 %v289
    %2172 = vmatprep.subr.mxu0 0.0
    %2173 = vmatpush1.msra.mxu0 0.0
    %2174 = vmatprep.subr.mxu0 0.0
    %2175 = vmatpush1.msra.mxu0 0.0
    %2176 = vmatprep.subr.mxu0 0.0
    %2177 = vmatpush1.msra.mxu0 0.0
    %2178 = vmatprep.subr.mxu0 0.0
    %2179 = vmatpush1.msra.mxu0 0.0
    %2180 = vmatprep.subr.mxu0 0.0
    %2181 = vmatpush1.msra.mxu0 0.0
    %2182 = vmatprep.subr.mxu0 0.0
    %2183 = vmatpush1.msra.mxu0 0.0
    %2184 = vmatprep.subr.mxu0 0.0
    %2185 = vmatpush1.msra.mxu0 0.0
    %2186 = vmatprep.subr.mxu0 0.0
    %2187 = vmatpush1.msra.mxu0 0.0
    %2188 = vmatprep.subr.mxu0 0.0
    %2189 = vmatpush1.msra.mxu0 0.0
    %2190 = vmatprep.subr.mxu0 0.0
    %2191 = vmatpush1.msra.mxu0 0.0
    %2192 = vmatprep.subr.mxu0 0.0
    %2193 = vmatpush1.msra.mxu0 0.0
    %2194 = vmatprep.subr.mxu0 0.0
    %2195 = vmatpush1.msra.mxu0 0.0
    %2196 = vmatprep.subr.mxu0 0.0
    %2197 = vmatpush1.msra.mxu0 0.0
    %2198 = vmatprep.subr.mxu0 0.0
    %2199 = vmatpush1.msra.mxu0 0.0
    %2200 = vmatprep.subr.mxu0 0.0
    %2201 = vmatpush1.msra.mxu0 0.0
    %2202 = vmatprep.subr.mxu0 0.0
    %2203 = vmatpush1.msra.mxu0 0.0
    %2204 = vmatprep.mubr.f32.mxu0 0.0
    %2205 = vmatmul.mubr.f32.gmra.mrb[0].mxu0 %v1609
    %v2206 = vpop.f32.mrb[0].mxu0
    %v2207 = vadd.f32 0.0, %v2206
    %v2208 = vpop.f32.mrb[0].mxu0
    %v2209 = vadd.f32 0.0, %v2208
    %2210 = vdwg.mxu0
    %v2211 = vadd.f32 %v1994, %v2136
    %v2212 = vadd.f32 %v1996, %v2138
    %v2213 = vadd.f32 %v2065, %v2207
    %v2214 = vadd.f32 %v2067, %v2209
    %v2215 = vxor.u32 %v2211, 2147483648
    %v2216 = vxor.u32 %v2212, 2147483648
    %v2217 = vxor.u32 %v2213, 2147483648
    %v2218 = vmul.f32 %v2215, 1.442695
    %v2219 = vpow.pop %v2218
    %v2220 = vmul.f32 %v2216, 1.442695
    %v2221 = vpow.pop %v2220
    %v2222 = vmul.f32 %v2217, 1.442695
    %v2223 = vpow.pop %v2222
    %v2224 = vadd.f32 %v2219, 1.0
    %v2225 = vadd.f32 %v2221, 1.0
    %v2226 = vadd.f32 %v2223, 1.0
    %v2227 = vrcp.pop %v2224
    %v2228 = vmul.f32 1.0, %v2227
    %v2229 = vrcp.pop %v2225
    %v2230 = vmul.f32 1.0, %v2229
    %v2231 = vrcp.pop %v2226
    %v2232 = vmul.f32 1.0, %v2231
    %v2233 = vtanh.pop %v2214
    %v2234 = vmul.f32 %v2230, %v1607
    %v2235 = vmul.f32 %v2228, %v2233
    %v2236 = vadd.f32 %v2234, %v2235
    %v2237 = vtanh.pop %v2236
    %v2238 = vmul.f32 %v2232, %v2237
    %v2239 = vrot.slane %v293, 3
    %v2240 = vrot.slane %v294, 2
    %v2241 = vsel %vm319, %v2240, %v2239
    %v2242 = vsel %vm321, %v2241, 0
    %2244 = vmatprep.subr.mxu0 %v92
    %2245 = vmatpush1.msra.mxu0 %v91
    %2246 = vmatprep.subr.mxu0 %v329
    %2247 = vmatpush1.msra.mxu0 %v326
    %2248 = vmatprep.subr.mxu0 0.0
    %2249 = vmatpush1.msra.mxu0 0.0
    %2250 = vmatprep.subr.mxu0 0.0
    %2251 = vmatpush1.msra.mxu0 0.0
    %2252 = vmatprep.subr.mxu0 0.0
    %2253 = vmatpush1.msra.mxu0 0.0
    %2254 = vmatprep.subr.mxu0 0.0
    %2255 = vmatpush1.msra.mxu0 0.0
    %2256 = vmatprep.subr.mxu0 0.0
    %2257 = vmatpush1.msra.mxu0 0.0
    %2258 = vmatprep.subr.mxu0 0.0
    %2259 = vmatpush1.msra.mxu0 0.0
    %2260 = vmatprep.subr.mxu0 0.0
    %2261 = vmatpush1.msra.mxu0 0.0
    %2262 = vmatprep.subr.mxu0 0.0
    %2263 = vmatpush1.msra.mxu0 0.0
    %2264 = vmatprep.subr.mxu0 0.0
    %2265 = vmatpush1.msra.mxu0 0.0
    %2266 = vmatprep.subr.mxu0 0.0
    %2267 = vmatpush1.msra.mxu0 0.0
    %2268 = vmatprep.subr.mxu0 0.0
    %2269 = vmatpush1.msra.mxu0 0.0
    %2270 = vmatprep.subr.mxu0 0.0
    %2271 = vmatpush1.msra.mxu0 0.0
    %2272 = vmatprep.subr.mxu0 0.0
    %2273 = vmatpush1.msra.mxu0 0.0
    %2274 = vmatprep.subr.mxu0 0.0
    %2275 = vmatpush1.msra.mxu0 0.0
    %2276 = vmatprep.subr.mxu0 0.0
    %2277 = vmatpush1.msra.mxu0 0.0
    %2278 = vmatprep.subr.mxu0 0.0
    %2279 = vmatpush1.msra.mxu0 0.0
    %2280 = vmatprep.subr.mxu0 0.0
    %2281 = vmatpush1.msra.mxu0 0.0
    %2282 = vmatprep.subr.mxu0 0.0
    %2283 = vmatpush1.msra.mxu0 0.0
    %2284 = vmatprep.subr.mxu0 0.0
    %2285 = vmatpush1.msra.mxu0 0.0
    %2286 = vmatprep.subr.mxu0 0.0
    %2287 = vmatpush1.msra.mxu0 0.0
    %2288 = vmatprep.subr.mxu0 0.0
    %2289 = vmatpush1.msra.mxu0 0.0
    %2290 = vmatprep.subr.mxu0 0.0
    %2291 = vmatpush1.msra.mxu0 0.0
    %2292 = vmatprep.subr.mxu0 0.0
    %2293 = vmatpush1.msra.mxu0 0.0
    %2294 = vmatprep.subr.mxu0 0.0
    %2295 = vmatpush1.msra.mxu0 0.0
    %2296 = vmatprep.subr.mxu0 0.0
    %2297 = vmatpush1.msra.mxu0 0.0
    %2298 = vmatprep.subr.mxu0 0.0
    %2299 = vmatpush1.msra.mxu0 0.0
    %2300 = vmatprep.subr.mxu0 0.0
    %2301 = vmatpush1.msra.mxu0 0.0
    %2302 = vmatprep.subr.mxu0 0.0
    %2303 = vmatpush1.msra.mxu0 0.0
    %2304 = vmatprep.subr.mxu0 0.0
    %2305 = vmatpush1.msra.mxu0 0.0
    %2306 = vmatprep.subr.mxu0 0.0
    %2307 = vmatpush1.msra.mxu0 0.0
    %2308 = vmatprep.mubr.f32.mxu0 0.0
    %2309 = vmatmul.mubr.f32.gmra.mrb[0].mxu0 %v2242
    %v2310 = vpop.f32.mrb[0].mxu0
    %v2311 = vadd.f32 %v299, %v2310
    %v2312 = vpop.f32.mrb[0].mxu0
    %v2313 = vadd.f32 %v303, %v2312
    %2314 = vdwg.mxu0
    %2315 = vmatprep.subr.mxu0 %v94
    %2316 = vmatpush1.msra.mxu0 %v93
    %2317 = vmatprep.subr.mxu0 %v335
    %2318 = vmatpush1.msra.mxu0 %v332
    %2319 = vmatprep.subr.mxu0 0.0
    %2320 = vmatpush1.msra.mxu0 0.0
    %2321 = vmatprep.subr.mxu0 0.0
    %2322 = vmatpush1.msra.mxu0 0.0
    %2323 = vmatprep.subr.mxu0 0.0
    %2324 = vmatpush1.msra.mxu0 0.0
    %2325 = vmatprep.subr.mxu0 0.0
    %2326 = vmatpush1.msra.mxu0 0.0
    %2327 = vmatprep.subr.mxu0 0.0
    %2328 = vmatpush1.msra.mxu0 0.0
    %2329 = vmatprep.subr.mxu0 0.0
    %2330 = vmatpush1.msra.mxu0 0.0
    %2331 = vmatprep.subr.mxu0 0.0
    %2332 = vmatpush1.msra.mxu0 0.0
    %2333 = vmatprep.subr.mxu0 0.0
    %2334 = vmatpush1.msra.mxu0 0.0
    %2335 = vmatprep.subr.mxu0 0.0
    %2336 = vmatpush1.msra.mxu0 0.0
    %2337 = vmatprep.subr.mxu0 0.0
    %2338 = vmatpush1.msra.mxu0 0.0
    %2339 = vmatprep.subr.mxu0 0.0
    %2340 = vmatpush1.msra.mxu0 0.0
    %2341 = vmatprep.subr.mxu0 0.0
    %2342 = vmatpush1.msra.mxu0 0.0
    %2343 = vmatprep.subr.mxu0 0.0
    %2344 = vmatpush1.msra.mxu0 0.0
    %2345 = vmatprep.subr.mxu0 0.0
    %2346 = vmatpush1.msra.mxu0 0.0
    %2347 = vmatprep.subr.mxu0 0.0
    %2348 = vmatpush1.msra.mxu0 0.0
    %2349 = vmatprep.subr.mxu0 0.0
    %2350 = vmatpush1.msra.mxu0 0.0
    %2351 = vmatprep.subr.mxu0 0.0
    %2352 = vmatpush1.msra.mxu0 0.0
    %2353 = vmatprep.subr.mxu0 0.0
    %2354 = vmatpush1.msra.mxu0 0.0
    %2355 = vmatprep.subr.mxu0 0.0
    %2356 = vmatpush1.msra.mxu0 0.0
    %2357 = vmatprep.subr.mxu0 0.0
    %2358 = vmatpush1.msra.mxu0 0.0
    %2359 = vmatprep.subr.mxu0 0.0
    %2360 = vmatpush1.msra.mxu0 0.0
    %2361 = vmatprep.subr.mxu0 0.0
    %2362 = vmatpush1.msra.mxu0 0.0
    %2363 = vmatprep.subr.mxu0 0.0
    %2364 = vmatpush1.msra.mxu0 0.0
    %2365 = vmatprep.subr.mxu0 0.0
    %2366 = vmatpush1.msra.mxu0 0.0
    %2367 = vmatprep.subr.mxu0 0.0
    %2368 = vmatpush1.msra.mxu0 0.0
    %2369 = vmatprep.subr.mxu0 0.0
    %2370 = vmatpush1.msra.mxu0 0.0
    %2371 = vmatprep.subr.mxu0 0.0
    %2372 = vmatpush1.msra.mxu0 0.0
    %2373 = vmatprep.subr.mxu0 0.0
    %2374 = vmatpush1.msra.mxu0 0.0
    %2375 = vmatprep.subr.mxu0 0.0
    %2376 = vmatpush1.msra.mxu0 0.0
    %2377 = vmatprep.subr.mxu0 0.0
    %2378 = vmatpush1.msra.mxu0 0.0
    %2379 = vmatprep.mubr.f32.mxu0 0.0
    %2380 = vmatmul.mubr.f32.gmra.mrb[0].mxu0 %v2242
    %v2381 = vpop.f32.mrb[0].mxu0
    %v2382 = vadd.f32 %v307, %v2381
    %v2383 = vpop.f32.mrb[0].mxu0
    %v2384 = vadd.f32 %v311, %v2383
    %2385 = vdwg.mxu0
    %2386 = vmatprep.subr.mxu0 %v164
    %2387 = vmatpush1.msra.mxu0 %v163
    %2388 = vmatprep.subr.mxu0 %v168
    %2389 = vmatpush1.msra.mxu0 %v167
    %2390 = vmatprep.subr.mxu0 %v172
    %2391 = vmatpush1.msra.mxu0 %v171
    %2392 = vmatprep.subr.mxu0 %v176
    %2393 = vmatpush1.msra.mxu0 %v175
    %2394 = vmatprep.subr.mxu0 %v180
    %2395 = vmatpush1.msra.mxu0 %v179
    %2396 = vmatprep.subr.mxu0 %v184
    %2397 = vmatpush1.msra.mxu0 %v183
    %2398 = vmatprep.subr.mxu0 %v188
    %2399 = vmatpush1.msra.mxu0 %v187
    %2400 = vmatprep.subr.mxu0 %v192
    %2401 = vmatpush1.msra.mxu0 %v191
    %2402 = vmatprep.subr.mxu0 %v196
    %2403 = vmatpush1.msra.mxu0 %v195
    %2404 = vmatprep.subr.mxu0 %v200
    %2405 = vmatpush1.msra.mxu0 %v199
    %2406 = vmatprep.subr.mxu0 %v204
    %2407 = vmatpush1.msra.mxu0 %v203
    %2408 = vmatprep.subr.mxu0 %v208
    %2409 = vmatpush1.msra.mxu0 %v207
    %2410 = vmatprep.subr.mxu0 %v212
    %2411 = vmatpush1.msra.mxu0 %v211
    %2412 = vmatprep.subr.mxu0 %v216
    %2413 = vmatpush1.msra.mxu0 %v215
    %2414 = vmatprep.subr.mxu0 %v220
    %2415 = vmatpush1.msra.mxu0 %v219
    %2416 = vmatprep.subr.mxu0 %v224
    %2417 = vmatpush1.msra.mxu0 %v223
    %2418 = vmatprep.subr.mxu0 0.0
    %2419 = vmatpush1.msra.mxu0 0.0
    %2420 = vmatprep.subr.mxu0 0.0
    %2421 = vmatpush1.msra.mxu0 0.0
    %2422 = vmatprep.subr.mxu0 0.0
    %2423 = vmatpush1.msra.mxu0 0.0
    %2424 = vmatprep.subr.mxu0 0.0
    %2425 = vmatpush1.msra.mxu0 0.0
    %2426 = vmatprep.subr.mxu0 0.0
    %2427 = vmatpush1.msra.mxu0 0.0
    %2428 = vmatprep.subr.mxu0 0.0
    %2429 = vmatpush1.msra.mxu0 0.0
    %2430 = vmatprep.subr.mxu0 0.0
    %2431 = vmatpush1.msra.mxu0 0.0
    %2432 = vmatprep.subr.mxu0 0.0
    %2433 = vmatpush1.msra.mxu0 0.0
    %2434 = vmatprep.subr.mxu0 0.0
    %2435 = vmatpush1.msra.mxu0 0.0
    %2436 = vmatprep.subr.mxu0 0.0
    %2437 = vmatpush1.msra.mxu0 0.0
    %2438 = vmatprep.subr.mxu0 0.0
    %2439 = vmatpush1.msra.mxu0 0.0
    %2440 = vmatprep.subr.mxu0 0.0
    %2441 = vmatpush1.msra.mxu0 0.0
    %2442 = vmatprep.subr.mxu0 0.0
    %2443 = vmatpush1.msra.mxu0 0.0
    %2444 = vmatprep.subr.mxu0 0.0
    %2445 = vmatpush1.msra.mxu0 0.0
    %2446 = vmatprep.subr.mxu0 0.0
    %2447 = vmatpush1.msra.mxu0 0.0
    %2448 = vmatprep.subr.mxu0 0.0
    %2449 = vmatpush1.msra.mxu0 0.0
    %2450 = vmatprep.mubr.f32.mxu0 0.0
    %2451 = vmatmul.mubr.f32.gmra.mrb[0].mxu0 %v1926
    %v2452 = vpop.f32.mrb[0].mxu0
    %v2453 = vadd.f32 0.0, %v2452
    %v2454 = vpop.f32.mrb[0].mxu0
    %v2455 = vadd.f32 0.0, %v2454
    %2456 = vdwg.mxu0
    %2457 = vmatprep.subr.mxu0 %v166
    %2458 = vmatpush1.msra.mxu0 %v165
    %2459 = vmatprep.subr.mxu0 %v170
    %2460 = vmatpush1.msra.mxu0 %v169
    %2461 = vmatprep.subr.mxu0 %v174
    %2462 = vmatpush1.msra.mxu0 %v173
    %2463 = vmatprep.subr.mxu0 %v178
    %2464 = vmatpush1.msra.mxu0 %v177
    %2465 = vmatprep.subr.mxu0 %v182
    %2466 = vmatpush1.msra.mxu0 %v181
    %2467 = vmatprep.subr.mxu0 %v186
    %2468 = vmatpush1.msra.mxu0 %v185
    %2469 = vmatprep.subr.mxu0 %v190
    %2470 = vmatpush1.msra.mxu0 %v189
    %2471 = vmatprep.subr.mxu0 %v194
    %2472 = vmatpush1.msra.mxu0 %v193
    %2473 = vmatprep.subr.mxu0 %v198
    %2474 = vmatpush1.msra.mxu0 %v197
    %2475 = vmatprep.subr.mxu0 %v202
    %2476 = vmatpush1.msra.mxu0 %v201
    %2477 = vmatprep.subr.mxu0 %v206
    %2478 = vmatpush1.msra.mxu0 %v205
    %2479 = vmatprep.subr.mxu0 %v210
    %2480 = vmatpush1.msra.mxu0 %v209
    %2481 = vmatprep.subr.mxu0 %v214
    %2482 = vmatpush1.msra.mxu0 %v213
    %2483 = vmatprep.subr.mxu0 %v218
    %2484 = vmatpush1.msra.mxu0 %v217
    %2485 = vmatprep.subr.mxu0 %v222
    %2486 = vmatpush1.msra.mxu0 %v221
    %2487 = vmatprep.subr.mxu0 %v226
    %2488 = vmatpush1.msra.mxu0 %v225
    %2489 = vmatprep.subr.mxu0 0.0
    %2490 = vmatpush1.msra.mxu0 0.0
    %2491 = vmatprep.subr.mxu0 0.0
    %2492 = vmatpush1.msra.mxu0 0.0
    %2493 = vmatprep.subr.mxu0 0.0
    %2494 = vmatpush1.msra.mxu0 0.0
    %2495 = vmatprep.subr.mxu0 0.0
    %2496 = vmatpush1.msra.mxu0 0.0
    %2497 = vmatprep.subr.mxu0 0.0
    %2498 = vmatpush1.msra.mxu0 0.0
    %2499 = vmatprep.subr.mxu0 0.0
    %2500 = vmatpush1.msra.mxu0 0.0
    %2501 = vmatprep.subr.mxu0 0.0
    %2502 = vmatpush1.msra.mxu0 0.0
    %2503 = vmatprep.subr.mxu0 0.0
    %2504 = vmatpush1.msra.mxu0 0.0
    %2505 = vmatprep.subr.mxu0 0.0
    %2506 = vmatpush1.msra.mxu0 0.0
    %2507 = vmatprep.subr.mxu0 0.0
    %2508 = vmatpush1.msra.mxu0 0.0
    %2509 = vmatprep.subr.mxu0 0.0
    %2510 = vmatpush1.msra.mxu0 0.0
    %2511 = vmatprep.subr.mxu0 0.0
    %2512 = vmatpush1.msra.mxu0 0.0
    %2513 = vmatprep.subr.mxu0 0.0
    %2514 = vmatpush1.msra.mxu0 0.0
    %2515 = vmatprep.subr.mxu0 0.0
    %2516 = vmatpush1.msra.mxu0 0.0
    %2517 = vmatprep.subr.mxu0 0.0
    %2518 = vmatpush1.msra.mxu0 0.0
    %2519 = vmatprep.subr.mxu0 0.0
    %2520 = vmatpush1.msra.mxu0 0.0
    %2521 = vmatprep.mubr.f32.mxu0 0.0
    %2522 = vmatmul.mubr.f32.gmra.mrb[0].mxu0 %v1926
    %v2523 = vpop.f32.mrb[0].mxu0
    %v2524 = vadd.f32 0.0, %v2523
    %v2525 = vpop.f32.mrb[0].mxu0
    %v2526 = vadd.f32 0.0, %v2525
    %2527 = vdwg.mxu0
    %v2528 = vadd.f32 %v2311, %v2453
    %v2529 = vadd.f32 %v2313, %v2455
    %v2530 = vadd.f32 %v2382, %v2524
    %v2531 = vadd.f32 %v2384, %v2526
    %v2532 = vxor.u32 %v2528, 2147483648
    %v2533 = vxor.u32 %v2529, 2147483648
    %v2534 = vxor.u32 %v2530, 2147483648
    %v2535 = vmul.f32 %v2532, 1.442695
    %v2536 = vpow.pop %v2535
    %v2537 = vmul.f32 %v2533, 1.442695
    %v2538 = vpow.pop %v2537
    %v2539 = vmul.f32 %v2534, 1.442695
    %v2540 = vpow.pop %v2539
    %v2541 = vadd.f32 %v2536, 1.0
    %v2542 = vadd.f32 %v2538, 1.0
    %v2543 = vadd.f32 %v2540, 1.0
    %v2544 = vrcp.pop %v2541
    %v2545 = vmul.f32 1.0, %v2544
    %v2546 = vrcp.pop %v2542
    %v2547 = vmul.f32 1.0, %v2546
    %v2548 = vrcp.pop %v2543
    %v2549 = vmul.f32 1.0, %v2548
    %v2550 = vtanh.pop %v2531
    %v2551 = vmul.f32 %v2547, %v1924
    %v2552 = vmul.f32 %v2545, %v2550
    %v2553 = vadd.f32 %v2551, %v2552
    %v2554 = vtanh.pop %v2553
    %v2555 = vmul.f32 %v2549, %v2554
    %2556 = vmatprep.subr.mxu0 %v100
    %2557 = vmatpush1.msra.mxu0 %v99
    %2558 = vmatprep.subr.mxu0 %v104
    %2559 = vmatpush1.msra.mxu0 %v103
    %2560 = vmatprep.subr.mxu0 %v108
    %2561 = vmatpush1.msra.mxu0 %v107
    %2562 = vmatprep.subr.mxu0 %v112
    %2563 = vmatpush1.msra.mxu0 %v111
    %2564 = vmatprep.subr.mxu0 %v116
    %2565 = vmatpush1.msra.mxu0 %v115
    %2566 = vmatprep.subr.mxu0 %v120
    %2567 = vmatpush1.msra.mxu0 %v119
    %2568 = vmatprep.subr.mxu0 %v124
    %2569 = vmatpush1.msra.mxu0 %v123
    %2570 = vmatprep.subr.mxu0 %v128
    %2571 = vmatpush1.msra.mxu0 %v127
    %2572 = vmatprep.subr.mxu0 %v132
    %2573 = vmatpush1.msra.mxu0 %v131
    %2574 = vmatprep.subr.mxu0 %v136
    %2575 = vmatpush1.msra.mxu0 %v135
    %2576 = vmatprep.subr.mxu0 %v140
    %2577 = vmatpush1.msra.mxu0 %v139
    %2578 = vmatprep.subr.mxu0 %v144
    %2579 = vmatpush1.msra.mxu0 %v143
    %2580 = vmatprep.subr.mxu0 %v148
    %2581 = vmatpush1.msra.mxu0 %v147
    %2582 = vmatprep.subr.mxu0 %v152
    %2583 = vmatpush1.msra.mxu0 %v151
    %2584 = vmatprep.subr.mxu0 %v156
    %2585 = vmatpush1.msra.mxu0 %v155
    %2586 = vmatprep.subr.mxu0 %v160
    %2587 = vmatpush1.msra.mxu0 %v159
    %2588 = vmatprep.subr.mxu0 0.0
    %2589 = vmatpush1.msra.mxu0 0.0
    %2590 = vmatprep.subr.mxu0 0.0
    %2591 = vmatpush1.msra.mxu0 0.0
    %2592 = vmatprep.subr.mxu0 0.0
    %2593 = vmatpush1.msra.mxu0 0.0
    %2594 = vmatprep.subr.mxu0 0.0
    %2595 = vmatpush1.msra.mxu0 0.0
    %2596 = vmatprep.subr.mxu0 0.0
    %2597 = vmatpush1.msra.mxu0 0.0
    %2598 = vmatprep.subr.mxu0 0.0
    %2599 = vmatpush1.msra.mxu0 0.0
    %2600 = vmatprep.subr.mxu0 0.0
    %2601 = vmatpush1.msra.mxu0 0.0
    %2602 = vmatprep.subr.mxu0 0.0
    %2603 = vmatpush1.msra.mxu0 0.0
    %2604 = vmatprep.subr.mxu0 0.0
    %2605 = vmatpush1.msra.mxu0 0.0
    %2606 = vmatprep.subr.mxu0 0.0
    %2607 = vmatpush1.msra.mxu0 0.0
    %2608 = vmatprep.subr.mxu0 0.0
    %2609 = vmatpush1.msra.mxu0 0.0
    %2610 = vmatprep.subr.mxu0 0.0
    %2611 = vmatpush1.msra.mxu0 0.0
    %2612 = vmatprep.subr.mxu0 0.0
    %2613 = vmatpush1.msra.mxu0 0.0
    %2614 = vmatprep.subr.mxu0 0.0
    %2615 = vmatpush1.msra.mxu0 0.0
    %2616 = vmatprep.subr.mxu0 0.0
    %2617 = vmatpush1.msra.mxu0 0.0
    %2618 = vmatprep.subr.mxu0 0.0
    %2619 = vmatpush1.msra.mxu0 0.0
    %2620 = vmatprep.mubr.f32.mxu0 0.0
    %2621 = vmatmul.mubr.f32.gmra.mrb[0].mxu0 %v2555
    %v2622 = vpop.f32.mrb[0].mxu0
    %v2623 = vadd.f32 %v653, %v2622
    %v2624 = vpop.f32.mrb[0].mxu0
    %v2625 = vadd.f32 %v657, %v2624
    %2626 = vdwg.mxu0
    %2627 = vmatprep.subr.mxu0 %v102
    %2628 = vmatpush1.msra.mxu0 %v101
    %2629 = vmatprep.subr.mxu0 %v106
    %2630 = vmatpush1.msra.mxu0 %v105
    %2631 = vmatprep.subr.mxu0 %v110
    %2632 = vmatpush1.msra.mxu0 %v109
    %2633 = vmatprep.subr.mxu0 %v114
    %2634 = vmatpush1.msra.mxu0 %v113
    %2635 = vmatprep.subr.mxu0 %v118
    %2636 = vmatpush1.msra.mxu0 %v117
    %2637 = vmatprep.subr.mxu0 %v122
    %2638 = vmatpush1.msra.mxu0 %v121
    %2639 = vmatprep.subr.mxu0 %v126
    %2640 = vmatpush1.msra.mxu0 %v125
    %2641 = vmatprep.subr.mxu0 %v130
    %2642 = vmatpush1.msra.mxu0 %v129
    %2643 = vmatprep.subr.mxu0 %v134
    %2644 = vmatpush1.msra.mxu0 %v133
    %2645 = vmatprep.subr.mxu0 %v138
    %2646 = vmatpush1.msra.mxu0 %v137
    %2647 = vmatprep.subr.mxu0 %v142
    %2648 = vmatpush1.msra.mxu0 %v141
    %2649 = vmatprep.subr.mxu0 %v146
    %2650 = vmatpush1.msra.mxu0 %v145
    %2651 = vmatprep.subr.mxu0 %v150
    %2652 = vmatpush1.msra.mxu0 %v149
    %2653 = vmatprep.subr.mxu0 %v154
    %2654 = vmatpush1.msra.mxu0 %v153
    %2655 = vmatprep.subr.mxu0 %v158
    %2656 = vmatpush1.msra.mxu0 %v157
    %2657 = vmatprep.subr.mxu0 %v162
    %2658 = vmatpush1.msra.mxu0 %v161
    %2659 = vmatprep.subr.mxu0 0.0
    %2660 = vmatpush1.msra.mxu0 0.0
    %2661 = vmatprep.subr.mxu0 0.0
    %2662 = vmatpush1.msra.mxu0 0.0
    %2663 = vmatprep.subr.mxu0 0.0
    %2664 = vmatpush1.msra.mxu0 0.0
    %2665 = vmatprep.subr.mxu0 0.0
    %2666 = vmatpush1.msra.mxu0 0.0
    %2667 = vmatprep.subr.mxu0 0.0
    %2668 = vmatpush1.msra.mxu0 0.0
    %2669 = vmatprep.subr.mxu0 0.0
    %2670 = vmatpush1.msra.mxu0 0.0
    %2671 = vmatprep.subr.mxu0 0.0
    %2672 = vmatpush1.msra.mxu0 0.0
    %2673 = vmatprep.subr.mxu0 0.0
    %2674 = vmatpush1.msra.mxu0 0.0
    %2675 = vmatprep.subr.mxu0 0.0
    %2676 = vmatpush1.msra.mxu0 0.0
    %2677 = vmatprep.subr.mxu0 0.0
    %2678 = vmatpush1.msra.mxu0 0.0
    %2679 = vmatprep.subr.mxu0 0.0
    %2680 = vmatpush1.msra.mxu0 0.0
    %2681 = vmatprep.subr.mxu0 0.0
    %2682 = vmatpush1.msra.mxu0 0.0
    %2683 = vmatprep.subr.mxu0 0.0
    %2684 = vmatpush1.msra.mxu0 0.0
    %2685 = vmatprep.subr.mxu0 0.0
    %2686 = vmatpush1.msra.mxu0 0.0
    %2687 = vmatprep.subr.mxu0 0.0
    %2688 = vmatpush1.msra.mxu0 0.0
    %2689 = vmatprep.subr.mxu0 0.0
    %2690 = vmatpush1.msra.mxu0 0.0
    %2691 = vmatprep.mubr.f32.mxu0 0.0
    %2692 = vmatmul.mubr.f32.gmra.mrb[0].mxu0 %v2555
    %v2693 = vpop.f32.mrb[0].mxu0
    %v2694 = vadd.f32 %v661, %v2693
    %v2695 = vpop.f32.mrb[0].mxu0
    %v2696 = vadd.f32 %v665, %v2695
    %2697 = vdwg.mxu0
    %2698 = vmatprep.subr.mxu0 %v228
    %2699 = vmatpush1.msra.mxu0 %v227
    %2700 = vmatprep.subr.mxu0 %v232
    %2701 = vmatpush1.msra.mxu0 %v231
    %2702 = vmatprep.subr.mxu0 %v236
    %2703 = vmatpush1.msra.mxu0 %v235
    %2704 = vmatprep.subr.mxu0 %v240
    %2705 = vmatpush1.msra.mxu0 %v239
    %2706 = vmatprep.subr.mxu0 %v244
    %2707 = vmatpush1.msra.mxu0 %v243
    %2708 = vmatprep.subr.mxu0 %v248
    %2709 = vmatpush1.msra.mxu0 %v247
    %2710 = vmatprep.subr.mxu0 %v252
    %2711 = vmatpush1.msra.mxu0 %v251
    %2712 = vmatprep.subr.mxu0 %v256
    %2713 = vmatpush1.msra.mxu0 %v255
    %2714 = vmatprep.subr.mxu0 %v260
    %2715 = vmatpush1.msra.mxu0 %v259
    %2716 = vmatprep.subr.mxu0 %v264
    %2717 = vmatpush1.msra.mxu0 %v263
    %2718 = vmatprep.subr.mxu0 %v268
    %2719 = vmatpush1.msra.mxu0 %v267
    %2720 = vmatprep.subr.mxu0 %v272
    %2721 = vmatpush1.msra.mxu0 %v271
    %2722 = vmatprep.subr.mxu0 %v276
    %2723 = vmatpush1.msra.mxu0 %v275
    %2724 = vmatprep.subr.mxu0 %v280
    %2725 = vmatpush1.msra.mxu0 %v279
    %2726 = vmatprep.subr.mxu0 %v284
    %2727 = vmatpush1.msra.mxu0 %v283
    %2728 = vmatprep.subr.mxu0 %v288
    %2729 = vmatpush1.msra.mxu0 %v287
    %2730 = vmatprep.subr.mxu0 0.0
    %2731 = vmatpush1.msra.mxu0 0.0
    %2732 = vmatprep.subr.mxu0 0.0
    %2733 = vmatpush1.msra.mxu0 0.0
    %2734 = vmatprep.subr.mxu0 0.0
    %2735 = vmatpush1.msra.mxu0 0.0
    %2736 = vmatprep.subr.mxu0 0.0
    %2737 = vmatpush1.msra.mxu0 0.0
    %2738 = vmatprep.subr.mxu0 0.0
    %2739 = vmatpush1.msra.mxu0 0.0
    %2740 = vmatprep.subr.mxu0 0.0
    %2741 = vmatpush1.msra.mxu0 0.0
    %2742 = vmatprep.subr.mxu0 0.0
    %2743 = vmatpush1.msra.mxu0 0.0
    %2744 = vmatprep.subr.mxu0 0.0
    %2745 = vmatpush1.msra.mxu0 0.0
    %2746 = vmatprep.subr.mxu0 0.0
    %2747 = vmatpush1.msra.mxu0 0.0
    %2748 = vmatprep.subr.mxu0 0.0
    %2749 = vmatpush1.msra.mxu0 0.0
    %2750 = vmatprep.subr.mxu0 0.0
    %2751 = vmatpush1.msra.mxu0 0.0
    %2752 = vmatprep.subr.mxu0 0.0
    %2753 = vmatpush1.msra.mxu0 0.0
    %2754 = vmatprep.subr.mxu0 0.0
    %2755 = vmatpush1.msra.mxu0 0.0
    %2756 = vmatprep.subr.mxu0 0.0
    %2757 = vmatpush1.msra.mxu0 0.0
    %2758 = vmatprep.subr.mxu0 0.0
    %2759 = vmatpush1.msra.mxu0 0.0
    %2760 = vmatprep.subr.mxu0 0.0
    %2761 = vmatpush1.msra.mxu0 0.0
    %2762 = vmatprep.mubr.f32.mxu0 0.0
    %2763 = vmatmul.mubr.f32.gmra.mrb[0].mxu0 %v2238
    %v2764 = vpop.f32.mrb[0].mxu0
    %v2765 = vadd.f32 0.0, %v2764
    %v2766 = vpop.f32.mrb[0].mxu0
    %v2767 = vadd.f32 0.0, %v2766
    %2768 = vdwg.mxu0
    %2769 = vmatprep.subr.mxu0 %v230
    %2770 = vmatpush1.msra.mxu0 %v229
    %2771 = vmatprep.subr.mxu0 %v234
    %2772 = vmatpush1.msra.mxu0 %v233
    %2773 = vmatprep.subr.mxu0 %v238
    %2774 = vmatpush1.msra.mxu0 %v237
    %2775 = vmatprep.subr.mxu0 %v242
    %2776 = vmatpush1.msra.mxu0 %v241
    %2777 = vmatprep.subr.mxu0 %v246
    %2778 = vmatpush1.msra.mxu0 %v245
    %2779 = vmatprep.subr.mxu0 %v250
    %2780 = vmatpush1.msra.mxu0 %v249
    %2781 = vmatprep.subr.mxu0 %v254
    %2782 = vmatpush1.msra.mxu0 %v253
    %2783 = vmatprep.subr.mxu0 %v258
    %2784 = vmatpush1.msra.mxu0 %v257
    %2785 = vmatprep.subr.mxu0 %v262
    %2786 = vmatpush1.msra.mxu0 %v261
    %2787 = vmatprep.subr.mxu0 %v266
    %2788 = vmatpush1.msra.mxu0 %v265
    %2789 = vmatprep.subr.mxu0 %v270
    %2790 = vmatpush1.msra.mxu0 %v269
    %2791 = vmatprep.subr.mxu0 %v274
    %2792 = vmatpush1.msra.mxu0 %v273
    %2793 = vmatprep.subr.mxu0 %v278
    %2794 = vmatpush1.msra.mxu0 %v277
    %2795 = vmatprep.subr.mxu0 %v282
    %2796 = vmatpush1.msra.mxu0 %v281
    %2797 = vmatprep.subr.mxu0 %v286
    %2798 = vmatpush1.msra.mxu0 %v285
    %2799 = vmatprep.subr.mxu0 %v290
    %2800 = vmatpush1.msra.mxu0 %v289
    %2801 = vmatprep.subr.mxu0 0.0
    %2802 = vmatpush1.msra.mxu0 0.0
    %2803 = vmatprep.subr.mxu0 0.0
    %2804 = vmatpush1.msra.mxu0 0.0
    %2805 = vmatprep.subr.mxu0 0.0
    %2806 = vmatpush1.msra.mxu0 0.0
    %2807 = vmatprep.subr.mxu0 0.0
    %2808 = vmatpush1.msra.mxu0 0.0
    %2809 = vmatprep.subr.mxu0 0.0
    %2810 = vmatpush1.msra.mxu0 0.0
    %2811 = vmatprep.subr.mxu0 0.0
    %2812 = vmatpush1.msra.mxu0 0.0
    %2813 = vmatprep.subr.mxu0 0.0
    %2814 = vmatpush1.msra.mxu0 0.0
    %2815 = vmatprep.subr.mxu0 0.0
    %2816 = vmatpush1.msra.mxu0 0.0
    %2817 = vmatprep.subr.mxu0 0.0
    %2818 = vmatpush1.msra.mxu0 0.0
    %2819 = vmatprep.subr.mxu0 0.0
    %2820 = vmatpush1.msra.mxu0 0.0
    %2821 = vmatprep.subr.mxu0 0.0
    %2822 = vmatpush1.msra.mxu0 0.0
    %2823 = vmatprep.subr.mxu0 0.0
    %2824 = vmatpush1.msra.mxu0 0.0
    %2825 = vmatprep.subr.mxu0 0.0
    %2826 = vmatpush1.msra.mxu0 0.0
    %2827 = vmatprep.subr.mxu0 0.0
    %2828 = vmatpush1.msra.mxu0 0.0
    %2829 = vmatprep.subr.mxu0 0.0
    %2830 = vmatpush1.msra.mxu0 0.0
    %2831 = vmatprep.subr.mxu0 0.0
    %2832 = vmatpush1.msra.mxu0 0.0
    %2833 = vmatprep.mubr.f32.mxu0 0.0
    %2834 = vmatmul.mubr.f32.gmra.mrb[0].mxu0 %v2238
    %v2835 = vpop.f32.mrb[0].mxu0
    %v2836 = vadd.f32 0.0, %v2835
    %v2837 = vpop.f32.mrb[0].mxu0
    %v2838 = vadd.f32 0.0, %v2837
    %2839 = vdwg.mxu0
    %v2840 = vadd.f32 %v2623, %v2765
    %v2841 = vadd.f32 %v2625, %v2767
    %v2842 = vadd.f32 %v2694, %v2836
    %v2843 = vadd.f32 %v2696, %v2838
    %v2844 = vxor.u32 %v2840, 2147483648
    %v2845 = vxor.u32 %v2841, 2147483648
    %v2846 = vxor.u32 %v2842, 2147483648
    %v2847 = vmul.f32 %v2844, 1.442695
    %v2848 = vpow.pop %v2847
    %v2849 = vmul.f32 %v2845, 1.442695
    %v2850 = vpow.pop %v2849
    %v2851 = vmul.f32 %v2846, 1.442695
    %v2852 = vpow.pop %v2851
    %v2853 = vadd.f32 %v2848, 1.0
    %v2854 = vadd.f32 %v2850, 1.0
    %v2855 = vadd.f32 %v2852, 1.0
    %v2856 = vrcp.pop %v2853
    %v2857 = vmul.f32 1.0, %v2856
    %v2858 = vrcp.pop %v2854
    %v2859 = vmul.f32 1.0, %v2858
    %v2860 = vrcp.pop %v2855
    %v2861 = vmul.f32 1.0, %v2860
    %v2862 = vtanh.pop %v2843
    %v2863 = vmul.f32 %v2859, %v2236
    %v2864 = vmul.f32 %v2857, %v2862
    %v2865 = vadd.f32 %v2863, %v2864
    %v2866 = vtanh.pop %v2865
    %v2867 = vmul.f32 %v2861, %v2866
    %v2868 = vrot.slane %v293, 4
    %v2869 = vrot.slane %v294, 3
    %v2870 = vsel %vm319, %v2869, %v2868
    %v2871 = vsel %vm321, %v2870, 0
    %2873 = vmatprep.subr.mxu0 %v92
    %2874 = vmatpush1.msra.mxu0 %v91
    %2875 = vmatprep.subr.mxu0 %v329
    %2876 = vmatpush1.msra.mxu0 %v326
    %2877 = vmatprep.subr.mxu0 0.0
    %2878 = vmatpush1.msra.mxu0 0.0
    %2879 = vmatprep.subr.mxu0 0.0
    %2880 = vmatpush1.msra.mxu0 0.0
    %2881 = vmatprep.subr.mxu0 0.0
    %2882 = vmatpush1.msra.mxu0 0.0
    %2883 = vmatprep.subr.mxu0 0.0
    %2884 = vmatpush1.msra.mxu0 0.0
    %2885 = vmatprep.subr.mxu0 0.0
    %2886 = vmatpush1.msra.mxu0 0.0
    %2887 = vmatprep.subr.mxu0 0.0
    %2888 = vmatpush1.msra.mxu0 0.0
    %2889 = vmatprep.subr.mxu0 0.0
    %2890 = vmatpush1.msra.mxu0 0.0
    %2891 = vmatprep.subr.mxu0 0.0
    %2892 = vmatpush1.msra.mxu0 0.0
    %2893 = vmatprep.subr.mxu0 0.0
    %2894 = vmatpush1.msra.mxu0 0.0
    %2895 = vmatprep.subr.mxu0 0.0
    %2896 = vmatpush1.msra.mxu0 0.0
    %2897 = vmatprep.subr.mxu0 0.0
    %2898 = vmatpush1.msra.mxu0 0.0
    %2899 = vmatprep.subr.mxu0 0.0
    %2900 = vmatpush1.msra.mxu0 0.0
    %2901 = vmatprep.subr.mxu0 0.0
    %2902 = vmatpush1.msra.mxu0 0.0
    %2903 = vmatprep.subr.mxu0 0.0
    %2904 = vmatpush1.msra.mxu0 0.0
    %2905 = vmatprep.subr.mxu0 0.0
    %2906 = vmatpush1.msra.mxu0 0.0
    %2907 = vmatprep.subr.mxu0 0.0
    %2908 = vmatpush1.msra.mxu0 0.0
    %2909 = vmatprep.subr.mxu0 0.0
    %2910 = vmatpush1.msra.mxu0 0.0
    %2911 = vmatprep.subr.mxu0 0.0
    %2912 = vmatpush1.msra.mxu0 0.0
    %2913 = vmatprep.subr.mxu0 0.0
    %2914 = vmatpush1.msra.mxu0 0.0
    %2915 = vmatprep.subr.mxu0 0.0
    %2916 = vmatpush1.msra.mxu0 0.0
    %2917 = vmatprep.subr.mxu0 0.0
    %2918 = vmatpush1.msra.mxu0 0.0
    %2919 = vmatprep.subr.mxu0 0.0
    %2920 = vmatpush1.msra.mxu0 0.0
    %2921 = vmatprep.subr.mxu0 0.0
    %2922 = vmatpush1.msra.mxu0 0.0
    %2923 = vmatprep.subr.mxu0 0.0
    %2924 = vmatpush1.msra.mxu0 0.0
    %2925 = vmatprep.subr.mxu0 0.0
    %2926 = vmatpush1.msra.mxu0 0.0
    %2927 = vmatprep.subr.mxu0 0.0
    %2928 = vmatpush1.msra.mxu0 0.0
    %2929 = vmatprep.subr.mxu0 0.0
    %2930 = vmatpush1.msra.mxu0 0.0
    %2931 = vmatprep.subr.mxu0 0.0
    %2932 = vmatpush1.msra.mxu0 0.0
    %2933 = vmatprep.subr.mxu0 0.0
    %2934 = vmatpush1.msra.mxu0 0.0
    %2935 = vmatprep.subr.mxu0 0.0
    %2936 = vmatpush1.msra.mxu0 0.0
    %2937 = vmatprep.mubr.f32.mxu0 0.0
    %2938 = vmatmul.mubr.f32.gmra.mrb[0].mxu0 %v2871
    %v2939 = vpop.f32.mrb[0].mxu0
    %v2940 = vadd.f32 %v299, %v2939
    %v2941 = vpop.f32.mrb[0].mxu0
    %v2942 = vadd.f32 %v303, %v2941
    %2943 = vdwg.mxu0
    %2944 = vmatprep.subr.mxu0 %v94
    %2945 = vmatpush1.msra.mxu0 %v93
    %2946 = vmatprep.subr.mxu0 %v335
    %2947 = vmatpush1.msra.mxu0 %v332
    %2948 = vmatprep.subr.mxu0 0.0
    %2949 = vmatpush1.msra.mxu0 0.0
    %2950 = vmatprep.subr.mxu0 0.0
    %2951 = vmatpush1.msra.mxu0 0.0
    %2952 = vmatprep.subr.mxu0 0.0
    %2953 = vmatpush1.msra.mxu0 0.0
    %2954 = vmatprep.subr.mxu0 0.0
    %2955 = vmatpush1.msra.mxu0 0.0
    %2956 = vmatprep.subr.mxu0 0.0
    %2957 = vmatpush1.msra.mxu0 0.0
    %2958 = vmatprep.subr.mxu0 0.0
    %2959 = vmatpush1.msra.mxu0 0.0
    %2960 = vmatprep.subr.mxu0 0.0
    %2961 = vmatpush1.msra.mxu0 0.0
    %2962 = vmatprep.subr.mxu0 0.0
    %2963 = vmatpush1.msra.mxu0 0.0
    %2964 = vmatprep.subr.mxu0 0.0
    %2965 = vmatpush1.msra.mxu0 0.0
    %2966 = vmatprep.subr.mxu0 0.0
    %2967 = vmatpush1.msra.mxu0 0.0
    %2968 = vmatprep.subr.mxu0 0.0
    %2969 = vmatpush1.msra.mxu0 0.0
    %2970 = vmatprep.subr.mxu0 0.0
    %2971 = vmatpush1.msra.mxu0 0.0
    %2972 = vmatprep.subr.mxu0 0.0
    %2973 = vmatpush1.msra.mxu0 0.0
    %2974 = vmatprep.subr.mxu0 0.0
    %2975 = vmatpush1.msra.mxu0 0.0
    %2976 = vmatprep.subr.mxu0 0.0
    %2977 = vmatpush1.msra.mxu0 0.0
    %2978 = vmatprep.subr.mxu0 0.0
    %2979 = vmatpush1.msra.mxu0 0.0
    %2980 = vmatprep.subr.mxu0 0.0
    %2981 = vmatpush1.msra.mxu0 0.0
    %2982 = vmatprep.subr.mxu0 0.0
    %2983 = vmatpush1.msra.mxu0 0.0
    %2984 = vmatprep.subr.mxu0 0.0
    %2985 = vmatpush1.msra.mxu0 0.0
    %2986 = vmatprep.subr.mxu0 0.0
    %2987 = vmatpush1.msra.mxu0 0.0
    %2988 = vmatprep.subr.mxu0 0.0
    %2989 = vmatpush1.msra.mxu0 0.0
    %2990 = vmatprep.subr.mxu0 0.0
    %2991 = vmatpush1.msra.mxu0 0.0
    %2992 = vmatprep.subr.mxu0 0.0
    %2993 = vmatpush1.msra.mxu0 0.0
    %2994 = vmatprep.subr.mxu0 0.0
    %2995 = vmatpush1.msra.mxu0 0.0
    %2996 = vmatprep.subr.mxu0 0.0
    %2997 = vmatpush1.msra.mxu0 0.0
    %2998 = vmatprep.subr.mxu0 0.0
    %2999 = vmatpush1.msra.mxu0 0.0
    %3000 = vmatprep.subr.mxu0 0.0
    %3001 = vmatpush1.msra.mxu0 0.0
    %3002 = vmatprep.subr.mxu0 0.0
    %3003 = vmatpush1.msra.mxu0 0.0
    %3004 = vmatprep.subr.mxu0 0.0
    %3005 = vmatpush1.msra.mxu0 0.0
    %3006 = vmatprep.subr.mxu0 0.0
    %3007 = vmatpush1.msra.mxu0 0.0
    %3008 = vmatprep.mubr.f32.mxu0 0.0
    %3009 = vmatmul.mubr.f32.gmra.mrb[0].mxu0 %v2871
    %v3010 = vpop.f32.mrb[0].mxu0
    %v3011 = vadd.f32 %v307, %v3010
    %v3012 = vpop.f32.mrb[0].mxu0
    %v3013 = vadd.f32 %v311, %v3012
    %3014 = vdwg.mxu0
    %3015 = vmatprep.subr.mxu0 %v164
    %3016 = vmatpush1.msra.mxu0 %v163
    %3017 = vmatprep.subr.mxu0 %v168
    %3018 = vmatpush1.msra.mxu0 %v167
    %3019 = vmatprep.subr.mxu0 %v172
    %3020 = vmatpush1.msra.mxu0 %v171
    %3021 = vmatprep.subr.mxu0 %v176
    %3022 = vmatpush1.msra.mxu0 %v175
    %3023 = vmatprep.subr.mxu0 %v180
    %3024 = vmatpush1.msra.mxu0 %v179
    %3025 = vmatprep.subr.mxu0 %v184
    %3026 = vmatpush1.msra.mxu0 %v183
    %3027 = vmatprep.subr.mxu0 %v188
    %3028 = vmatpush1.msra.mxu0 %v187
    %3029 = vmatprep.subr.mxu0 %v192
    %3030 = vmatpush1.msra.mxu0 %v191
    %3031 = vmatprep.subr.mxu0 %v196
    %3032 = vmatpush1.msra.mxu0 %v195
    %3033 = vmatprep.subr.mxu0 %v200
    %3034 = vmatpush1.msra.mxu0 %v199
    %3035 = vmatprep.subr.mxu0 %v204
    %3036 = vmatpush1.msra.mxu0 %v203
    %3037 = vmatprep.subr.mxu0 %v208
    %3038 = vmatpush1.msra.mxu0 %v207
    %3039 = vmatprep.subr.mxu0 %v212
    %3040 = vmatpush1.msra.mxu0 %v211
    %3041 = vmatprep.subr.mxu0 %v216
    %3042 = vmatpush1.msra.mxu0 %v215
    %3043 = vmatprep.subr.mxu0 %v220
    %3044 = vmatpush1.msra.mxu0 %v219
    %3045 = vmatprep.subr.mxu0 %v224
    %3046 = vmatpush1.msra.mxu0 %v223
    %3047 = vmatprep.subr.mxu0 0.0
    %3048 = vmatpush1.msra.mxu0 0.0
    %3049 = vmatprep.subr.mxu0 0.0
    %3050 = vmatpush1.msra.mxu0 0.0
    %3051 = vmatprep.subr.mxu0 0.0
    %3052 = vmatpush1.msra.mxu0 0.0
    %3053 = vmatprep.subr.mxu0 0.0
    %3054 = vmatpush1.msra.mxu0 0.0
    %3055 = vmatprep.subr.mxu0 0.0
    %3056 = vmatpush1.msra.mxu0 0.0
    %3057 = vmatprep.subr.mxu0 0.0
    %3058 = vmatpush1.msra.mxu0 0.0
    %3059 = vmatprep.subr.mxu0 0.0
    %3060 = vmatpush1.msra.mxu0 0.0
    %3061 = vmatprep.subr.mxu0 0.0
    %3062 = vmatpush1.msra.mxu0 0.0
    %3063 = vmatprep.subr.mxu0 0.0
    %3064 = vmatpush1.msra.mxu0 0.0
    %3065 = vmatprep.subr.mxu0 0.0
    %3066 = vmatpush1.msra.mxu0 0.0
    %3067 = vmatprep.subr.mxu0 0.0
    %3068 = vmatpush1.msra.mxu0 0.0
    %3069 = vmatprep.subr.mxu0 0.0
    %3070 = vmatpush1.msra.mxu0 0.0
    %3071 = vmatprep.subr.mxu0 0.0
    %3072 = vmatpush1.msra.mxu0 0.0
    %3073 = vmatprep.subr.mxu0 0.0
    %3074 = vmatpush1.msra.mxu0 0.0
    %3075 = vmatprep.subr.mxu0 0.0
    %3076 = vmatpush1.msra.mxu0 0.0
    %3077 = vmatprep.subr.mxu0 0.0
    %3078 = vmatpush1.msra.mxu0 0.0
    %3079 = vmatprep.mubr.f32.mxu0 0.0
    %3080 = vmatmul.mubr.f32.gmra.mrb[0].mxu0 %v2555
    %v3081 = vpop.f32.mrb[0].mxu0
    %v3082 = vadd.f32 0.0, %v3081
    %v3083 = vpop.f32.mrb[0].mxu0
    %v3084 = vadd.f32 0.0, %v3083
    %3085 = vdwg.mxu0
    %3086 = vmatprep.subr.mxu0 %v166
    %3087 = vmatpush1.msra.mxu0 %v165
    %3088 = vmatprep.subr.mxu0 %v170
    %3089 = vmatpush1.msra.mxu0 %v169
    %3090 = vmatprep.subr.mxu0 %v174
    %3091 = vmatpush1.msra.mxu0 %v173
    %3092 = vmatprep.subr.mxu0 %v178
    %3093 = vmatpush1.msra.mxu0 %v177
    %3094 = vmatprep.subr.mxu0 %v182
    %3095 = vmatpush1.msra.mxu0 %v181
    %3096 = vmatprep.subr.mxu0 %v186
    %3097 = vmatpush1.msra.mxu0 %v185
    %3098 = vmatprep.subr.mxu0 %v190
    %3099 = vmatpush1.msra.mxu0 %v189
    %3100 = vmatprep.subr.mxu0 %v194
    %3101 = vmatpush1.msra.mxu0 %v193
    %3102 = vmatprep.subr.mxu0 %v198
    %3103 = vmatpush1.msra.mxu0 %v197
    %3104 = vmatprep.subr.mxu0 %v202
    %3105 = vmatpush1.msra.mxu0 %v201
    %3106 = vmatprep.subr.mxu0 %v206
    %3107 = vmatpush1.msra.mxu0 %v205
    %3108 = vmatprep.subr.mxu0 %v210
    %3109 = vmatpush1.msra.mxu0 %v209
    %3110 = vmatprep.subr.mxu0 %v214
    %3111 = vmatpush1.msra.mxu0 %v213
    %3112 = vmatprep.subr.mxu0 %v218
    %3113 = vmatpush1.msra.mxu0 %v217
    %3114 = vmatprep.subr.mxu0 %v222
    %3115 = vmatpush1.msra.mxu0 %v221
    %3116 = vmatprep.subr.mxu0 %v226
    %3117 = vmatpush1.msra.mxu0 %v225
    %3118 = vmatprep.subr.mxu0 0.0
    %3119 = vmatpush1.msra.mxu0 0.0
    %3120 = vmatprep.subr.mxu0 0.0
    %3121 = vmatpush1.msra.mxu0 0.0
    %3122 = vmatprep.subr.mxu0 0.0
    %3123 = vmatpush1.msra.mxu0 0.0
    %3124 = vmatprep.subr.mxu0 0.0
    %3125 = vmatpush1.msra.mxu0 0.0
    %3126 = vmatprep.subr.mxu0 0.0
    %3127 = vmatpush1.msra.mxu0 0.0
    %3128 = vmatprep.subr.mxu0 0.0
    %3129 = vmatpush1.msra.mxu0 0.0
    %3130 = vmatprep.subr.mxu0 0.0
    %3131 = vmatpush1.msra.mxu0 0.0
    %3132 = vmatprep.subr.mxu0 0.0
    %3133 = vmatpush1.msra.mxu0 0.0
    %3134 = vmatprep.subr.mxu0 0.0
    %3135 = vmatpush1.msra.mxu0 0.0
    %3136 = vmatprep.subr.mxu0 0.0
    %3137 = vmatpush1.msra.mxu0 0.0
    %3138 = vmatprep.subr.mxu0 0.0
    %3139 = vmatpush1.msra.mxu0 0.0
    %3140 = vmatprep.subr.mxu0 0.0
    %3141 = vmatpush1.msra.mxu0 0.0
    %3142 = vmatprep.subr.mxu0 0.0
    %3143 = vmatpush1.msra.mxu0 0.0
    %3144 = vmatprep.subr.mxu0 0.0
    %3145 = vmatpush1.msra.mxu0 0.0
    %3146 = vmatprep.subr.mxu0 0.0
    %3147 = vmatpush1.msra.mxu0 0.0
    %3148 = vmatprep.subr.mxu0 0.0
    %3149 = vmatpush1.msra.mxu0 0.0
    %3150 = vmatprep.mubr.f32.mxu0 0.0
    %3151 = vmatmul.mubr.f32.gmra.mrb[0].mxu0 %v2555
    %v3152 = vpop.f32.mrb[0].mxu0
    %v3153 = vadd.f32 0.0, %v3152
    %v3154 = vpop.f32.mrb[0].mxu0
    %v3155 = vadd.f32 0.0, %v3154
    %3156 = vdwg.mxu0
    %v3157 = vadd.f32 %v2940, %v3082
    %v3158 = vadd.f32 %v2942, %v3084
    %v3159 = vadd.f32 %v3011, %v3153
    %v3160 = vadd.f32 %v3013, %v3155
    %v3161 = vxor.u32 %v3157, 2147483648
    %v3162 = vxor.u32 %v3158, 2147483648
    %v3163 = vxor.u32 %v3159, 2147483648
    %v3164 = vmul.f32 %v3161, 1.442695
    %v3165 = vpow.pop %v3164
    %v3166 = vmul.f32 %v3162, 1.442695
    %v3167 = vpow.pop %v3166
    %v3168 = vmul.f32 %v3163, 1.442695
    %v3169 = vpow.pop %v3168
    %v3170 = vadd.f32 %v3165, 1.0
    %v3171 = vadd.f32 %v3167, 1.0
    %v3172 = vadd.f32 %v3169, 1.0
    %v3173 = vrcp.pop %v3170
    %v3174 = vmul.f32 1.0, %v3173
    %v3175 = vrcp.pop %v3171
    %v3176 = vmul.f32 1.0, %v3175
    %v3177 = vrcp.pop %v3172
    %v3178 = vmul.f32 1.0, %v3177
    %v3179 = vtanh.pop %v3160
    %v3180 = vmul.f32 %v3176, %v2553
    %v3181 = vmul.f32 %v3174, %v3179
    %v3182 = vadd.f32 %v3180, %v3181
    %v3183 = vtanh.pop %v3182
    %v3184 = vmul.f32 %v3178, %v3183
    %3185 = vmatprep.subr.mxu0 %v100
    %3186 = vmatpush1.msra.mxu0 %v99
    %3187 = vmatprep.subr.mxu0 %v104
    %3188 = vmatpush1.msra.mxu0 %v103
    %3189 = vmatprep.subr.mxu0 %v108
    %3190 = vmatpush1.msra.mxu0 %v107
    %3191 = vmatprep.subr.mxu0 %v112
    %3192 = vmatpush1.msra.mxu0 %v111
    %3193 = vmatprep.subr.mxu0 %v116
    %3194 = vmatpush1.msra.mxu0 %v115
    %3195 = vmatprep.subr.mxu0 %v120
    %3196 = vmatpush1.msra.mxu0 %v119
    %3197 = vmatprep.subr.mxu0 %v124
    %3198 = vmatpush1.msra.mxu0 %v123
    %3199 = vmatprep.subr.mxu0 %v128
    %3200 = vmatpush1.msra.mxu0 %v127
    %3201 = vmatprep.subr.mxu0 %v132
    %3202 = vmatpush1.msra.mxu0 %v131
    %3203 = vmatprep.subr.mxu0 %v136
    %3204 = vmatpush1.msra.mxu0 %v135
    %3205 = vmatprep.subr.mxu0 %v140
    %3206 = vmatpush1.msra.mxu0 %v139
    %3207 = vmatprep.subr.mxu0 %v144
    %3208 = vmatpush1.msra.mxu0 %v143
    %3209 = vmatprep.subr.mxu0 %v148
    %3210 = vmatpush1.msra.mxu0 %v147
    %3211 = vmatprep.subr.mxu0 %v152
    %3212 = vmatpush1.msra.mxu0 %v151
    %3213 = vmatprep.subr.mxu0 %v156
    %3214 = vmatpush1.msra.mxu0 %v155
    %3215 = vmatprep.subr.mxu0 %v160
    %3216 = vmatpush1.msra.mxu0 %v159
    %3217 = vmatprep.subr.mxu0 0.0
    %3218 = vmatpush1.msra.mxu0 0.0
    %3219 = vmatprep.subr.mxu0 0.0
    %3220 = vmatpush1.msra.mxu0 0.0
    %3221 = vmatprep.subr.mxu0 0.0
    %3222 = vmatpush1.msra.mxu0 0.0
    %3223 = vmatprep.subr.mxu0 0.0
    %3224 = vmatpush1.msra.mxu0 0.0
    %3225 = vmatprep.subr.mxu0 0.0
    %3226 = vmatpush1.msra.mxu0 0.0
    %3227 = vmatprep.subr.mxu0 0.0
    %3228 = vmatpush1.msra.mxu0 0.0
    %3229 = vmatprep.subr.mxu0 0.0
    %3230 = vmatpush1.msra.mxu0 0.0
    %3231 = vmatprep.subr.mxu0 0.0
    %3232 = vmatpush1.msra.mxu0 0.0
    %3233 = vmatprep.subr.mxu0 0.0
    %3234 = vmatpush1.msra.mxu0 0.0
    %3235 = vmatprep.subr.mxu0 0.0
    %3236 = vmatpush1.msra.mxu0 0.0
    %3237 = vmatprep.subr.mxu0 0.0
    %3238 = vmatpush1.msra.mxu0 0.0
    %3239 = vmatprep.subr.mxu0 0.0
    %3240 = vmatpush1.msra.mxu0 0.0
    %3241 = vmatprep.subr.mxu0 0.0
    %3242 = vmatpush1.msra.mxu0 0.0
    %3243 = vmatprep.subr.mxu0 0.0
    %3244 = vmatpush1.msra.mxu0 0.0
    %3245 = vmatprep.subr.mxu0 0.0
    %3246 = vmatpush1.msra.mxu0 0.0
    %3247 = vmatprep.subr.mxu0 0.0
    %3248 = vmatpush1.msra.mxu0 0.0
    %3249 = vmatprep.mubr.f32.mxu0 0.0
    %3250 = vmatmul.mubr.f32.gmra.mrb[0].mxu0 %v3184
    %v3251 = vpop.f32.mrb[0].mxu0
    %v3252 = vadd.f32 %v653, %v3251
    %v3253 = vpop.f32.mrb[0].mxu0
    %v3254 = vadd.f32 %v657, %v3253
    %3255 = vdwg.mxu0
    %3256 = vmatprep.subr.mxu0 %v102
    %3257 = vmatpush1.msra.mxu0 %v101
    %3258 = vmatprep.subr.mxu0 %v106
    %3259 = vmatpush1.msra.mxu0 %v105
    %3260 = vmatprep.subr.mxu0 %v110
    %3261 = vmatpush1.msra.mxu0 %v109
    %3262 = vmatprep.subr.mxu0 %v114
    %3263 = vmatpush1.msra.mxu0 %v113
    %3264 = vmatprep.subr.mxu0 %v118
    %3265 = vmatpush1.msra.mxu0 %v117
    %3266 = vmatprep.subr.mxu0 %v122
    %3267 = vmatpush1.msra.mxu0 %v121
    %3268 = vmatprep.subr.mxu0 %v126
    %3269 = vmatpush1.msra.mxu0 %v125
    %3270 = vmatprep.subr.mxu0 %v130
    %3271 = vmatpush1.msra.mxu0 %v129
    %3272 = vmatprep.subr.mxu0 %v134
    %3273 = vmatpush1.msra.mxu0 %v133
    %3274 = vmatprep.subr.mxu0 %v138
    %3275 = vmatpush1.msra.mxu0 %v137
    %3276 = vmatprep.subr.mxu0 %v142
    %3277 = vmatpush1.msra.mxu0 %v141
    %3278 = vmatprep.subr.mxu0 %v146
    %3279 = vmatpush1.msra.mxu0 %v145
    %3280 = vmatprep.subr.mxu0 %v150
    %3281 = vmatpush1.msra.mxu0 %v149
    %3282 = vmatprep.subr.mxu0 %v154
    %3283 = vmatpush1.msra.mxu0 %v153
    %3284 = vmatprep.subr.mxu0 %v158
    %3285 = vmatpush1.msra.mxu0 %v157
    %3286 = vmatprep.subr.mxu0 %v162
    %3287 = vmatpush1.msra.mxu0 %v161
    %3288 = vmatprep.subr.mxu0 0.0
    %3289 = vmatpush1.msra.mxu0 0.0
    %3290 = vmatprep.subr.mxu0 0.0
    %3291 = vmatpush1.msra.mxu0 0.0
    %3292 = vmatprep.subr.mxu0 0.0
    %3293 = vmatpush1.msra.mxu0 0.0
    %3294 = vmatprep.subr.mxu0 0.0
    %3295 = vmatpush1.msra.mxu0 0.0
    %3296 = vmatprep.subr.mxu0 0.0
    %3297 = vmatpush1.msra.mxu0 0.0
    %3298 = vmatprep.subr.mxu0 0.0
    %3299 = vmatpush1.msra.mxu0 0.0
    %3300 = vmatprep.subr.mxu0 0.0
    %3301 = vmatpush1.msra.mxu0 0.0
    %3302 = vmatprep.subr.mxu0 0.0
    %3303 = vmatpush1.msra.mxu0 0.0
    %3304 = vmatprep.subr.mxu0 0.0
    %3305 = vmatpush1.msra.mxu0 0.0
    %3306 = vmatprep.subr.mxu0 0.0
    %3307 = vmatpush1.msra.mxu0 0.0
    %3308 = vmatprep.subr.mxu0 0.0
    %3309 = vmatpush1.msra.mxu0 0.0
    %3310 = vmatprep.subr.mxu0 0.0
    %3311 = vmatpush1.msra.mxu0 0.0
    %3312 = vmatprep.subr.mxu0 0.0
    %3313 = vmatpush1.msra.mxu0 0.0
    %3314 = vmatprep.subr.mxu0 0.0
    %3315 = vmatpush1.msra.mxu0 0.0
    %3316 = vmatprep.subr.mxu0 0.0
    %3317 = vmatpush1.msra.mxu0 0.0
    %3318 = vmatprep.subr.mxu0 0.0
    %3319 = vmatpush1.msra.mxu0 0.0
    %3320 = vmatprep.mubr.f32.mxu0 0.0
    %3321 = vmatmul.mubr.f32.gmra.mrb[0].mxu0 %v3184
    %v3322 = vpop.f32.mrb[0].mxu0
    %v3323 = vadd.f32 %v661, %v3322
    %v3324 = vpop.f32.mrb[0].mxu0
    %v3325 = vadd.f32 %v665, %v3324
    %3326 = vdwg.mxu0
    %3327 = vmatprep.subr.mxu0 %v228
    %3328 = vmatpush1.msra.mxu0 %v227
    %3329 = vmatprep.subr.mxu0 %v232
    %3330 = vmatpush1.msra.mxu0 %v231
    %3331 = vmatprep.subr.mxu0 %v236
    %3332 = vmatpush1.msra.mxu0 %v235
    %3333 = vmatprep.subr.mxu0 %v240
    %3334 = vmatpush1.msra.mxu0 %v239
    %3335 = vmatprep.subr.mxu0 %v244
    %3336 = vmatpush1.msra.mxu0 %v243
    %3337 = vmatprep.subr.mxu0 %v248
    %3338 = vmatpush1.msra.mxu0 %v247
    %3339 = vmatprep.subr.mxu0 %v252
    %3340 = vmatpush1.msra.mxu0 %v251
    %3341 = vmatprep.subr.mxu0 %v256
    %3342 = vmatpush1.msra.mxu0 %v255
    %3343 = vmatprep.subr.mxu0 %v260
    %3344 = vmatpush1.msra.mxu0 %v259
    %3345 = vmatprep.subr.mxu0 %v264
    %3346 = vmatpush1.msra.mxu0 %v263
    %3347 = vmatprep.subr.mxu0 %v268
    %3348 = vmatpush1.msra.mxu0 %v267
    %3349 = vmatprep.subr.mxu0 %v272
    %3350 = vmatpush1.msra.mxu0 %v271
    %3351 = vmatprep.subr.mxu0 %v276
    %3352 = vmatpush1.msra.mxu0 %v275
    %3353 = vmatprep.subr.mxu0 %v280
    %3354 = vmatpush1.msra.mxu0 %v279
    %3355 = vmatprep.subr.mxu0 %v284
    %3356 = vmatpush1.msra.mxu0 %v283
    %3357 = vmatprep.subr.mxu0 %v288
    %3358 = vmatpush1.msra.mxu0 %v287
    %3359 = vmatprep.subr.mxu0 0.0
    %3360 = vmatpush1.msra.mxu0 0.0
    %3361 = vmatprep.subr.mxu0 0.0
    %3362 = vmatpush1.msra.mxu0 0.0
    %3363 = vmatprep.subr.mxu0 0.0
    %3364 = vmatpush1.msra.mxu0 0.0
    %3365 = vmatprep.subr.mxu0 0.0
    %3366 = vmatpush1.msra.mxu0 0.0
    %3367 = vmatprep.subr.mxu0 0.0
    %3368 = vmatpush1.msra.mxu0 0.0
    %3369 = vmatprep.subr.mxu0 0.0
    %3370 = vmatpush1.msra.mxu0 0.0
    %3371 = vmatprep.subr.mxu0 0.0
    %3372 = vmatpush1.msra.mxu0 0.0
    %3373 = vmatprep.subr.mxu0 0.0
    %3374 = vmatpush1.msra.mxu0 0.0
    %3375 = vmatprep.subr.mxu0 0.0
    %3376 = vmatpush1.msra.mxu0 0.0
    %3377 = vmatprep.subr.mxu0 0.0
    %3378 = vmatpush1.msra.mxu0 0.0
    %3379 = vmatprep.subr.mxu0 0.0
    %3380 = vmatpush1.msra.mxu0 0.0
    %3381 = vmatprep.subr.mxu0 0.0
    %3382 = vmatpush1.msra.mxu0 0.0
    %3383 = vmatprep.subr.mxu0 0.0
    %3384 = vmatpush1.msra.mxu0 0.0
    %3385 = vmatprep.subr.mxu0 0.0
    %3386 = vmatpush1.msra.mxu0 0.0
    %3387 = vmatprep.subr.mxu0 0.0
    %3388 = vmatpush1.msra.mxu0 0.0
    %3389 = vmatprep.subr.mxu0 0.0
    %3390 = vmatpush1.msra.mxu0 0.0
    %3391 = vmatprep.mubr.f32.mxu0 0.0
    %3392 = vmatmul.mubr.f32.gmra.mrb[0].mxu0 %v2867
    %v3393 = vpop.f32.mrb[0].mxu0
    %v3394 = vadd.f32 0.0, %v3393
    %v3395 = vpop.f32.mrb[0].mxu0
    %v3396 = vadd.f32 0.0, %v3395
    %3397 = vdwg.mxu0
    %3398 = vmatprep.subr.mxu0 %v230
    %3399 = vmatpush1.msra.mxu0 %v229
    %3400 = vmatprep.subr.mxu0 %v234
    %3401 = vmatpush1.msra.mxu0 %v233
    %3402 = vmatprep.subr.mxu0 %v238
    %3403 = vmatpush1.msra.mxu0 %v237
    %3404 = vmatprep.subr.mxu0 %v242
    %3405 = vmatpush1.msra.mxu0 %v241
    %3406 = vmatprep.subr.mxu0 %v246
    %3407 = vmatpush1.msra.mxu0 %v245
    %3408 = vmatprep.subr.mxu0 %v250
    %3409 = vmatpush1.msra.mxu0 %v249
    %3410 = vmatprep.subr.mxu0 %v254
    %3411 = vmatpush1.msra.mxu0 %v253
    %3412 = vmatprep.subr.mxu0 %v258
    %3413 = vmatpush1.msra.mxu0 %v257
    %3414 = vmatprep.subr.mxu0 %v262
    %3415 = vmatpush1.msra.mxu0 %v261
    %3416 = vmatprep.subr.mxu0 %v266
    %3417 = vmatpush1.msra.mxu0 %v265
    %3418 = vmatprep.subr.mxu0 %v270
    %3419 = vmatpush1.msra.mxu0 %v269
    %3420 = vmatprep.subr.mxu0 %v274
    %3421 = vmatpush1.msra.mxu0 %v273
    %3422 = vmatprep.subr.mxu0 %v278
    %3423 = vmatpush1.msra.mxu0 %v277
    %3424 = vmatprep.subr.mxu0 %v282
    %3425 = vmatpush1.msra.mxu0 %v281
    %3426 = vmatprep.subr.mxu0 %v286
    %3427 = vmatpush1.msra.mxu0 %v285
    %3428 = vmatprep.subr.mxu0 %v290
    %3429 = vmatpush1.msra.mxu0 %v289
    %3430 = vmatprep.subr.mxu0 0.0
    %3431 = vmatpush1.msra.mxu0 0.0
    %3432 = vmatprep.subr.mxu0 0.0
    %3433 = vmatpush1.msra.mxu0 0.0
    %3434 = vmatprep.subr.mxu0 0.0
    %3435 = vmatpush1.msra.mxu0 0.0
    %3436 = vmatprep.subr.mxu0 0.0
    %3437 = vmatpush1.msra.mxu0 0.0
    %3438 = vmatprep.subr.mxu0 0.0
    %3439 = vmatpush1.msra.mxu0 0.0
    %3440 = vmatprep.subr.mxu0 0.0
    %3441 = vmatpush1.msra.mxu0 0.0
    %3442 = vmatprep.subr.mxu0 0.0
    %3443 = vmatpush1.msra.mxu0 0.0
    %3444 = vmatprep.subr.mxu0 0.0
    %3445 = vmatpush1.msra.mxu0 0.0
    %3446 = vmatprep.subr.mxu0 0.0
    %3447 = vmatpush1.msra.mxu0 0.0
    %3448 = vmatprep.subr.mxu0 0.0
    %3449 = vmatpush1.msra.mxu0 0.0
    %3450 = vmatprep.subr.mxu0 0.0
    %3451 = vmatpush1.msra.mxu0 0.0
    %3452 = vmatprep.subr.mxu0 0.0
    %3453 = vmatpush1.msra.mxu0 0.0
    %3454 = vmatprep.subr.mxu0 0.0
    %3455 = vmatpush1.msra.mxu0 0.0
    %3456 = vmatprep.subr.mxu0 0.0
    %3457 = vmatpush1.msra.mxu0 0.0
    %3458 = vmatprep.subr.mxu0 0.0
    %3459 = vmatpush1.msra.mxu0 0.0
    %3460 = vmatprep.subr.mxu0 0.0
    %3461 = vmatpush1.msra.mxu0 0.0
    %3462 = vmatprep.mubr.f32.mxu0 0.0
    %3463 = vmatmul.mubr.f32.gmra.mrb[0].mxu0 %v2867
    %v3464 = vpop.f32.mrb[0].mxu0
    %v3465 = vadd.f32 0.0, %v3464
    %v3466 = vpop.f32.mrb[0].mxu0
    %v3467 = vadd.f32 0.0, %v3466
    %3468 = vdwg.mxu0
    %v3469 = vadd.f32 %v3252, %v3394
    %v3470 = vadd.f32 %v3254, %v3396
    %v3471 = vadd.f32 %v3323, %v3465
    %v3472 = vadd.f32 %v3325, %v3467
    %v3473 = vxor.u32 %v3469, 2147483648
    %v3474 = vxor.u32 %v3470, 2147483648
    %v3475 = vxor.u32 %v3471, 2147483648
    %v3476 = vmul.f32 %v3473, 1.442695
    %v3477 = vpow.pop %v3476
    %v3478 = vmul.f32 %v3474, 1.442695
    %v3479 = vpow.pop %v3478
    %v3480 = vmul.f32 %v3475, 1.442695
    %v3481 = vpow.pop %v3480
    %v3482 = vadd.f32 %v3477, 1.0
    %v3483 = vadd.f32 %v3479, 1.0
    %v3484 = vadd.f32 %v3481, 1.0
    %v3485 = vrcp.pop %v3482
    %v3486 = vmul.f32 1.0, %v3485
    %v3487 = vrcp.pop %v3483
    %v3488 = vmul.f32 1.0, %v3487
    %v3489 = vrcp.pop %v3484
    %v3490 = vmul.f32 1.0, %v3489
    %v3491 = vtanh.pop %v3472
    %v3492 = vmul.f32 %v3488, %v2865
    %v3493 = vmul.f32 %v3486, %v3491
    %v3494 = vadd.f32 %v3492, %v3493
    %v3495 = vtanh.pop %v3494
    %v3496 = vmul.f32 %v3490, %v3495
    %v3497 = vrot.slane %v293, 5
    %v3498 = vrot.slane %v294, 4
    %v3499 = vsel %vm319, %v3498, %v3497
    %v3500 = vsel %vm321, %v3499, 0
    %3502 = vmatprep.subr.mxu0 %v92
    %3503 = vmatpush1.msra.mxu0 %v91
    %3504 = vmatprep.subr.mxu0 %v329
    %3505 = vmatpush1.msra.mxu0 %v326
    %3506 = vmatprep.subr.mxu0 0.0
    %3507 = vmatpush1.msra.mxu0 0.0
    %3508 = vmatprep.subr.mxu0 0.0
    %3509 = vmatpush1.msra.mxu0 0.0
    %3510 = vmatprep.subr.mxu0 0.0
    %3511 = vmatpush1.msra.mxu0 0.0
    %3512 = vmatprep.subr.mxu0 0.0
    %3513 = vmatpush1.msra.mxu0 0.0
    %3514 = vmatprep.subr.mxu0 0.0
    %3515 = vmatpush1.msra.mxu0 0.0
    %3516 = vmatprep.subr.mxu0 0.0
    %3517 = vmatpush1.msra.mxu0 0.0
    %3518 = vmatprep.subr.mxu0 0.0
    %3519 = vmatpush1.msra.mxu0 0.0
    %3520 = vmatprep.subr.mxu0 0.0
    %3521 = vmatpush1.msra.mxu0 0.0
    %3522 = vmatprep.subr.mxu0 0.0
    %3523 = vmatpush1.msra.mxu0 0.0
    %3524 = vmatprep.subr.mxu0 0.0
    %3525 = vmatpush1.msra.mxu0 0.0
    %3526 = vmatprep.subr.mxu0 0.0
    %3527 = vmatpush1.msra.mxu0 0.0
    %3528 = vmatprep.subr.mxu0 0.0
    %3529 = vmatpush1.msra.mxu0 0.0
    %3530 = vmatprep.subr.mxu0 0.0
    %3531 = vmatpush1.msra.mxu0 0.0
    %3532 = vmatprep.subr.mxu0 0.0
    %3533 = vmatpush1.msra.mxu0 0.0
    %3534 = vmatprep.subr.mxu0 0.0
    %3535 = vmatpush1.msra.mxu0 0.0
    %3536 = vmatprep.subr.mxu0 0.0
    %3537 = vmatpush1.msra.mxu0 0.0
    %3538 = vmatprep.subr.mxu0 0.0
    %3539 = vmatpush1.msra.mxu0 0.0
    %3540 = vmatprep.subr.mxu0 0.0
    %3541 = vmatpush1.msra.mxu0 0.0
    %3542 = vmatprep.subr.mxu0 0.0
    %3543 = vmatpush1.msra.mxu0 0.0
    %3544 = vmatprep.subr.mxu0 0.0
    %3545 = vmatpush1.msra.mxu0 0.0
    %3546 = vmatprep.subr.mxu0 0.0
    %3547 = vmatpush1.msra.mxu0 0.0
    %3548 = vmatprep.subr.mxu0 0.0
    %3549 = vmatpush1.msra.mxu0 0.0
    %3550 = vmatprep.subr.mxu0 0.0
    %3551 = vmatpush1.msra.mxu0 0.0
    %3552 = vmatprep.subr.mxu0 0.0
    %3553 = vmatpush1.msra.mxu0 0.0
    %3554 = vmatprep.subr.mxu0 0.0
    %3555 = vmatpush1.msra.mxu0 0.0
    %3556 = vmatprep.subr.mxu0 0.0
    %3557 = vmatpush1.msra.mxu0 0.0
    %3558 = vmatprep.subr.mxu0 0.0
    %3559 = vmatpush1.msra.mxu0 0.0
    %3560 = vmatprep.subr.mxu0 0.0
    %3561 = vmatpush1.msra.mxu0 0.0
    %3562 = vmatprep.subr.mxu0 0.0
    %3563 = vmatpush1.msra.mxu0 0.0
    %3564 = vmatprep.subr.mxu0 0.0
    %3565 = vmatpush1.msra.mxu0 0.0
    %3566 = vmatprep.mubr.f32.mxu0 0.0
    %3567 = vmatmul.mubr.f32.gmra.mrb[0].mxu0 %v3500
    %v3568 = vpop.f32.mrb[0].mxu0
    %v3569 = vadd.f32 %v299, %v3568
    %v3570 = vpop.f32.mrb[0].mxu0
    %v3571 = vadd.f32 %v303, %v3570
    %3572 = vdwg.mxu0
    %3573 = vmatprep.subr.mxu0 %v94
    %3574 = vmatpush1.msra.mxu0 %v93
    %3575 = vmatprep.subr.mxu0 %v335
    %3576 = vmatpush1.msra.mxu0 %v332
    %3577 = vmatprep.subr.mxu0 0.0
    %3578 = vmatpush1.msra.mxu0 0.0
    %3579 = vmatprep.subr.mxu0 0.0
    %3580 = vmatpush1.msra.mxu0 0.0
    %3581 = vmatprep.subr.mxu0 0.0
    %3582 = vmatpush1.msra.mxu0 0.0
    %3583 = vmatprep.subr.mxu0 0.0
    %3584 = vmatpush1.msra.mxu0 0.0
    %3585 = vmatprep.subr.mxu0 0.0
    %3586 = vmatpush1.msra.mxu0 0.0
    %3587 = vmatprep.subr.mxu0 0.0
    %3588 = vmatpush1.msra.mxu0 0.0
    %3589 = vmatprep.subr.mxu0 0.0
    %3590 = vmatpush1.msra.mxu0 0.0
    %3591 = vmatprep.subr.mxu0 0.0
    %3592 = vmatpush1.msra.mxu0 0.0
    %3593 = vmatprep.subr.mxu0 0.0
    %3594 = vmatpush1.msra.mxu0 0.0
    %3595 = vmatprep.subr.mxu0 0.0
    %3596 = vmatpush1.msra.mxu0 0.0
    %3597 = vmatprep.subr.mxu0 0.0
    %3598 = vmatpush1.msra.mxu0 0.0
    %3599 = vmatprep.subr.mxu0 0.0
    %3600 = vmatpush1.msra.mxu0 0.0
    %3601 = vmatprep.subr.mxu0 0.0
    %3602 = vmatpush1.msra.mxu0 0.0
    %3603 = vmatprep.subr.mxu0 0.0
    %3604 = vmatpush1.msra.mxu0 0.0
    %3605 = vmatprep.subr.mxu0 0.0
    %3606 = vmatpush1.msra.mxu0 0.0
    %3607 = vmatprep.subr.mxu0 0.0
    %3608 = vmatpush1.msra.mxu0 0.0
    %3609 = vmatprep.subr.mxu0 0.0
    %3610 = vmatpush1.msra.mxu0 0.0
    %3611 = vmatprep.subr.mxu0 0.0
    %3612 = vmatpush1.msra.mxu0 0.0
    %3613 = vmatprep.subr.mxu0 0.0
    %3614 = vmatpush1.msra.mxu0 0.0
    %3615 = vmatprep.subr.mxu0 0.0
    %3616 = vmatpush1.msra.mxu0 0.0
    %3617 = vmatprep.subr.mxu0 0.0
    %3618 = vmatpush1.msra.mxu0 0.0
    %3619 = vmatprep.subr.mxu0 0.0
    %3620 = vmatpush1.msra.mxu0 0.0
    %3621 = vmatprep.subr.mxu0 0.0
    %3622 = vmatpush1.msra.mxu0 0.0
    %3623 = vmatprep.subr.mxu0 0.0
    %3624 = vmatpush1.msra.mxu0 0.0
    %3625 = vmatprep.subr.mxu0 0.0
    %3626 = vmatpush1.msra.mxu0 0.0
    %3627 = vmatprep.subr.mxu0 0.0
    %3628 = vmatpush1.msra.mxu0 0.0
    %3629 = vmatprep.subr.mxu0 0.0
    %3630 = vmatpush1.msra.mxu0 0.0
    %3631 = vmatprep.subr.mxu0 0.0
    %3632 = vmatpush1.msra.mxu0 0.0
    %3633 = vmatprep.subr.mxu0 0.0
    %3634 = vmatpush1.msra.mxu0 0.0
    %3635 = vmatprep.subr.mxu0 0.0
    %3636 = vmatpush1.msra.mxu0 0.0
    %3637 = vmatprep.mubr.f32.mxu0 0.0
    %3638 = vmatmul.mubr.f32.gmra.mrb[0].mxu0 %v3500
    %v3639 = vpop.f32.mrb[0].mxu0
    %v3640 = vadd.f32 %v307, %v3639
    %v3641 = vpop.f32.mrb[0].mxu0
    %v3642 = vadd.f32 %v311, %v3641
    %3643 = vdwg.mxu0
    %3644 = vmatprep.subr.mxu0 %v164
    %3645 = vmatpush1.msra.mxu0 %v163
    %3646 = vmatprep.subr.mxu0 %v168
    %3647 = vmatpush1.msra.mxu0 %v167
    %3648 = vmatprep.subr.mxu0 %v172
    %3649 = vmatpush1.msra.mxu0 %v171
    %3650 = vmatprep.subr.mxu0 %v176
    %3651 = vmatpush1.msra.mxu0 %v175
    %3652 = vmatprep.subr.mxu0 %v180
    %3653 = vmatpush1.msra.mxu0 %v179
    %3654 = vmatprep.subr.mxu0 %v184
    %3655 = vmatpush1.msra.mxu0 %v183
    %3656 = vmatprep.subr.mxu0 %v188
    %3657 = vmatpush1.msra.mxu0 %v187
    %3658 = vmatprep.subr.mxu0 %v192
    %3659 = vmatpush1.msra.mxu0 %v191
    %3660 = vmatprep.subr.mxu0 %v196
    %3661 = vmatpush1.msra.mxu0 %v195
    %3662 = vmatprep.subr.mxu0 %v200
    %3663 = vmatpush1.msra.mxu0 %v199
    %3664 = vmatprep.subr.mxu0 %v204
    %3665 = vmatpush1.msra.mxu0 %v203
    %3666 = vmatprep.subr.mxu0 %v208
    %3667 = vmatpush1.msra.mxu0 %v207
    %3668 = vmatprep.subr.mxu0 %v212
    %3669 = vmatpush1.msra.mxu0 %v211
    %3670 = vmatprep.subr.mxu0 %v216
    %3671 = vmatpush1.msra.mxu0 %v215
    %3672 = vmatprep.subr.mxu0 %v220
    %3673 = vmatpush1.msra.mxu0 %v219
    %3674 = vmatprep.subr.mxu0 %v224
    %3675 = vmatpush1.msra.mxu0 %v223
    %3676 = vmatprep.subr.mxu0 0.0
    %3677 = vmatpush1.msra.mxu0 0.0
    %3678 = vmatprep.subr.mxu0 0.0
    %3679 = vmatpush1.msra.mxu0 0.0
    %3680 = vmatprep.subr.mxu0 0.0
    %3681 = vmatpush1.msra.mxu0 0.0
    %3682 = vmatprep.subr.mxu0 0.0
    %3683 = vmatpush1.msra.mxu0 0.0
    %3684 = vmatprep.subr.mxu0 0.0
    %3685 = vmatpush1.msra.mxu0 0.0
    %3686 = vmatprep.subr.mxu0 0.0
    %3687 = vmatpush1.msra.mxu0 0.0
    %3688 = vmatprep.subr.mxu0 0.0
    %3689 = vmatpush1.msra.mxu0 0.0
    %3690 = vmatprep.subr.mxu0 0.0
    %3691 = vmatpush1.msra.mxu0 0.0
    %3692 = vmatprep.subr.mxu0 0.0
    %3693 = vmatpush1.msra.mxu0 0.0
    %3694 = vmatprep.subr.mxu0 0.0
    %3695 = vmatpush1.msra.mxu0 0.0
    %3696 = vmatprep.subr.mxu0 0.0
    %3697 = vmatpush1.msra.mxu0 0.0
    %3698 = vmatprep.subr.mxu0 0.0
    %3699 = vmatpush1.msra.mxu0 0.0
    %3700 = vmatprep.subr.mxu0 0.0
    %3701 = vmatpush1.msra.mxu0 0.0
    %3702 = vmatprep.subr.mxu0 0.0
    %3703 = vmatpush1.msra.mxu0 0.0
    %3704 = vmatprep.subr.mxu0 0.0
    %3705 = vmatpush1.msra.mxu0 0.0
    %3706 = vmatprep.subr.mxu0 0.0
    %3707 = vmatpush1.msra.mxu0 0.0
    %3708 = vmatprep.mubr.f32.mxu0 0.0
    %3709 = vmatmul.mubr.f32.gmra.mrb[0].mxu0 %v3184
    %v3710 = vpop.f32.mrb[0].mxu0
    %v3711 = vadd.f32 0.0, %v3710
    %v3712 = vpop.f32.mrb[0].mxu0
    %v3713 = vadd.f32 0.0, %v3712
    %3714 = vdwg.mxu0
    %3715 = vmatprep.subr.mxu0 %v166
    %3716 = vmatpush1.msra.mxu0 %v165
    %3717 = vmatprep.subr.mxu0 %v170
    %3718 = vmatpush1.msra.mxu0 %v169
    %3719 = vmatprep.subr.mxu0 %v174
    %3720 = vmatpush1.msra.mxu0 %v173
    %3721 = vmatprep.subr.mxu0 %v178
    %3722 = vmatpush1.msra.mxu0 %v177
    %3723 = vmatprep.subr.mxu0 %v182
    %3724 = vmatpush1.msra.mxu0 %v181
    %3725 = vmatprep.subr.mxu0 %v186
    %3726 = vmatpush1.msra.mxu0 %v185
    %3727 = vmatprep.subr.mxu0 %v190
    %3728 = vmatpush1.msra.mxu0 %v189
    %3729 = vmatprep.subr.mxu0 %v194
    %3730 = vmatpush1.msra.mxu0 %v193
    %3731 = vmatprep.subr.mxu0 %v198
    %3732 = vmatpush1.msra.mxu0 %v197
    %3733 = vmatprep.subr.mxu0 %v202
    %3734 = vmatpush1.msra.mxu0 %v201
    %3735 = vmatprep.subr.mxu0 %v206
    %3736 = vmatpush1.msra.mxu0 %v205
    %3737 = vmatprep.subr.mxu0 %v210
    %3738 = vmatpush1.msra.mxu0 %v209
    %3739 = vmatprep.subr.mxu0 %v214
    %3740 = vmatpush1.msra.mxu0 %v213
    %3741 = vmatprep.subr.mxu0 %v218
    %3742 = vmatpush1.msra.mxu0 %v217
    %3743 = vmatprep.subr.mxu0 %v222
    %3744 = vmatpush1.msra.mxu0 %v221
    %3745 = vmatprep.subr.mxu0 %v226
    %3746 = vmatpush1.msra.mxu0 %v225
    %3747 = vmatprep.subr.mxu0 0.0
    %3748 = vmatpush1.msra.mxu0 0.0
    %3749 = vmatprep.subr.mxu0 0.0
    %3750 = vmatpush1.msra.mxu0 0.0
    %3751 = vmatprep.subr.mxu0 0.0
    %3752 = vmatpush1.msra.mxu0 0.0
    %3753 = vmatprep.subr.mxu0 0.0
    %3754 = vmatpush1.msra.mxu0 0.0
    %3755 = vmatprep.subr.mxu0 0.0
    %3756 = vmatpush1.msra.mxu0 0.0
    %3757 = vmatprep.subr.mxu0 0.0
    %3758 = vmatpush1.msra.mxu0 0.0
    %3759 = vmatprep.subr.mxu0 0.0
    %3760 = vmatpush1.msra.mxu0 0.0
    %3761 = vmatprep.subr.mxu0 0.0
    %3762 = vmatpush1.msra.mxu0 0.0
    %3763 = vmatprep.subr.mxu0 0.0
    %3764 = vmatpush1.msra.mxu0 0.0
    %3765 = vmatprep.subr.mxu0 0.0
    %3766 = vmatpush1.msra.mxu0 0.0
    %3767 = vmatprep.subr.mxu0 0.0
    %3768 = vmatpush1.msra.mxu0 0.0
    %3769 = vmatprep.subr.mxu0 0.0
    %3770 = vmatpush1.msra.mxu0 0.0
    %3771 = vmatprep.subr.mxu0 0.0
    %3772 = vmatpush1.msra.mxu0 0.0
    %3773 = vmatprep.subr.mxu0 0.0
    %3774 = vmatpush1.msra.mxu0 0.0
    %3775 = vmatprep.subr.mxu0 0.0
    %3776 = vmatpush1.msra.mxu0 0.0
    %3777 = vmatprep.subr.mxu0 0.0
    %3778 = vmatpush1.msra.mxu0 0.0
    %3779 = vmatprep.mubr.f32.mxu0 0.0
    %3780 = vmatmul.mubr.f32.gmra.mrb[0].mxu0 %v3184
    %v3781 = vpop.f32.mrb[0].mxu0
    %v3782 = vadd.f32 0.0, %v3781
    %v3783 = vpop.f32.mrb[0].mxu0
    %v3784 = vadd.f32 0.0, %v3783
    %3785 = vdwg.mxu0
    %v3786 = vadd.f32 %v3569, %v3711
    %v3787 = vadd.f32 %v3571, %v3713
    %v3788 = vadd.f32 %v3640, %v3782
    %v3789 = vadd.f32 %v3642, %v3784
    %v3790 = vxor.u32 %v3786, 2147483648
    %v3791 = vxor.u32 %v3787, 2147483648
    %v3792 = vxor.u32 %v3788, 2147483648
    %v3793 = vmul.f32 %v3790, 1.442695
    %v3794 = vpow.pop %v3793
    %v3795 = vmul.f32 %v3791, 1.442695
    %v3796 = vpow.pop %v3795
    %v3797 = vmul.f32 %v3792, 1.442695
    %v3798 = vpow.pop %v3797
    %v3799 = vadd.f32 %v3794, 1.0
    %v3800 = vadd.f32 %v3796, 1.0
    %v3801 = vadd.f32 %v3798, 1.0
    %v3802 = vrcp.pop %v3799
    %v3803 = vmul.f32 1.0, %v3802
    %v3804 = vrcp.pop %v3800
    %v3805 = vmul.f32 1.0, %v3804
    %v3806 = vrcp.pop %v3801
    %v3807 = vmul.f32 1.0, %v3806
    %v3808 = vtanh.pop %v3789
    %v3809 = vmul.f32 %v3805, %v3182
    %v3810 = vmul.f32 %v3803, %v3808
    %v3811 = vadd.f32 %v3809, %v3810
    %v3812 = vtanh.pop %v3811
    %v3813 = vmul.f32 %v3807, %v3812
    %3814 = vmatprep.subr.mxu0 %v100
    %3815 = vmatpush1.msra.mxu0 %v99
    %3816 = vmatprep.subr.mxu0 %v104
    %3817 = vmatpush1.msra.mxu0 %v103
    %3818 = vmatprep.subr.mxu0 %v108
    %3819 = vmatpush1.msra.mxu0 %v107
    %3820 = vmatprep.subr.mxu0 %v112
    %3821 = vmatpush1.msra.mxu0 %v111
    %3822 = vmatprep.subr.mxu0 %v116
    %3823 = vmatpush1.msra.mxu0 %v115
    %3824 = vmatprep.subr.mxu0 %v120
    %3825 = vmatpush1.msra.mxu0 %v119
    %3826 = vmatprep.subr.mxu0 %v124
    %3827 = vmatpush1.msra.mxu0 %v123
    %3828 = vmatprep.subr.mxu0 %v128
    %3829 = vmatpush1.msra.mxu0 %v127
    %3830 = vmatprep.subr.mxu0 %v132
    %3831 = vmatpush1.msra.mxu0 %v131
    %3832 = vmatprep.subr.mxu0 %v136
    %3833 = vmatpush1.msra.mxu0 %v135
    %3834 = vmatprep.subr.mxu0 %v140
    %3835 = vmatpush1.msra.mxu0 %v139
    %3836 = vmatprep.subr.mxu0 %v144
    %3837 = vmatpush1.msra.mxu0 %v143
    %3838 = vmatprep.subr.mxu0 %v148
    %3839 = vmatpush1.msra.mxu0 %v147
    %3840 = vmatprep.subr.mxu0 %v152
    %3841 = vmatpush1.msra.mxu0 %v151
    %3842 = vmatprep.subr.mxu0 %v156
    %3843 = vmatpush1.msra.mxu0 %v155
    %3844 = vmatprep.subr.mxu0 %v160
    %3845 = vmatpush1.msra.mxu0 %v159
    %3846 = vmatprep.subr.mxu0 0.0
    %3847 = vmatpush1.msra.mxu0 0.0
    %3848 = vmatprep.subr.mxu0 0.0
    %3849 = vmatpush1.msra.mxu0 0.0
    %3850 = vmatprep.subr.mxu0 0.0
    %3851 = vmatpush1.msra.mxu0 0.0
    %3852 = vmatprep.subr.mxu0 0.0
    %3853 = vmatpush1.msra.mxu0 0.0
    %3854 = vmatprep.subr.mxu0 0.0
    %3855 = vmatpush1.msra.mxu0 0.0
    %3856 = vmatprep.subr.mxu0 0.0
    %3857 = vmatpush1.msra.mxu0 0.0
    %3858 = vmatprep.subr.mxu0 0.0
    %3859 = vmatpush1.msra.mxu0 0.0
    %3860 = vmatprep.subr.mxu0 0.0
    %3861 = vmatpush1.msra.mxu0 0.0
    %3862 = vmatprep.subr.mxu0 0.0
    %3863 = vmatpush1.msra.mxu0 0.0
    %3864 = vmatprep.subr.mxu0 0.0
    %3865 = vmatpush1.msra.mxu0 0.0
    %3866 = vmatprep.subr.mxu0 0.0
    %3867 = vmatpush1.msra.mxu0 0.0
    %3868 = vmatprep.subr.mxu0 0.0
    %3869 = vmatpush1.msra.mxu0 0.0
    %3870 = vmatprep.subr.mxu0 0.0
    %3871 = vmatpush1.msra.mxu0 0.0
    %3872 = vmatprep.subr.mxu0 0.0
    %3873 = vmatpush1.msra.mxu0 0.0
    %3874 = vmatprep.subr.mxu0 0.0
    %3875 = vmatpush1.msra.mxu0 0.0
    %3876 = vmatprep.subr.mxu0 0.0
    %3877 = vmatpush1.msra.mxu0 0.0
    %3878 = vmatprep.mubr.f32.mxu0 0.0
    %3879 = vmatmul.mubr.f32.gmra.mrb[0].mxu0 %v3813
    %v3880 = vpop.f32.mrb[0].mxu0
    %v3881 = vadd.f32 %v653, %v3880
    %v3882 = vpop.f32.mrb[0].mxu0
    %v3883 = vadd.f32 %v657, %v3882
    %3884 = vdwg.mxu0
    %3885 = vmatprep.subr.mxu0 %v102
    %3886 = vmatpush1.msra.mxu0 %v101
    %3887 = vmatprep.subr.mxu0 %v106
    %3888 = vmatpush1.msra.mxu0 %v105
    %3889 = vmatprep.subr.mxu0 %v110
    %3890 = vmatpush1.msra.mxu0 %v109
    %3891 = vmatprep.subr.mxu0 %v114
    %3892 = vmatpush1.msra.mxu0 %v113
    %3893 = vmatprep.subr.mxu0 %v118
    %3894 = vmatpush1.msra.mxu0 %v117
    %3895 = vmatprep.subr.mxu0 %v122
    %3896 = vmatpush1.msra.mxu0 %v121
    %3897 = vmatprep.subr.mxu0 %v126
    %3898 = vmatpush1.msra.mxu0 %v125
    %3899 = vmatprep.subr.mxu0 %v130
    %3900 = vmatpush1.msra.mxu0 %v129
    %3901 = vmatprep.subr.mxu0 %v134
    %3902 = vmatpush1.msra.mxu0 %v133
    %3903 = vmatprep.subr.mxu0 %v138
    %3904 = vmatpush1.msra.mxu0 %v137
    %3905 = vmatprep.subr.mxu0 %v142
    %3906 = vmatpush1.msra.mxu0 %v141
    %3907 = vmatprep.subr.mxu0 %v146
    %3908 = vmatpush1.msra.mxu0 %v145
    %3909 = vmatprep.subr.mxu0 %v150
    %3910 = vmatpush1.msra.mxu0 %v149
    %3911 = vmatprep.subr.mxu0 %v154
    %3912 = vmatpush1.msra.mxu0 %v153
    %3913 = vmatprep.subr.mxu0 %v158
    %3914 = vmatpush1.msra.mxu0 %v157
    %3915 = vmatprep.subr.mxu0 %v162
    %3916 = vmatpush1.msra.mxu0 %v161
    %3917 = vmatprep.subr.mxu0 0.0
    %3918 = vmatpush1.msra.mxu0 0.0
    %3919 = vmatprep.subr.mxu0 0.0
    %3920 = vmatpush1.msra.mxu0 0.0
    %3921 = vmatprep.subr.mxu0 0.0
    %3922 = vmatpush1.msra.mxu0 0.0
    %3923 = vmatprep.subr.mxu0 0.0
    %3924 = vmatpush1.msra.mxu0 0.0
    %3925 = vmatprep.subr.mxu0 0.0
    %3926 = vmatpush1.msra.mxu0 0.0
    %3927 = vmatprep.subr.mxu0 0.0
    %3928 = vmatpush1.msra.mxu0 0.0
    %3929 = vmatprep.subr.mxu0 0.0
    %3930 = vmatpush1.msra.mxu0 0.0
    %3931 = vmatprep.subr.mxu0 0.0
    %3932 = vmatpush1.msra.mxu0 0.0
    %3933 = vmatprep.subr.mxu0 0.0
    %3934 = vmatpush1.msra.mxu0 0.0
    %3935 = vmatprep.subr.mxu0 0.0
    %3936 = vmatpush1.msra.mxu0 0.0
    %3937 = vmatprep.subr.mxu0 0.0
    %3938 = vmatpush1.msra.mxu0 0.0
    %3939 = vmatprep.subr.mxu0 0.0
    %3940 = vmatpush1.msra.mxu0 0.0
    %3941 = vmatprep.subr.mxu0 0.0
    %3942 = vmatpush1.msra.mxu0 0.0
    %3943 = vmatprep.subr.mxu0 0.0
    %3944 = vmatpush1.msra.mxu0 0.0
    %3945 = vmatprep.subr.mxu0 0.0
    %3946 = vmatpush1.msra.mxu0 0.0
    %3947 = vmatprep.subr.mxu0 0.0
    %3948 = vmatpush1.msra.mxu0 0.0
    %3949 = vmatprep.mubr.f32.mxu0 0.0
    %3950 = vmatmul.mubr.f32.gmra.mrb[0].mxu0 %v3813
    %v3951 = vpop.f32.mrb[0].mxu0
    %v3952 = vadd.f32 %v661, %v3951
    %v3953 = vpop.f32.mrb[0].mxu0
    %v3954 = vadd.f32 %v665, %v3953
    %3955 = vdwg.mxu0
    %3956 = vmatprep.subr.mxu0 %v228
    %3957 = vmatpush1.msra.mxu0 %v227
    %3958 = vmatprep.subr.mxu0 %v232
    %3959 = vmatpush1.msra.mxu0 %v231
    %3960 = vmatprep.subr.mxu0 %v236
    %3961 = vmatpush1.msra.mxu0 %v235
    %3962 = vmatprep.subr.mxu0 %v240
    %3963 = vmatpush1.msra.mxu0 %v239
    %3964 = vmatprep.subr.mxu0 %v244
    %3965 = vmatpush1.msra.mxu0 %v243
    %3966 = vmatprep.subr.mxu0 %v248
    %3967 = vmatpush1.msra.mxu0 %v247
    %3968 = vmatprep.subr.mxu0 %v252
    %3969 = vmatpush1.msra.mxu0 %v251
    %3970 = vmatprep.subr.mxu0 %v256
    %3971 = vmatpush1.msra.mxu0 %v255
    %3972 = vmatprep.subr.mxu0 %v260
    %3973 = vmatpush1.msra.mxu0 %v259
    %3974 = vmatprep.subr.mxu0 %v264
    %3975 = vmatpush1.msra.mxu0 %v263
    %3976 = vmatprep.subr.mxu0 %v268
    %3977 = vmatpush1.msra.mxu0 %v267
    %3978 = vmatprep.subr.mxu0 %v272
    %3979 = vmatpush1.msra.mxu0 %v271
    %3980 = vmatprep.subr.mxu0 %v276
    %3981 = vmatpush1.msra.mxu0 %v275
    %3982 = vmatprep.subr.mxu0 %v280
    %3983 = vmatpush1.msra.mxu0 %v279
    %3984 = vmatprep.subr.mxu0 %v284
    %3985 = vmatpush1.msra.mxu0 %v283
    %3986 = vmatprep.subr.mxu0 %v288
    %3987 = vmatpush1.msra.mxu0 %v287
    %3988 = vmatprep.subr.mxu0 0.0
    %3989 = vmatpush1.msra.mxu0 0.0
    %3990 = vmatprep.subr.mxu0 0.0
    %3991 = vmatpush1.msra.mxu0 0.0
    %3992 = vmatprep.subr.mxu0 0.0
    %3993 = vmatpush1.msra.mxu0 0.0
    %3994 = vmatprep.subr.mxu0 0.0
    %3995 = vmatpush1.msra.mxu0 0.0
    %3996 = vmatprep.subr.mxu0 0.0
    %3997 = vmatpush1.msra.mxu0 0.0
    %3998 = vmatprep.subr.mxu0 0.0
    %3999 = vmatpush1.msra.mxu0 0.0
    %4000 = vmatprep.subr.mxu0 0.0
    %4001 = vmatpush1.msra.mxu0 0.0
    %4002 = vmatprep.subr.mxu0 0.0
    %4003 = vmatpush1.msra.mxu0 0.0
    %4004 = vmatprep.subr.mxu0 0.0
    %4005 = vmatpush1.msra.mxu0 0.0
    %4006 = vmatprep.subr.mxu0 0.0
    %4007 = vmatpush1.msra.mxu0 0.0
    %4008 = vmatprep.subr.mxu0 0.0
    %4009 = vmatpush1.msra.mxu0 0.0
    %4010 = vmatprep.subr.mxu0 0.0
    %4011 = vmatpush1.msra.mxu0 0.0
    %4012 = vmatprep.subr.mxu0 0.0
    %4013 = vmatpush1.msra.mxu0 0.0
    %4014 = vmatprep.subr.mxu0 0.0
    %4015 = vmatpush1.msra.mxu0 0.0
    %4016 = vmatprep.subr.mxu0 0.0
    %4017 = vmatpush1.msra.mxu0 0.0
    %4018 = vmatprep.subr.mxu0 0.0
    %4019 = vmatpush1.msra.mxu0 0.0
    %4020 = vmatprep.mubr.f32.mxu0 0.0
    %4021 = vmatmul.mubr.f32.gmra.mrb[0].mxu0 %v3496
    %v4022 = vpop.f32.mrb[0].mxu0
    %v4023 = vadd.f32 0.0, %v4022
    %v4024 = vpop.f32.mrb[0].mxu0
    %v4025 = vadd.f32 0.0, %v4024
    %4026 = vdwg.mxu0
    %4027 = vmatprep.subr.mxu0 %v230
    %4028 = vmatpush1.msra.mxu0 %v229
    %4029 = vmatprep.subr.mxu0 %v234
    %4030 = vmatpush1.msra.mxu0 %v233
    %4031 = vmatprep.subr.mxu0 %v238
    %4032 = vmatpush1.msra.mxu0 %v237
    %4033 = vmatprep.subr.mxu0 %v242
    %4034 = vmatpush1.msra.mxu0 %v241
    %4035 = vmatprep.subr.mxu0 %v246
    %4036 = vmatpush1.msra.mxu0 %v245
    %4037 = vmatprep.subr.mxu0 %v250
    %4038 = vmatpush1.msra.mxu0 %v249
    %4039 = vmatprep.subr.mxu0 %v254
    %4040 = vmatpush1.msra.mxu0 %v253
    %4041 = vmatprep.subr.mxu0 %v258
    %4042 = vmatpush1.msra.mxu0 %v257
    %4043 = vmatprep.subr.mxu0 %v262
    %4044 = vmatpush1.msra.mxu0 %v261
    %4045 = vmatprep.subr.mxu0 %v266
    %4046 = vmatpush1.msra.mxu0 %v265
    %4047 = vmatprep.subr.mxu0 %v270
    %4048 = vmatpush1.msra.mxu0 %v269
    %4049 = vmatprep.subr.mxu0 %v274
    %4050 = vmatpush1.msra.mxu0 %v273
    %4051 = vmatprep.subr.mxu0 %v278
    %4052 = vmatpush1.msra.mxu0 %v277
    %4053 = vmatprep.subr.mxu0 %v282
    %4054 = vmatpush1.msra.mxu0 %v281
    %4055 = vmatprep.subr.mxu0 %v286
    %4056 = vmatpush1.msra.mxu0 %v285
    %4057 = vmatprep.subr.mxu0 %v290
    %4058 = vmatpush1.msra.mxu0 %v289
    %4059 = vmatprep.subr.mxu0 0.0
    %4060 = vmatpush1.msra.mxu0 0.0
    %4061 = vmatprep.subr.mxu0 0.0
    %4062 = vmatpush1.msra.mxu0 0.0
    %4063 = vmatprep.subr.mxu0 0.0
    %4064 = vmatpush1.msra.mxu0 0.0
    %4065 = vmatprep.subr.mxu0 0.0
    %4066 = vmatpush1.msra.mxu0 0.0
    %4067 = vmatprep.subr.mxu0 0.0
    %4068 = vmatpush1.msra.mxu0 0.0
    %4069 = vmatprep.subr.mxu0 0.0
    %4070 = vmatpush1.msra.mxu0 0.0
    %4071 = vmatprep.subr.mxu0 0.0
    %4072 = vmatpush1.msra.mxu0 0.0
    %4073 = vmatprep.subr.mxu0 0.0
    %4074 = vmatpush1.msra.mxu0 0.0
    %4075 = vmatprep.subr.mxu0 0.0
    %4076 = vmatpush1.msra.mxu0 0.0
    %4077 = vmatprep.subr.mxu0 0.0
    %4078 = vmatpush1.msra.mxu0 0.0
    %4079 = vmatprep.subr.mxu0 0.0
    %4080 = vmatpush1.msra.mxu0 0.0
    %4081 = vmatprep.subr.mxu0 0.0
    %4082 = vmatpush1.msra.mxu0 0.0
    %4083 = vmatprep.subr.mxu0 0.0
    %4084 = vmatpush1.msra.mxu0 0.0
    %4085 = vmatprep.subr.mxu0 0.0
    %4086 = vmatpush1.msra.mxu0 0.0
    %4087 = vmatprep.subr.mxu0 0.0
    %4088 = vmatpush1.msra.mxu0 0.0
    %4089 = vmatprep.subr.mxu0 0.0
    %4090 = vmatpush1.msra.mxu0 0.0
    %4091 = vmatprep.mubr.f32.mxu0 0.0
    %4092 = vmatmul.mubr.f32.gmra.mrb[0].mxu0 %v3496
    %v4093 = vpop.f32.mrb[0].mxu0
    %v4094 = vadd.f32 0.0, %v4093
    %v4095 = vpop.f32.mrb[0].mxu0
    %v4096 = vadd.f32 0.0, %v4095
    %4097 = vdwg.mxu0
    %v4098 = vadd.f32 %v3881, %v4023
    %v4099 = vadd.f32 %v3883, %v4025
    %v4100 = vadd.f32 %v3952, %v4094
    %v4101 = vadd.f32 %v3954, %v4096
    %v4102 = vxor.u32 %v4098, 2147483648
    %v4103 = vxor.u32 %v4099, 2147483648
    %v4104 = vxor.u32 %v4100, 2147483648
    %v4105 = vmul.f32 %v4102, 1.442695
    %v4106 = vpow.pop %v4105
    %v4107 = vmul.f32 %v4103, 1.442695
    %v4108 = vpow.pop %v4107
    %v4109 = vmul.f32 %v4104, 1.442695
    %v4110 = vpow.pop %v4109
    %v4111 = vadd.f32 %v4106, 1.0
    %v4112 = vadd.f32 %v4108, 1.0
    %v4113 = vadd.f32 %v4110, 1.0
    %v4114 = vrcp.pop %v4111
    %v4115 = vmul.f32 1.0, %v4114
    %v4116 = vrcp.pop %v4112
    %v4117 = vmul.f32 1.0, %v4116
    %v4118 = vrcp.pop %v4113
    %v4119 = vmul.f32 1.0, %v4118
    %v4120 = vtanh.pop %v4101
    %v4121 = vmul.f32 %v4117, %v3494
    %v4122 = vmul.f32 %v4115, %v4120
    %v4123 = vadd.f32 %v4121, %v4122
    %v4124 = vtanh.pop %v4123
    %v4125 = vmul.f32 %v4119, %v4124
    %v4126 = vrot.slane %v293, 6
    %v4127 = vrot.slane %v294, 5
    %v4128 = vsel %vm319, %v4127, %v4126
    %v4129 = vsel %vm321, %v4128, 0
    %4131 = vmatprep.subr.mxu0 %v92
    %4132 = vmatpush1.msra.mxu0 %v91
    %4133 = vmatprep.subr.mxu0 %v329
    %4134 = vmatpush1.msra.mxu0 %v326
    %4135 = vmatprep.subr.mxu0 0.0
    %4136 = vmatpush1.msra.mxu0 0.0
    %4137 = vmatprep.subr.mxu0 0.0
    %4138 = vmatpush1.msra.mxu0 0.0
    %4139 = vmatprep.subr.mxu0 0.0
    %4140 = vmatpush1.msra.mxu0 0.0
    %4141 = vmatprep.subr.mxu0 0.0
    %4142 = vmatpush1.msra.mxu0 0.0
    %4143 = vmatprep.subr.mxu0 0.0
    %4144 = vmatpush1.msra.mxu0 0.0
    %4145 = vmatprep.subr.mxu0 0.0
    %4146 = vmatpush1.msra.mxu0 0.0
    %4147 = vmatprep.subr.mxu0 0.0
    %4148 = vmatpush1.msra.mxu0 0.0
    %4149 = vmatprep.subr.mxu0 0.0
    %4150 = vmatpush1.msra.mxu0 0.0
    %4151 = vmatprep.subr.mxu0 0.0
    %4152 = vmatpush1.msra.mxu0 0.0
    %4153 = vmatprep.subr.mxu0 0.0
    %4154 = vmatpush1.msra.mxu0 0.0
    %4155 = vmatprep.subr.mxu0 0.0
    %4156 = vmatpush1.msra.mxu0 0.0
    %4157 = vmatprep.subr.mxu0 0.0
    %4158 = vmatpush1.msra.mxu0 0.0
    %4159 = vmatprep.subr.mxu0 0.0
    %4160 = vmatpush1.msra.mxu0 0.0
    %4161 = vmatprep.subr.mxu0 0.0
    %4162 = vmatpush1.msra.mxu0 0.0
    %4163 = vmatprep.subr.mxu0 0.0
    %4164 = vmatpush1.msra.mxu0 0.0
    %4165 = vmatprep.subr.mxu0 0.0
    %4166 = vmatpush1.msra.mxu0 0.0
    %4167 = vmatprep.subr.mxu0 0.0
    %4168 = vmatpush1.msra.mxu0 0.0
    %4169 = vmatprep.subr.mxu0 0.0
    %4170 = vmatpush1.msra.mxu0 0.0
    %4171 = vmatprep.subr.mxu0 0.0
    %4172 = vmatpush1.msra.mxu0 0.0
    %4173 = vmatprep.subr.mxu0 0.0
    %4174 = vmatpush1.msra.mxu0 0.0
    %4175 = vmatprep.subr.mxu0 0.0
    %4176 = vmatpush1.msra.mxu0 0.0
    %4177 = vmatprep.subr.mxu0 0.0
    %4178 = vmatpush1.msra.mxu0 0.0
    %4179 = vmatprep.subr.mxu0 0.0
    %4180 = vmatpush1.msra.mxu0 0.0
    %4181 = vmatprep.subr.mxu0 0.0
    %4182 = vmatpush1.msra.mxu0 0.0
    %4183 = vmatprep.subr.mxu0 0.0
    %4184 = vmatpush1.msra.mxu0 0.0
    %4185 = vmatprep.subr.mxu0 0.0
    %4186 = vmatpush1.msra.mxu0 0.0
    %4187 = vmatprep.subr.mxu0 0.0
    %4188 = vmatpush1.msra.mxu0 0.0
    %4189 = vmatprep.subr.mxu0 0.0
    %4190 = vmatpush1.msra.mxu0 0.0
    %4191 = vmatprep.subr.mxu0 0.0
    %4192 = vmatpush1.msra.mxu0 0.0
    %4193 = vmatprep.subr.mxu0 0.0
    %4194 = vmatpush1.msra.mxu0 0.0
    %4195 = vmatprep.mubr.f32.mxu0 0.0
    %4196 = vmatmul.mubr.f32.gmra.mrb[0].mxu0 %v4129
    %v4197 = vpop.f32.mrb[0].mxu0
    %v4198 = vadd.f32 %v299, %v4197
    %v4199 = vpop.f32.mrb[0].mxu0
    %v4200 = vadd.f32 %v303, %v4199
    %4201 = vdwg.mxu0
    %4202 = vmatprep.subr.mxu0 %v94
    %4203 = vmatpush1.msra.mxu0 %v93
    %4204 = vmatprep.subr.mxu0 %v335
    %4205 = vmatpush1.msra.mxu0 %v332
    %4206 = vmatprep.subr.mxu0 0.0
    %4207 = vmatpush1.msra.mxu0 0.0
    %4208 = vmatprep.subr.mxu0 0.0
    %4209 = vmatpush1.msra.mxu0 0.0
    %4210 = vmatprep.subr.mxu0 0.0
    %4211 = vmatpush1.msra.mxu0 0.0
    %4212 = vmatprep.subr.mxu0 0.0
    %4213 = vmatpush1.msra.mxu0 0.0
    %4214 = vmatprep.subr.mxu0 0.0
    %4215 = vmatpush1.msra.mxu0 0.0
    %4216 = vmatprep.subr.mxu0 0.0
    %4217 = vmatpush1.msra.mxu0 0.0
    %4218 = vmatprep.subr.mxu0 0.0
    %4219 = vmatpush1.msra.mxu0 0.0
    %4220 = vmatprep.subr.mxu0 0.0
    %4221 = vmatpush1.msra.mxu0 0.0
    %4222 = vmatprep.subr.mxu0 0.0
    %4223 = vmatpush1.msra.mxu0 0.0
    %4224 = vmatprep.subr.mxu0 0.0
    %4225 = vmatpush1.msra.mxu0 0.0
    %4226 = vmatprep.subr.mxu0 0.0
    %4227 = vmatpush1.msra.mxu0 0.0
    %4228 = vmatprep.subr.mxu0 0.0
    %4229 = vmatpush1.msra.mxu0 0.0
    %4230 = vmatprep.subr.mxu0 0.0
    %4231 = vmatpush1.msra.mxu0 0.0
    %4232 = vmatprep.subr.mxu0 0.0
    %4233 = vmatpush1.msra.mxu0 0.0
    %4234 = vmatprep.subr.mxu0 0.0
    %4235 = vmatpush1.msra.mxu0 0.0
    %4236 = vmatprep.subr.mxu0 0.0
    %4237 = vmatpush1.msra.mxu0 0.0
    %4238 = vmatprep.subr.mxu0 0.0
    %4239 = vmatpush1.msra.mxu0 0.0
    %4240 = vmatprep.subr.mxu0 0.0
    %4241 = vmatpush1.msra.mxu0 0.0
    %4242 = vmatprep.subr.mxu0 0.0
    %4243 = vmatpush1.msra.mxu0 0.0
    %4244 = vmatprep.subr.mxu0 0.0
    %4245 = vmatpush1.msra.mxu0 0.0
    %4246 = vmatprep.subr.mxu0 0.0
    %4247 = vmatpush1.msra.mxu0 0.0
    %4248 = vmatprep.subr.mxu0 0.0
    %4249 = vmatpush1.msra.mxu0 0.0
    %4250 = vmatprep.subr.mxu0 0.0
    %4251 = vmatpush1.msra.mxu0 0.0
    %4252 = vmatprep.subr.mxu0 0.0
    %4253 = vmatpush1.msra.mxu0 0.0
    %4254 = vmatprep.subr.mxu0 0.0
    %4255 = vmatpush1.msra.mxu0 0.0
    %4256 = vmatprep.subr.mxu0 0.0
    %4257 = vmatpush1.msra.mxu0 0.0
    %4258 = vmatprep.subr.mxu0 0.0
    %4259 = vmatpush1.msra.mxu0 0.0
    %4260 = vmatprep.subr.mxu0 0.0
    %4261 = vmatpush1.msra.mxu0 0.0
    %4262 = vmatprep.subr.mxu0 0.0
    %4263 = vmatpush1.msra.mxu0 0.0
    %4264 = vmatprep.subr.mxu0 0.0
    %4265 = vmatpush1.msra.mxu0 0.0
    %4266 = vmatprep.mubr.f32.mxu0 0.0
    %4267 = vmatmul.mubr.f32.gmra.mrb[0].mxu0 %v4129
    %v4268 = vpop.f32.mrb[0].mxu0
    %v4269 = vadd.f32 %v307, %v4268
    %v4270 = vpop.f32.mrb[0].mxu0
    %v4271 = vadd.f32 %v311, %v4270
    %4272 = vdwg.mxu0
    %4273 = vmatprep.subr.mxu0 %v164
    %4274 = vmatpush1.msra.mxu0 %v163
    %4275 = vmatprep.subr.mxu0 %v168
    %4276 = vmatpush1.msra.mxu0 %v167
    %4277 = vmatprep.subr.mxu0 %v172
    %4278 = vmatpush1.msra.mxu0 %v171
    %4279 = vmatprep.subr.mxu0 %v176
    %4280 = vmatpush1.msra.mxu0 %v175
    %4281 = vmatprep.subr.mxu0 %v180
    %4282 = vmatpush1.msra.mxu0 %v179
    %4283 = vmatprep.subr.mxu0 %v184
    %4284 = vmatpush1.msra.mxu0 %v183
    %4285 = vmatprep.subr.mxu0 %v188
    %4286 = vmatpush1.msra.mxu0 %v187
    %4287 = vmatprep.subr.mxu0 %v192
    %4288 = vmatpush1.msra.mxu0 %v191
    %4289 = vmatprep.subr.mxu0 %v196
    %4290 = vmatpush1.msra.mxu0 %v195
    %4291 = vmatprep.subr.mxu0 %v200
    %4292 = vmatpush1.msra.mxu0 %v199
    %4293 = vmatprep.subr.mxu0 %v204
    %4294 = vmatpush1.msra.mxu0 %v203
    %4295 = vmatprep.subr.mxu0 %v208
    %4296 = vmatpush1.msra.mxu0 %v207
    %4297 = vmatprep.subr.mxu0 %v212
    %4298 = vmatpush1.msra.mxu0 %v211
    %4299 = vmatprep.subr.mxu0 %v216
    %4300 = vmatpush1.msra.mxu0 %v215
    %4301 = vmatprep.subr.mxu0 %v220
    %4302 = vmatpush1.msra.mxu0 %v219
    %4303 = vmatprep.subr.mxu0 %v224
    %4304 = vmatpush1.msra.mxu0 %v223
    %4305 = vmatprep.subr.mxu0 0.0
    %4306 = vmatpush1.msra.mxu0 0.0
    %4307 = vmatprep.subr.mxu0 0.0
    %4308 = vmatpush1.msra.mxu0 0.0
    %4309 = vmatprep.subr.mxu0 0.0
    %4310 = vmatpush1.msra.mxu0 0.0
    %4311 = vmatprep.subr.mxu0 0.0
    %4312 = vmatpush1.msra.mxu0 0.0
    %4313 = vmatprep.subr.mxu0 0.0
    %4314 = vmatpush1.msra.mxu0 0.0
    %4315 = vmatprep.subr.mxu0 0.0
    %4316 = vmatpush1.msra.mxu0 0.0
    %4317 = vmatprep.subr.mxu0 0.0
    %4318 = vmatpush1.msra.mxu0 0.0
    %4319 = vmatprep.subr.mxu0 0.0
    %4320 = vmatpush1.msra.mxu0 0.0
    %4321 = vmatprep.subr.mxu0 0.0
    %4322 = vmatpush1.msra.mxu0 0.0
    %4323 = vmatprep.subr.mxu0 0.0
    %4324 = vmatpush1.msra.mxu0 0.0
    %4325 = vmatprep.subr.mxu0 0.0
    %4326 = vmatpush1.msra.mxu0 0.0
    %4327 = vmatprep.subr.mxu0 0.0
    %4328 = vmatpush1.msra.mxu0 0.0
    %4329 = vmatprep.subr.mxu0 0.0
    %4330 = vmatpush1.msra.mxu0 0.0
    %4331 = vmatprep.subr.mxu0 0.0
    %4332 = vmatpush1.msra.mxu0 0.0
    %4333 = vmatprep.subr.mxu0 0.0
    %4334 = vmatpush1.msra.mxu0 0.0
    %4335 = vmatprep.subr.mxu0 0.0
    %4336 = vmatpush1.msra.mxu0 0.0
    %4337 = vmatprep.mubr.f32.mxu0 0.0
    %4338 = vmatmul.mubr.f32.gmra.mrb[0].mxu0 %v3813
    %v4339 = vpop.f32.mrb[0].mxu0
    %v4340 = vadd.f32 0.0, %v4339
    %v4341 = vpop.f32.mrb[0].mxu0
    %v4342 = vadd.f32 0.0, %v4341
    %4343 = vdwg.mxu0
    %4344 = vmatprep.subr.mxu0 %v166
    %4345 = vmatpush1.msra.mxu0 %v165
    %4346 = vmatprep.subr.mxu0 %v170
    %4347 = vmatpush1.msra.mxu0 %v169
    %4348 = vmatprep.subr.mxu0 %v174
    %4349 = vmatpush1.msra.mxu0 %v173
    %4350 = vmatprep.subr.mxu0 %v178
    %4351 = vmatpush1.msra.mxu0 %v177
    %4352 = vmatprep.subr.mxu0 %v182
    %4353 = vmatpush1.msra.mxu0 %v181
    %4354 = vmatprep.subr.mxu0 %v186
    %4355 = vmatpush1.msra.mxu0 %v185
    %4356 = vmatprep.subr.mxu0 %v190
    %4357 = vmatpush1.msra.mxu0 %v189
    %4358 = vmatprep.subr.mxu0 %v194
    %4359 = vmatpush1.msra.mxu0 %v193
    %4360 = vmatprep.subr.mxu0 %v198
    %4361 = vmatpush1.msra.mxu0 %v197
    %4362 = vmatprep.subr.mxu0 %v202
    %4363 = vmatpush1.msra.mxu0 %v201
    %4364 = vmatprep.subr.mxu0 %v206
    %4365 = vmatpush1.msra.mxu0 %v205
    %4366 = vmatprep.subr.mxu0 %v210
    %4367 = vmatpush1.msra.mxu0 %v209
    %4368 = vmatprep.subr.mxu0 %v214
    %4369 = vmatpush1.msra.mxu0 %v213
    %4370 = vmatprep.subr.mxu0 %v218
    %4371 = vmatpush1.msra.mxu0 %v217
    %4372 = vmatprep.subr.mxu0 %v222
    %4373 = vmatpush1.msra.mxu0 %v221
    %4374 = vmatprep.subr.mxu0 %v226
    %4375 = vmatpush1.msra.mxu0 %v225
    %4376 = vmatprep.subr.mxu0 0.0
    %4377 = vmatpush1.msra.mxu0 0.0
    %4378 = vmatprep.subr.mxu0 0.0
    %4379 = vmatpush1.msra.mxu0 0.0
    %4380 = vmatprep.subr.mxu0 0.0
    %4381 = vmatpush1.msra.mxu0 0.0
    %4382 = vmatprep.subr.mxu0 0.0
    %4383 = vmatpush1.msra.mxu0 0.0
    %4384 = vmatprep.subr.mxu0 0.0
    %4385 = vmatpush1.msra.mxu0 0.0
    %4386 = vmatprep.subr.mxu0 0.0
    %4387 = vmatpush1.msra.mxu0 0.0
    %4388 = vmatprep.subr.mxu0 0.0
    %4389 = vmatpush1.msra.mxu0 0.0
    %4390 = vmatprep.subr.mxu0 0.0
    %4391 = vmatpush1.msra.mxu0 0.0
    %4392 = vmatprep.subr.mxu0 0.0
    %4393 = vmatpush1.msra.mxu0 0.0
    %4394 = vmatprep.subr.mxu0 0.0
    %4395 = vmatpush1.msra.mxu0 0.0
    %4396 = vmatprep.subr.mxu0 0.0
    %4397 = vmatpush1.msra.mxu0 0.0
    %4398 = vmatprep.subr.mxu0 0.0
    %4399 = vmatpush1.msra.mxu0 0.0
    %4400 = vmatprep.subr.mxu0 0.0
    %4401 = vmatpush1.msra.mxu0 0.0
    %4402 = vmatprep.subr.mxu0 0.0
    %4403 = vmatpush1.msra.mxu0 0.0
    %4404 = vmatprep.subr.mxu0 0.0
    %4405 = vmatpush1.msra.mxu0 0.0
    %4406 = vmatprep.subr.mxu0 0.0
    %4407 = vmatpush1.msra.mxu0 0.0
    %4408 = vmatprep.mubr.f32.mxu0 0.0
    %4409 = vmatmul.mubr.f32.gmra.mrb[0].mxu0 %v3813
    %v4410 = vpop.f32.mrb[0].mxu0
    %v4411 = vadd.f32 0.0, %v4410
    %v4412 = vpop.f32.mrb[0].mxu0
    %v4413 = vadd.f32 0.0, %v4412
    %4414 = vdwg.mxu0
    %v4415 = vadd.f32 %v4198, %v4340
    %v4416 = vadd.f32 %v4200, %v4342
    %v4417 = vadd.f32 %v4269, %v4411
    %v4418 = vadd.f32 %v4271, %v4413
    %v4419 = vxor.u32 %v4415, 2147483648
    %v4420 = vxor.u32 %v4416, 2147483648
    %v4421 = vxor.u32 %v4417, 2147483648
    %v4422 = vmul.f32 %v4419, 1.442695
    %v4423 = vpow.pop %v4422
    %v4424 = vmul.f32 %v4420, 1.442695
    %v4425 = vpow.pop %v4424
    %v4426 = vmul.f32 %v4421, 1.442695
    %v4427 = vpow.pop %v4426
    %v4428 = vadd.f32 %v4423, 1.0
    %v4429 = vadd.f32 %v4425, 1.0
    %v4430 = vadd.f32 %v4427, 1.0
    %v4431 = vrcp.pop %v4428
    %v4432 = vmul.f32 1.0, %v4431
    %v4433 = vrcp.pop %v4429
    %v4434 = vmul.f32 1.0, %v4433
    %v4435 = vrcp.pop %v4430
    %v4436 = vmul.f32 1.0, %v4435
    %v4437 = vtanh.pop %v4418
    %v4438 = vmul.f32 %v4434, %v3811
    %v4439 = vmul.f32 %v4432, %v4437
    %v4440 = vadd.f32 %v4438, %v4439
    %v4441 = vtanh.pop %v4440
    %v4442 = vmul.f32 %v4436, %v4441
    %4443 = vmatprep.subr.mxu0 %v100
    %4444 = vmatpush1.msra.mxu0 %v99
    %4445 = vmatprep.subr.mxu0 %v104
    %4446 = vmatpush1.msra.mxu0 %v103
    %4447 = vmatprep.subr.mxu0 %v108
    %4448 = vmatpush1.msra.mxu0 %v107
    %4449 = vmatprep.subr.mxu0 %v112
    %4450 = vmatpush1.msra.mxu0 %v111
    %4451 = vmatprep.subr.mxu0 %v116
    %4452 = vmatpush1.msra.mxu0 %v115
    %4453 = vmatprep.subr.mxu0 %v120
    %4454 = vmatpush1.msra.mxu0 %v119
    %4455 = vmatprep.subr.mxu0 %v124
    %4456 = vmatpush1.msra.mxu0 %v123
    %4457 = vmatprep.subr.mxu0 %v128
    %4458 = vmatpush1.msra.mxu0 %v127
    %4459 = vmatprep.subr.mxu0 %v132
    %4460 = vmatpush1.msra.mxu0 %v131
    %4461 = vmatprep.subr.mxu0 %v136
    %4462 = vmatpush1.msra.mxu0 %v135
    %4463 = vmatprep.subr.mxu0 %v140
    %4464 = vmatpush1.msra.mxu0 %v139
    %4465 = vmatprep.subr.mxu0 %v144
    %4466 = vmatpush1.msra.mxu0 %v143
    %4467 = vmatprep.subr.mxu0 %v148
    %4468 = vmatpush1.msra.mxu0 %v147
    %4469 = vmatprep.subr.mxu0 %v152
    %4470 = vmatpush1.msra.mxu0 %v151
    %4471 = vmatprep.subr.mxu0 %v156
    %4472 = vmatpush1.msra.mxu0 %v155
    %4473 = vmatprep.subr.mxu0 %v160
    %4474 = vmatpush1.msra.mxu0 %v159
    %4475 = vmatprep.subr.mxu0 0.0
    %4476 = vmatpush1.msra.mxu0 0.0
    %4477 = vmatprep.subr.mxu0 0.0
    %4478 = vmatpush1.msra.mxu0 0.0
    %4479 = vmatprep.subr.mxu0 0.0
    %4480 = vmatpush1.msra.mxu0 0.0
    %4481 = vmatprep.subr.mxu0 0.0
    %4482 = vmatpush1.msra.mxu0 0.0
    %4483 = vmatprep.subr.mxu0 0.0
    %4484 = vmatpush1.msra.mxu0 0.0
    %4485 = vmatprep.subr.mxu0 0.0
    %4486 = vmatpush1.msra.mxu0 0.0
    %4487 = vmatprep.subr.mxu0 0.0
    %4488 = vmatpush1.msra.mxu0 0.0
    %4489 = vmatprep.subr.mxu0 0.0
    %4490 = vmatpush1.msra.mxu0 0.0
    %4491 = vmatprep.subr.mxu0 0.0
    %4492 = vmatpush1.msra.mxu0 0.0
    %4493 = vmatprep.subr.mxu0 0.0
    %4494 = vmatpush1.msra.mxu0 0.0
    %4495 = vmatprep.subr.mxu0 0.0
    %4496 = vmatpush1.msra.mxu0 0.0
    %4497 = vmatprep.subr.mxu0 0.0
    %4498 = vmatpush1.msra.mxu0 0.0
    %4499 = vmatprep.subr.mxu0 0.0
    %4500 = vmatpush1.msra.mxu0 0.0
    %4501 = vmatprep.subr.mxu0 0.0
    %4502 = vmatpush1.msra.mxu0 0.0
    %4503 = vmatprep.subr.mxu0 0.0
    %4504 = vmatpush1.msra.mxu0 0.0
    %4505 = vmatprep.subr.mxu0 0.0
    %4506 = vmatpush1.msra.mxu0 0.0
    %4507 = vmatprep.mubr.f32.mxu0 0.0
    %4508 = vmatmul.mubr.f32.gmra.mrb[0].mxu0 %v4442
    %v4509 = vpop.f32.mrb[0].mxu0
    %v4510 = vadd.f32 %v653, %v4509
    %v4511 = vpop.f32.mrb[0].mxu0
    %v4512 = vadd.f32 %v657, %v4511
    %4513 = vdwg.mxu0
    %4514 = vmatprep.subr.mxu0 %v102
    %4515 = vmatpush1.msra.mxu0 %v101
    %4516 = vmatprep.subr.mxu0 %v106
    %4517 = vmatpush1.msra.mxu0 %v105
    %4518 = vmatprep.subr.mxu0 %v110
    %4519 = vmatpush1.msra.mxu0 %v109
    %4520 = vmatprep.subr.mxu0 %v114
    %4521 = vmatpush1.msra.mxu0 %v113
    %4522 = vmatprep.subr.mxu0 %v118
    %4523 = vmatpush1.msra.mxu0 %v117
    %4524 = vmatprep.subr.mxu0 %v122
    %4525 = vmatpush1.msra.mxu0 %v121
    %4526 = vmatprep.subr.mxu0 %v126
    %4527 = vmatpush1.msra.mxu0 %v125
    %4528 = vmatprep.subr.mxu0 %v130
    %4529 = vmatpush1.msra.mxu0 %v129
    %4530 = vmatprep.subr.mxu0 %v134
    %4531 = vmatpush1.msra.mxu0 %v133
    %4532 = vmatprep.subr.mxu0 %v138
    %4533 = vmatpush1.msra.mxu0 %v137
    %4534 = vmatprep.subr.mxu0 %v142
    %4535 = vmatpush1.msra.mxu0 %v141
    %4536 = vmatprep.subr.mxu0 %v146
    %4537 = vmatpush1.msra.mxu0 %v145
    %4538 = vmatprep.subr.mxu0 %v150
    %4539 = vmatpush1.msra.mxu0 %v149
    %4540 = vmatprep.subr.mxu0 %v154
    %4541 = vmatpush1.msra.mxu0 %v153
    %4542 = vmatprep.subr.mxu0 %v158
    %4543 = vmatpush1.msra.mxu0 %v157
    %4544 = vmatprep.subr.mxu0 %v162
    %4545 = vmatpush1.msra.mxu0 %v161
    %4546 = vmatprep.subr.mxu0 0.0
    %4547 = vmatpush1.msra.mxu0 0.0
    %4548 = vmatprep.subr.mxu0 0.0
    %4549 = vmatpush1.msra.mxu0 0.0
    %4550 = vmatprep.subr.mxu0 0.0
    %4551 = vmatpush1.msra.mxu0 0.0
    %4552 = vmatprep.subr.mxu0 0.0
    %4553 = vmatpush1.msra.mxu0 0.0
    %4554 = vmatprep.subr.mxu0 0.0
    %4555 = vmatpush1.msra.mxu0 0.0
    %4556 = vmatprep.subr.mxu0 0.0
    %4557 = vmatpush1.msra.mxu0 0.0
    %4558 = vmatprep.subr.mxu0 0.0
    %4559 = vmatpush1.msra.mxu0 0.0
    %4560 = vmatprep.subr.mxu0 0.0
    %4561 = vmatpush1.msra.mxu0 0.0
    %4562 = vmatprep.subr.mxu0 0.0
    %4563 = vmatpush1.msra.mxu0 0.0
    %4564 = vmatprep.subr.mxu0 0.0
    %4565 = vmatpush1.msra.mxu0 0.0
    %4566 = vmatprep.subr.mxu0 0.0
    %4567 = vmatpush1.msra.mxu0 0.0
    %4568 = vmatprep.subr.mxu0 0.0
    %4569 = vmatpush1.msra.mxu0 0.0
    %4570 = vmatprep.subr.mxu0 0.0
    %4571 = vmatpush1.msra.mxu0 0.0
    %4572 = vmatprep.subr.mxu0 0.0
    %4573 = vmatpush1.msra.mxu0 0.0
    %4574 = vmatprep.subr.mxu0 0.0
    %4575 = vmatpush1.msra.mxu0 0.0
    %4576 = vmatprep.subr.mxu0 0.0
    %4577 = vmatpush1.msra.mxu0 0.0
    %4578 = vmatprep.mubr.f32.mxu0 0.0
    %4579 = vmatmul.mubr.f32.gmra.mrb[0].mxu0 %v4442
    %v4580 = vpop.f32.mrb[0].mxu0
    %v4581 = vadd.f32 %v661, %v4580
    %v4582 = vpop.f32.mrb[0].mxu0
    %v4583 = vadd.f32 %v665, %v4582
    %4584 = vdwg.mxu0
    %4585 = vmatprep.subr.mxu0 %v228
    %4586 = vmatpush1.msra.mxu0 %v227
    %4587 = vmatprep.subr.mxu0 %v232
    %4588 = vmatpush1.msra.mxu0 %v231
    %4589 = vmatprep.subr.mxu0 %v236
    %4590 = vmatpush1.msra.mxu0 %v235
    %4591 = vmatprep.subr.mxu0 %v240
    %4592 = vmatpush1.msra.mxu0 %v239
    %4593 = vmatprep.subr.mxu0 %v244
    %4594 = vmatpush1.msra.mxu0 %v243
    %4595 = vmatprep.subr.mxu0 %v248
    %4596 = vmatpush1.msra.mxu0 %v247
    %4597 = vmatprep.subr.mxu0 %v252
    %4598 = vmatpush1.msra.mxu0 %v251
    %4599 = vmatprep.subr.mxu0 %v256
    %4600 = vmatpush1.msra.mxu0 %v255
    %4601 = vmatprep.subr.mxu0 %v260
    %4602 = vmatpush1.msra.mxu0 %v259
    %4603 = vmatprep.subr.mxu0 %v264
    %4604 = vmatpush1.msra.mxu0 %v263
    %4605 = vmatprep.subr.mxu0 %v268
    %4606 = vmatpush1.msra.mxu0 %v267
    %4607 = vmatprep.subr.mxu0 %v272
    %4608 = vmatpush1.msra.mxu0 %v271
    %4609 = vmatprep.subr.mxu0 %v276
    %4610 = vmatpush1.msra.mxu0 %v275
    %4611 = vmatprep.subr.mxu0 %v280
    %4612 = vmatpush1.msra.mxu0 %v279
    %4613 = vmatprep.subr.mxu0 %v284
    %4614 = vmatpush1.msra.mxu0 %v283
    %4615 = vmatprep.subr.mxu0 %v288
    %4616 = vmatpush1.msra.mxu0 %v287
    %4617 = vmatprep.subr.mxu0 0.0
    %4618 = vmatpush1.msra.mxu0 0.0
    %4619 = vmatprep.subr.mxu0 0.0
    %4620 = vmatpush1.msra.mxu0 0.0
    %4621 = vmatprep.subr.mxu0 0.0
    %4622 = vmatpush1.msra.mxu0 0.0
    %4623 = vmatprep.subr.mxu0 0.0
    %4624 = vmatpush1.msra.mxu0 0.0
    %4625 = vmatprep.subr.mxu0 0.0
    %4626 = vmatpush1.msra.mxu0 0.0
    %4627 = vmatprep.subr.mxu0 0.0
    %4628 = vmatpush1.msra.mxu0 0.0
    %4629 = vmatprep.subr.mxu0 0.0
    %4630 = vmatpush1.msra.mxu0 0.0
    %4631 = vmatprep.subr.mxu0 0.0
    %4632 = vmatpush1.msra.mxu0 0.0
    %4633 = vmatprep.subr.mxu0 0.0
    %4634 = vmatpush1.msra.mxu0 0.0
    %4635 = vmatprep.subr.mxu0 0.0
    %4636 = vmatpush1.msra.mxu0 0.0
    %4637 = vmatprep.subr.mxu0 0.0
    %4638 = vmatpush1.msra.mxu0 0.0
    %4639 = vmatprep.subr.mxu0 0.0
    %4640 = vmatpush1.msra.mxu0 0.0
    %4641 = vmatprep.subr.mxu0 0.0
    %4642 = vmatpush1.msra.mxu0 0.0
    %4643 = vmatprep.subr.mxu0 0.0
    %4644 = vmatpush1.msra.mxu0 0.0
    %4645 = vmatprep.subr.mxu0 0.0
    %4646 = vmatpush1.msra.mxu0 0.0
    %4647 = vmatprep.subr.mxu0 0.0
    %4648 = vmatpush1.msra.mxu0 0.0
    %4649 = vmatprep.mubr.f32.mxu0 0.0
    %4650 = vmatmul.mubr.f32.gmra.mrb[0].mxu0 %v4125
    %v4651 = vpop.f32.mrb[0].mxu0
    %v4652 = vadd.f32 0.0, %v4651
    %v4653 = vpop.f32.mrb[0].mxu0
    %v4654 = vadd.f32 0.0, %v4653
    %4655 = vdwg.mxu0
    %4656 = vmatprep.subr.mxu0 %v230
    %4657 = vmatpush1.msra.mxu0 %v229
    %4658 = vmatprep.subr.mxu0 %v234
    %4659 = vmatpush1.msra.mxu0 %v233
    %4660 = vmatprep.subr.mxu0 %v238
    %4661 = vmatpush1.msra.mxu0 %v237
    %4662 = vmatprep.subr.mxu0 %v242
    %4663 = vmatpush1.msra.mxu0 %v241
    %4664 = vmatprep.subr.mxu0 %v246
    %4665 = vmatpush1.msra.mxu0 %v245
    %4666 = vmatprep.subr.mxu0 %v250
    %4667 = vmatpush1.msra.mxu0 %v249
    %4668 = vmatprep.subr.mxu0 %v254
    %4669 = vmatpush1.msra.mxu0 %v253
    %4670 = vmatprep.subr.mxu0 %v258
    %4671 = vmatpush1.msra.mxu0 %v257
    %4672 = vmatprep.subr.mxu0 %v262
    %4673 = vmatpush1.msra.mxu0 %v261
    %4674 = vmatprep.subr.mxu0 %v266
    %4675 = vmatpush1.msra.mxu0 %v265
    %4676 = vmatprep.subr.mxu0 %v270
    %4677 = vmatpush1.msra.mxu0 %v269
    %4678 = vmatprep.subr.mxu0 %v274
    %4679 = vmatpush1.msra.mxu0 %v273
    %4680 = vmatprep.subr.mxu0 %v278
    %4681 = vmatpush1.msra.mxu0 %v277
    %4682 = vmatprep.subr.mxu0 %v282
    %4683 = vmatpush1.msra.mxu0 %v281
    %4684 = vmatprep.subr.mxu0 %v286
    %4685 = vmatpush1.msra.mxu0 %v285
    %4686 = vmatprep.subr.mxu0 %v290
    %4687 = vmatpush1.msra.mxu0 %v289
    %4688 = vmatprep.subr.mxu0 0.0
    %4689 = vmatpush1.msra.mxu0 0.0
    %4690 = vmatprep.subr.mxu0 0.0
    %4691 = vmatpush1.msra.mxu0 0.0
    %4692 = vmatprep.subr.mxu0 0.0
    %4693 = vmatpush1.msra.mxu0 0.0
    %4694 = vmatprep.subr.mxu0 0.0
    %4695 = vmatpush1.msra.mxu0 0.0
    %4696 = vmatprep.subr.mxu0 0.0
    %4697 = vmatpush1.msra.mxu0 0.0
    %4698 = vmatprep.subr.mxu0 0.0
    %4699 = vmatpush1.msra.mxu0 0.0
    %4700 = vmatprep.subr.mxu0 0.0
    %4701 = vmatpush1.msra.mxu0 0.0
    %4702 = vmatprep.subr.mxu0 0.0
    %4703 = vmatpush1.msra.mxu0 0.0
    %4704 = vmatprep.subr.mxu0 0.0
    %4705 = vmatpush1.msra.mxu0 0.0
    %4706 = vmatprep.subr.mxu0 0.0
    %4707 = vmatpush1.msra.mxu0 0.0
    %4708 = vmatprep.subr.mxu0 0.0
    %4709 = vmatpush1.msra.mxu0 0.0
    %4710 = vmatprep.subr.mxu0 0.0
    %4711 = vmatpush1.msra.mxu0 0.0
    %4712 = vmatprep.subr.mxu0 0.0
    %4713 = vmatpush1.msra.mxu0 0.0
    %4714 = vmatprep.subr.mxu0 0.0
    %4715 = vmatpush1.msra.mxu0 0.0
    %4716 = vmatprep.subr.mxu0 0.0
    %4717 = vmatpush1.msra.mxu0 0.0
    %4718 = vmatprep.subr.mxu0 0.0
    %4719 = vmatpush1.msra.mxu0 0.0
    %4720 = vmatprep.mubr.f32.mxu0 0.0
    %4721 = vmatmul.mubr.f32.gmra.mrb[0].mxu0 %v4125
    %v4722 = vpop.f32.mrb[0].mxu0
    %v4723 = vadd.f32 0.0, %v4722
    %v4724 = vpop.f32.mrb[0].mxu0
    %v4725 = vadd.f32 0.0, %v4724
    %4726 = vdwg.mxu0
    %v4727 = vadd.f32 %v4510, %v4652
    %v4728 = vadd.f32 %v4512, %v4654
    %v4729 = vadd.f32 %v4581, %v4723
    %v4730 = vadd.f32 %v4583, %v4725
    %v4731 = vxor.u32 %v4727, 2147483648
    %v4732 = vxor.u32 %v4728, 2147483648
    %v4733 = vxor.u32 %v4729, 2147483648
    %v4734 = vmul.f32 %v4731, 1.442695
    %v4735 = vpow.pop %v4734
    %v4736 = vmul.f32 %v4732, 1.442695
    %v4737 = vpow.pop %v4736
    %v4738 = vmul.f32 %v4733, 1.442695
    %v4739 = vpow.pop %v4738
    %v4740 = vadd.f32 %v4735, 1.0
    %v4741 = vadd.f32 %v4737, 1.0
    %v4742 = vadd.f32 %v4739, 1.0
    %v4743 = vrcp.pop %v4740
    %v4744 = vmul.f32 1.0, %v4743
    %v4745 = vrcp.pop %v4741
    %v4746 = vmul.f32 1.0, %v4745
    %v4747 = vrcp.pop %v4742
    %v4748 = vmul.f32 1.0, %v4747
    %v4749 = vtanh.pop %v4730
    %v4750 = vmul.f32 %v4746, %v4123
    %v4751 = vmul.f32 %v4744, %v4749
    %v4752 = vadd.f32 %v4750, %v4751
    %v4753 = vtanh.pop %v4752
    %v4754 = vmul.f32 %v4748, %v4753
    %v4755 = vrot.slane %v293, 7
    %v4756 = vrot.slane %v294, 6
    %v4757 = vsel %vm319, %v4756, %v4755
    %v4758 = vsel %vm321, %v4757, 0
    %4760 = vmatprep.subr.mxu0 %v92
    %4761 = vmatpush1.msra.mxu0 %v91
    %4762 = vmatprep.subr.mxu0 %v329
    %4763 = vmatpush1.msra.mxu0 %v326
    %4764 = vmatprep.subr.mxu0 0.0
    %4765 = vmatpush1.msra.mxu0 0.0
    %4766 = vmatprep.subr.mxu0 0.0
    %4767 = vmatpush1.msra.mxu0 0.0
    %4768 = vmatprep.subr.mxu0 0.0
    %4769 = vmatpush1.msra.mxu0 0.0
    %4770 = vmatprep.subr.mxu0 0.0
    %4771 = vmatpush1.msra.mxu0 0.0
    %4772 = vmatprep.subr.mxu0 0.0
    %4773 = vmatpush1.msra.mxu0 0.0
    %4774 = vmatprep.subr.mxu0 0.0
    %4775 = vmatpush1.msra.mxu0 0.0
    %4776 = vmatprep.subr.mxu0 0.0
    %4777 = vmatpush1.msra.mxu0 0.0
    %4778 = vmatprep.subr.mxu0 0.0
    %4779 = vmatpush1.msra.mxu0 0.0
    %4780 = vmatprep.subr.mxu0 0.0
    %4781 = vmatpush1.msra.mxu0 0.0
    %4782 = vmatprep.subr.mxu0 0.0
    %4783 = vmatpush1.msra.mxu0 0.0
    %4784 = vmatprep.subr.mxu0 0.0
    %4785 = vmatpush1.msra.mxu0 0.0
    %4786 = vmatprep.subr.mxu0 0.0
    %4787 = vmatpush1.msra.mxu0 0.0
    %4788 = vmatprep.subr.mxu0 0.0
    %4789 = vmatpush1.msra.mxu0 0.0
    %4790 = vmatprep.subr.mxu0 0.0
    %4791 = vmatpush1.msra.mxu0 0.0
    %4792 = vmatprep.subr.mxu0 0.0
    %4793 = vmatpush1.msra.mxu0 0.0
    %4794 = vmatprep.subr.mxu0 0.0
    %4795 = vmatpush1.msra.mxu0 0.0
    %4796 = vmatprep.subr.mxu0 0.0
    %4797 = vmatpush1.msra.mxu0 0.0
    %4798 = vmatprep.subr.mxu0 0.0
    %4799 = vmatpush1.msra.mxu0 0.0
    %4800 = vmatprep.subr.mxu0 0.0
    %4801 = vmatpush1.msra.mxu0 0.0
    %4802 = vmatprep.subr.mxu0 0.0
    %4803 = vmatpush1.msra.mxu0 0.0
    %4804 = vmatprep.subr.mxu0 0.0
    %4805 = vmatpush1.msra.mxu0 0.0
    %4806 = vmatprep.subr.mxu0 0.0
    %4807 = vmatpush1.msra.mxu0 0.0
    %4808 = vmatprep.subr.mxu0 0.0
    %4809 = vmatpush1.msra.mxu0 0.0
    %4810 = vmatprep.subr.mxu0 0.0
    %4811 = vmatpush1.msra.mxu0 0.0
    %4812 = vmatprep.subr.mxu0 0.0
    %4813 = vmatpush1.msra.mxu0 0.0
    %4814 = vmatprep.subr.mxu0 0.0
    %4815 = vmatpush1.msra.mxu0 0.0
    %4816 = vmatprep.subr.mxu0 0.0
    %4817 = vmatpush1.msra.mxu0 0.0
    %4818 = vmatprep.subr.mxu0 0.0
    %4819 = vmatpush1.msra.mxu0 0.0
    %4820 = vmatprep.subr.mxu0 0.0
    %4821 = vmatpush1.msra.mxu0 0.0
    %4822 = vmatprep.subr.mxu0 0.0
    %4823 = vmatpush1.msra.mxu0 0.0
    %4824 = vmatprep.mubr.f32.mxu0 0.0
    %4825 = vmatmul.mubr.f32.gmra.mrb[0].mxu0 %v4758
    %v4826 = vpop.f32.mrb[0].mxu0
    %v4827 = vadd.f32 %v299, %v4826
    %v4828 = vpop.f32.mrb[0].mxu0
    %v4829 = vadd.f32 %v303, %v4828
    %4830 = vdwg.mxu0
    %4831 = vmatprep.subr.mxu0 %v94
    %4832 = vmatpush1.msra.mxu0 %v93
    %4833 = vmatprep.subr.mxu0 %v335
    %4834 = vmatpush1.msra.mxu0 %v332
    %4835 = vmatprep.subr.mxu0 0.0
    %4836 = vmatpush1.msra.mxu0 0.0
    %4837 = vmatprep.subr.mxu0 0.0
    %4838 = vmatpush1.msra.mxu0 0.0
    %4839 = vmatprep.subr.mxu0 0.0
    %4840 = vmatpush1.msra.mxu0 0.0
    %4841 = vmatprep.subr.mxu0 0.0
    %4842 = vmatpush1.msra.mxu0 0.0
    %4843 = vmatprep.subr.mxu0 0.0
    %4844 = vmatpush1.msra.mxu0 0.0
    %4845 = vmatprep.subr.mxu0 0.0
    %4846 = vmatpush1.msra.mxu0 0.0
    %4847 = vmatprep.subr.mxu0 0.0
    %4848 = vmatpush1.msra.mxu0 0.0
    %4849 = vmatprep.subr.mxu0 0.0
    %4850 = vmatpush1.msra.mxu0 0.0
    %4851 = vmatprep.subr.mxu0 0.0
    %4852 = vmatpush1.msra.mxu0 0.0
    %4853 = vmatprep.subr.mxu0 0.0
    %4854 = vmatpush1.msra.mxu0 0.0
    %4855 = vmatprep.subr.mxu0 0.0
    %4856 = vmatpush1.msra.mxu0 0.0
    %4857 = vmatprep.subr.mxu0 0.0
    %4858 = vmatpush1.msra.mxu0 0.0
    %4859 = vmatprep.subr.mxu0 0.0
    %4860 = vmatpush1.msra.mxu0 0.0
    %4861 = vmatprep.subr.mxu0 0.0
    %4862 = vmatpush1.msra.mxu0 0.0
    %4863 = vmatprep.subr.mxu0 0.0
    %4864 = vmatpush1.msra.mxu0 0.0
    %4865 = vmatprep.subr.mxu0 0.0
    %4866 = vmatpush1.msra.mxu0 0.0
    %4867 = vmatprep.subr.mxu0 0.0
    %4868 = vmatpush1.msra.mxu0 0.0
    %4869 = vmatprep.subr.mxu0 0.0
    %4870 = vmatpush1.msra.mxu0 0.0
    %4871 = vmatprep.subr.mxu0 0.0
    %4872 = vmatpush1.msra.mxu0 0.0
    %4873 = vmatprep.subr.mxu0 0.0
    %4874 = vmatpush1.msra.mxu0 0.0
    %4875 = vmatprep.subr.mxu0 0.0
    %4876 = vmatpush1.msra.mxu0 0.0
    %4877 = vmatprep.subr.mxu0 0.0
    %4878 = vmatpush1.msra.mxu0 0.0
    %4879 = vmatprep.subr.mxu0 0.0
    %4880 = vmatpush1.msra.mxu0 0.0
    %4881 = vmatprep.subr.mxu0 0.0
    %4882 = vmatpush1.msra.mxu0 0.0
    %4883 = vmatprep.subr.mxu0 0.0
    %4884 = vmatpush1.msra.mxu0 0.0
    %4885 = vmatprep.subr.mxu0 0.0
    %4886 = vmatpush1.msra.mxu0 0.0
    %4887 = vmatprep.subr.mxu0 0.0
    %4888 = vmatpush1.msra.mxu0 0.0
    %4889 = vmatprep.subr.mxu0 0.0
    %4890 = vmatpush1.msra.mxu0 0.0
    %4891 = vmatprep.subr.mxu0 0.0
    %4892 = vmatpush1.msra.mxu0 0.0
    %4893 = vmatprep.subr.mxu0 0.0
    %4894 = vmatpush1.msra.mxu0 0.0
    %4895 = vmatprep.mubr.f32.mxu0 0.0
    %4896 = vmatmul.mubr.f32.gmra.mrb[0].mxu0 %v4758
    %v4897 = vpop.f32.mrb[0].mxu0
    %v4898 = vadd.f32 %v307, %v4897
    %v4899 = vpop.f32.mrb[0].mxu0
    %v4900 = vadd.f32 %v311, %v4899
    %4901 = vdwg.mxu0
    %4902 = vmatprep.subr.mxu0 %v164
    %4903 = vmatpush1.msra.mxu0 %v163
    %4904 = vmatprep.subr.mxu0 %v168
    %4905 = vmatpush1.msra.mxu0 %v167
    %4906 = vmatprep.subr.mxu0 %v172
    %4907 = vmatpush1.msra.mxu0 %v171
    %4908 = vmatprep.subr.mxu0 %v176
    %4909 = vmatpush1.msra.mxu0 %v175
    %4910 = vmatprep.subr.mxu0 %v180
    %4911 = vmatpush1.msra.mxu0 %v179
    %4912 = vmatprep.subr.mxu0 %v184
    %4913 = vmatpush1.msra.mxu0 %v183
    %4914 = vmatprep.subr.mxu0 %v188
    %4915 = vmatpush1.msra.mxu0 %v187
    %4916 = vmatprep.subr.mxu0 %v192
    %4917 = vmatpush1.msra.mxu0 %v191
    %4918 = vmatprep.subr.mxu0 %v196
    %4919 = vmatpush1.msra.mxu0 %v195
    %4920 = vmatprep.subr.mxu0 %v200
    %4921 = vmatpush1.msra.mxu0 %v199
    %4922 = vmatprep.subr.mxu0 %v204
    %4923 = vmatpush1.msra.mxu0 %v203
    %4924 = vmatprep.subr.mxu0 %v208
    %4925 = vmatpush1.msra.mxu0 %v207
    %4926 = vmatprep.subr.mxu0 %v212
    %4927 = vmatpush1.msra.mxu0 %v211
    %4928 = vmatprep.subr.mxu0 %v216
    %4929 = vmatpush1.msra.mxu0 %v215
    %4930 = vmatprep.subr.mxu0 %v220
    %4931 = vmatpush1.msra.mxu0 %v219
    %4932 = vmatprep.subr.mxu0 %v224
    %4933 = vmatpush1.msra.mxu0 %v223
    %4934 = vmatprep.subr.mxu0 0.0
    %4935 = vmatpush1.msra.mxu0 0.0
    %4936 = vmatprep.subr.mxu0 0.0
    %4937 = vmatpush1.msra.mxu0 0.0
    %4938 = vmatprep.subr.mxu0 0.0
    %4939 = vmatpush1.msra.mxu0 0.0
    %4940 = vmatprep.subr.mxu0 0.0
    %4941 = vmatpush1.msra.mxu0 0.0
    %4942 = vmatprep.subr.mxu0 0.0
    %4943 = vmatpush1.msra.mxu0 0.0
    %4944 = vmatprep.subr.mxu0 0.0
    %4945 = vmatpush1.msra.mxu0 0.0
    %4946 = vmatprep.subr.mxu0 0.0
    %4947 = vmatpush1.msra.mxu0 0.0
    %4948 = vmatprep.subr.mxu0 0.0
    %4949 = vmatpush1.msra.mxu0 0.0
    %4950 = vmatprep.subr.mxu0 0.0
    %4951 = vmatpush1.msra.mxu0 0.0
    %4952 = vmatprep.subr.mxu0 0.0
    %4953 = vmatpush1.msra.mxu0 0.0
    %4954 = vmatprep.subr.mxu0 0.0
    %4955 = vmatpush1.msra.mxu0 0.0
    %4956 = vmatprep.subr.mxu0 0.0
    %4957 = vmatpush1.msra.mxu0 0.0
    %4958 = vmatprep.subr.mxu0 0.0
    %4959 = vmatpush1.msra.mxu0 0.0
    %4960 = vmatprep.subr.mxu0 0.0
    %4961 = vmatpush1.msra.mxu0 0.0
    %4962 = vmatprep.subr.mxu0 0.0
    %4963 = vmatpush1.msra.mxu0 0.0
    %4964 = vmatprep.subr.mxu0 0.0
    %4965 = vmatpush1.msra.mxu0 0.0
    %4966 = vmatprep.mubr.f32.mxu0 0.0
    %4967 = vmatmul.mubr.f32.gmra.mrb[0].mxu0 %v4442
    %v4968 = vpop.f32.mrb[0].mxu0
    %v4969 = vadd.f32 0.0, %v4968
    %v4970 = vpop.f32.mrb[0].mxu0
    %v4971 = vadd.f32 0.0, %v4970
    %4972 = vdwg.mxu0
    %4973 = vmatprep.subr.mxu0 %v166
    %4974 = vmatpush1.msra.mxu0 %v165
    %4975 = vmatprep.subr.mxu0 %v170
    %4976 = vmatpush1.msra.mxu0 %v169
    %4977 = vmatprep.subr.mxu0 %v174
    %4978 = vmatpush1.msra.mxu0 %v173
    %4979 = vmatprep.subr.mxu0 %v178
    %4980 = vmatpush1.msra.mxu0 %v177
    %4981 = vmatprep.subr.mxu0 %v182
    %4982 = vmatpush1.msra.mxu0 %v181
    %4983 = vmatprep.subr.mxu0 %v186
    %4984 = vmatpush1.msra.mxu0 %v185
    %4985 = vmatprep.subr.mxu0 %v190
    %4986 = vmatpush1.msra.mxu0 %v189
    %4987 = vmatprep.subr.mxu0 %v194
    %4988 = vmatpush1.msra.mxu0 %v193
    %4989 = vmatprep.subr.mxu0 %v198
    %4990 = vmatpush1.msra.mxu0 %v197
    %4991 = vmatprep.subr.mxu0 %v202
    %4992 = vmatpush1.msra.mxu0 %v201
    %4993 = vmatprep.subr.mxu0 %v206
    %4994 = vmatpush1.msra.mxu0 %v205
    %4995 = vmatprep.subr.mxu0 %v210
    %4996 = vmatpush1.msra.mxu0 %v209
    %4997 = vmatprep.subr.mxu0 %v214
    %4998 = vmatpush1.msra.mxu0 %v213
    %4999 = vmatprep.subr.mxu0 %v218
    %5000 = vmatpush1.msra.mxu0 %v217
    %5001 = vmatprep.subr.mxu0 %v222
    %5002 = vmatpush1.msra.mxu0 %v221
    %5003 = vmatprep.subr.mxu0 %v226
    %5004 = vmatpush1.msra.mxu0 %v225
    %5005 = vmatprep.subr.mxu0 0.0
    %5006 = vmatpush1.msra.mxu0 0.0
    %5007 = vmatprep.subr.mxu0 0.0
    %5008 = vmatpush1.msra.mxu0 0.0
    %5009 = vmatprep.subr.mxu0 0.0
    %5010 = vmatpush1.msra.mxu0 0.0
    %5011 = vmatprep.subr.mxu0 0.0
    %5012 = vmatpush1.msra.mxu0 0.0
    %5013 = vmatprep.subr.mxu0 0.0
    %5014 = vmatpush1.msra.mxu0 0.0
    %5015 = vmatprep.subr.mxu0 0.0
    %5016 = vmatpush1.msra.mxu0 0.0
    %5017 = vmatprep.subr.mxu0 0.0
    %5018 = vmatpush1.msra.mxu0 0.0
    %5019 = vmatprep.subr.mxu0 0.0
    %5020 = vmatpush1.msra.mxu0 0.0
    %5021 = vmatprep.subr.mxu0 0.0
    %5022 = vmatpush1.msra.mxu0 0.0
    %5023 = vmatprep.subr.mxu0 0.0
    %5024 = vmatpush1.msra.mxu0 0.0
    %5025 = vmatprep.subr.mxu0 0.0
    %5026 = vmatpush1.msra.mxu0 0.0
    %5027 = vmatprep.subr.mxu0 0.0
    %5028 = vmatpush1.msra.mxu0 0.0
    %5029 = vmatprep.subr.mxu0 0.0
    %5030 = vmatpush1.msra.mxu0 0.0
    %5031 = vmatprep.subr.mxu0 0.0
    %5032 = vmatpush1.msra.mxu0 0.0
    %5033 = vmatprep.subr.mxu0 0.0
    %5034 = vmatpush1.msra.mxu0 0.0
    %5035 = vmatprep.subr.mxu0 0.0
    %5036 = vmatpush1.msra.mxu0 0.0
    %5037 = vmatprep.mubr.f32.mxu0 0.0
    %5038 = vmatmul.mubr.f32.gmra.mrb[0].mxu0 %v4442
    %v5039 = vpop.f32.mrb[0].mxu0
    %v5040 = vadd.f32 0.0, %v5039
    %v5041 = vpop.f32.mrb[0].mxu0
    %v5042 = vadd.f32 0.0, %v5041
    %5043 = vdwg.mxu0
    %v5044 = vadd.f32 %v4827, %v4969
    %v5045 = vadd.f32 %v4829, %v4971
    %v5046 = vadd.f32 %v4898, %v5040
    %v5047 = vadd.f32 %v4900, %v5042
    %v5048 = vxor.u32 %v5044, 2147483648
    %v5049 = vxor.u32 %v5045, 2147483648
    %v5050 = vxor.u32 %v5046, 2147483648
    %v5051 = vmul.f32 %v5048, 1.442695
    %v5052 = vpow.pop %v5051
    %v5053 = vmul.f32 %v5049, 1.442695
    %v5054 = vpow.pop %v5053
    %v5055 = vmul.f32 %v5050, 1.442695
    %v5056 = vpow.pop %v5055
    %v5057 = vadd.f32 %v5052, 1.0
    %v5058 = vadd.f32 %v5054, 1.0
    %v5059 = vadd.f32 %v5056, 1.0
    %v5060 = vrcp.pop %v5057
    %v5061 = vmul.f32 1.0, %v5060
    %v5062 = vrcp.pop %v5058
    %v5063 = vmul.f32 1.0, %v5062
    %v5064 = vrcp.pop %v5059
    %v5065 = vmul.f32 1.0, %v5064
    %v5066 = vtanh.pop %v5047
    %v5067 = vmul.f32 %v5063, %v4440
    %v5068 = vmul.f32 %v5061, %v5066
    %v5069 = vadd.f32 %v5067, %v5068
    %v5070 = vtanh.pop %v5069
    %v5071 = vmul.f32 %v5065, %v5070
    %5072 = vmatprep.subr.mxu0 %v100
    %5073 = vmatpush1.msra.mxu0 %v99
    %5074 = vmatprep.subr.mxu0 %v104
    %5075 = vmatpush1.msra.mxu0 %v103
    %5076 = vmatprep.subr.mxu0 %v108
    %5077 = vmatpush1.msra.mxu0 %v107
    %5078 = vmatprep.subr.mxu0 %v112
    %5079 = vmatpush1.msra.mxu0 %v111
    %5080 = vmatprep.subr.mxu0 %v116
    %5081 = vmatpush1.msra.mxu0 %v115
    %5082 = vmatprep.subr.mxu0 %v120
    %5083 = vmatpush1.msra.mxu0 %v119
    %5084 = vmatprep.subr.mxu0 %v124
    %5085 = vmatpush1.msra.mxu0 %v123
    %5086 = vmatprep.subr.mxu0 %v128
    %5087 = vmatpush1.msra.mxu0 %v127
    %5088 = vmatprep.subr.mxu0 %v132
    %5089 = vmatpush1.msra.mxu0 %v131
    %5090 = vmatprep.subr.mxu0 %v136
    %5091 = vmatpush1.msra.mxu0 %v135
    %5092 = vmatprep.subr.mxu0 %v140
    %5093 = vmatpush1.msra.mxu0 %v139
    %5094 = vmatprep.subr.mxu0 %v144
    %5095 = vmatpush1.msra.mxu0 %v143
    %5096 = vmatprep.subr.mxu0 %v148
    %5097 = vmatpush1.msra.mxu0 %v147
    %5098 = vmatprep.subr.mxu0 %v152
    %5099 = vmatpush1.msra.mxu0 %v151
    %5100 = vmatprep.subr.mxu0 %v156
    %5101 = vmatpush1.msra.mxu0 %v155
    %5102 = vmatprep.subr.mxu0 %v160
    %5103 = vmatpush1.msra.mxu0 %v159
    %5104 = vmatprep.subr.mxu0 0.0
    %5105 = vmatpush1.msra.mxu0 0.0
    %5106 = vmatprep.subr.mxu0 0.0
    %5107 = vmatpush1.msra.mxu0 0.0
    %5108 = vmatprep.subr.mxu0 0.0
    %5109 = vmatpush1.msra.mxu0 0.0
    %5110 = vmatprep.subr.mxu0 0.0
    %5111 = vmatpush1.msra.mxu0 0.0
    %5112 = vmatprep.subr.mxu0 0.0
    %5113 = vmatpush1.msra.mxu0 0.0
    %5114 = vmatprep.subr.mxu0 0.0
    %5115 = vmatpush1.msra.mxu0 0.0
    %5116 = vmatprep.subr.mxu0 0.0
    %5117 = vmatpush1.msra.mxu0 0.0
    %5118 = vmatprep.subr.mxu0 0.0
    %5119 = vmatpush1.msra.mxu0 0.0
    %5120 = vmatprep.subr.mxu0 0.0
    %5121 = vmatpush1.msra.mxu0 0.0
    %5122 = vmatprep.subr.mxu0 0.0
    %5123 = vmatpush1.msra.mxu0 0.0
    %5124 = vmatprep.subr.mxu0 0.0
    %5125 = vmatpush1.msra.mxu0 0.0
    %5126 = vmatprep.subr.mxu0 0.0
    %5127 = vmatpush1.msra.mxu0 0.0
    %5128 = vmatprep.subr.mxu0 0.0
    %5129 = vmatpush1.msra.mxu0 0.0
    %5130 = vmatprep.subr.mxu0 0.0
    %5131 = vmatpush1.msra.mxu0 0.0
    %5132 = vmatprep.subr.mxu0 0.0
    %5133 = vmatpush1.msra.mxu0 0.0
    %5134 = vmatprep.subr.mxu0 0.0
    %5135 = vmatpush1.msra.mxu0 0.0
    %5136 = vmatprep.mubr.f32.mxu0 0.0
    %5137 = vmatmul.mubr.f32.gmra.mrb[0].mxu0 %v5071
    %v5138 = vpop.f32.mrb[0].mxu0
    %v5139 = vadd.f32 %v653, %v5138
    %v5140 = vpop.f32.mrb[0].mxu0
    %v5141 = vadd.f32 %v657, %v5140
    %5142 = vdwg.mxu0
    %5143 = vmatprep.subr.mxu0 %v102
    %5144 = vmatpush1.msra.mxu0 %v101
    %5145 = vmatprep.subr.mxu0 %v106
    %5146 = vmatpush1.msra.mxu0 %v105
    %5147 = vmatprep.subr.mxu0 %v110
    %5148 = vmatpush1.msra.mxu0 %v109
    %5149 = vmatprep.subr.mxu0 %v114
    %5150 = vmatpush1.msra.mxu0 %v113
    %5151 = vmatprep.subr.mxu0 %v118
    %5152 = vmatpush1.msra.mxu0 %v117
    %5153 = vmatprep.subr.mxu0 %v122
    %5154 = vmatpush1.msra.mxu0 %v121
    %5155 = vmatprep.subr.mxu0 %v126
    %5156 = vmatpush1.msra.mxu0 %v125
    %5157 = vmatprep.subr.mxu0 %v130
    %5158 = vmatpush1.msra.mxu0 %v129
    %5159 = vmatprep.subr.mxu0 %v134
    %5160 = vmatpush1.msra.mxu0 %v133
    %5161 = vmatprep.subr.mxu0 %v138
    %5162 = vmatpush1.msra.mxu0 %v137
    %5163 = vmatprep.subr.mxu0 %v142
    %5164 = vmatpush1.msra.mxu0 %v141
    %5165 = vmatprep.subr.mxu0 %v146
    %5166 = vmatpush1.msra.mxu0 %v145
    %5167 = vmatprep.subr.mxu0 %v150
    %5168 = vmatpush1.msra.mxu0 %v149
    %5169 = vmatprep.subr.mxu0 %v154
    %5170 = vmatpush1.msra.mxu0 %v153
    %5171 = vmatprep.subr.mxu0 %v158
    %5172 = vmatpush1.msra.mxu0 %v157
    %5173 = vmatprep.subr.mxu0 %v162
    %5174 = vmatpush1.msra.mxu0 %v161
    %5175 = vmatprep.subr.mxu0 0.0
    %5176 = vmatpush1.msra.mxu0 0.0
    %5177 = vmatprep.subr.mxu0 0.0
    %5178 = vmatpush1.msra.mxu0 0.0
    %5179 = vmatprep.subr.mxu0 0.0
    %5180 = vmatpush1.msra.mxu0 0.0
    %5181 = vmatprep.subr.mxu0 0.0
    %5182 = vmatpush1.msra.mxu0 0.0
    %5183 = vmatprep.subr.mxu0 0.0
    %5184 = vmatpush1.msra.mxu0 0.0
    %5185 = vmatprep.subr.mxu0 0.0
    %5186 = vmatpush1.msra.mxu0 0.0
    %5187 = vmatprep.subr.mxu0 0.0
    %5188 = vmatpush1.msra.mxu0 0.0
    %5189 = vmatprep.subr.mxu0 0.0
    %5190 = vmatpush1.msra.mxu0 0.0
    %5191 = vmatprep.subr.mxu0 0.0
    %5192 = vmatpush1.msra.mxu0 0.0
    %5193 = vmatprep.subr.mxu0 0.0
    %5194 = vmatpush1.msra.mxu0 0.0
    %5195 = vmatprep.subr.mxu0 0.0
    %5196 = vmatpush1.msra.mxu0 0.0
    %5197 = vmatprep.subr.mxu0 0.0
    %5198 = vmatpush1.msra.mxu0 0.0
    %5199 = vmatprep.subr.mxu0 0.0
    %5200 = vmatpush1.msra.mxu0 0.0
    %5201 = vmatprep.subr.mxu0 0.0
    %5202 = vmatpush1.msra.mxu0 0.0
    %5203 = vmatprep.subr.mxu0 0.0
    %5204 = vmatpush1.msra.mxu0 0.0
    %5205 = vmatprep.subr.mxu0 0.0
    %5206 = vmatpush1.msra.mxu0 0.0
    %5207 = vmatprep.mubr.f32.mxu0 0.0
    %5208 = vmatmul.mubr.f32.gmra.mrb[0].mxu0 %v5071
    %v5209 = vpop.f32.mrb[0].mxu0
    %v5210 = vadd.f32 %v661, %v5209
    %v5211 = vpop.f32.mrb[0].mxu0
    %v5212 = vadd.f32 %v665, %v5211
    %5213 = vdwg.mxu0
    %5214 = vmatprep.subr.mxu0 %v228
    %5215 = vmatpush1.msra.mxu0 %v227
    %5216 = vmatprep.subr.mxu0 %v232
    %5217 = vmatpush1.msra.mxu0 %v231
    %5218 = vmatprep.subr.mxu0 %v236
    %5219 = vmatpush1.msra.mxu0 %v235
    %5220 = vmatprep.subr.mxu0 %v240
    %5221 = vmatpush1.msra.mxu0 %v239
    %5222 = vmatprep.subr.mxu0 %v244
    %5223 = vmatpush1.msra.mxu0 %v243
    %5224 = vmatprep.subr.mxu0 %v248
    %5225 = vmatpush1.msra.mxu0 %v247
    %5226 = vmatprep.subr.mxu0 %v252
    %5227 = vmatpush1.msra.mxu0 %v251
    %5228 = vmatprep.subr.mxu0 %v256
    %5229 = vmatpush1.msra.mxu0 %v255
    %5230 = vmatprep.subr.mxu0 %v260
    %5231 = vmatpush1.msra.mxu0 %v259
    %5232 = vmatprep.subr.mxu0 %v264
    %5233 = vmatpush1.msra.mxu0 %v263
    %5234 = vmatprep.subr.mxu0 %v268
    %5235 = vmatpush1.msra.mxu0 %v267
    %5236 = vmatprep.subr.mxu0 %v272
    %5237 = vmatpush1.msra.mxu0 %v271
    %5238 = vmatprep.subr.mxu0 %v276
    %5239 = vmatpush1.msra.mxu0 %v275
    %5240 = vmatprep.subr.mxu0 %v280
    %5241 = vmatpush1.msra.mxu0 %v279
    %5242 = vmatprep.subr.mxu0 %v284
    %5243 = vmatpush1.msra.mxu0 %v283
    %5244 = vmatprep.subr.mxu0 %v288
    %5245 = vmatpush1.msra.mxu0 %v287
    %5246 = vmatprep.subr.mxu0 0.0
    %5247 = vmatpush1.msra.mxu0 0.0
    %5248 = vmatprep.subr.mxu0 0.0
    %5249 = vmatpush1.msra.mxu0 0.0
    %5250 = vmatprep.subr.mxu0 0.0
    %5251 = vmatpush1.msra.mxu0 0.0
    %5252 = vmatprep.subr.mxu0 0.0
    %5253 = vmatpush1.msra.mxu0 0.0
    %5254 = vmatprep.subr.mxu0 0.0
    %5255 = vmatpush1.msra.mxu0 0.0
    %5256 = vmatprep.subr.mxu0 0.0
    %5257 = vmatpush1.msra.mxu0 0.0
    %5258 = vmatprep.subr.mxu0 0.0
    %5259 = vmatpush1.msra.mxu0 0.0
    %5260 = vmatprep.subr.mxu0 0.0
    %5261 = vmatpush1.msra.mxu0 0.0
    %5262 = vmatprep.subr.mxu0 0.0
    %5263 = vmatpush1.msra.mxu0 0.0
    %5264 = vmatprep.subr.mxu0 0.0
    %5265 = vmatpush1.msra.mxu0 0.0
    %5266 = vmatprep.subr.mxu0 0.0
    %5267 = vmatpush1.msra.mxu0 0.0
    %5268 = vmatprep.subr.mxu0 0.0
    %5269 = vmatpush1.msra.mxu0 0.0
    %5270 = vmatprep.subr.mxu0 0.0
    %5271 = vmatpush1.msra.mxu0 0.0
    %5272 = vmatprep.subr.mxu0 0.0
    %5273 = vmatpush1.msra.mxu0 0.0
    %5274 = vmatprep.subr.mxu0 0.0
    %5275 = vmatpush1.msra.mxu0 0.0
    %5276 = vmatprep.subr.mxu0 0.0
    %5277 = vmatpush1.msra.mxu0 0.0
    %5278 = vmatprep.mubr.f32.mxu0 0.0
    %5279 = vmatmul.mubr.f32.gmra.mrb[0].mxu0 %v4754
    %v5280 = vpop.f32.mrb[0].mxu0
    %v5281 = vadd.f32 0.0, %v5280
    %v5282 = vpop.f32.mrb[0].mxu0
    %v5283 = vadd.f32 0.0, %v5282
    %5284 = vdwg.mxu0
    %5285 = vmatprep.subr.mxu0 %v230
    %5286 = vmatpush1.msra.mxu0 %v229
    %5287 = vmatprep.subr.mxu0 %v234
    %5288 = vmatpush1.msra.mxu0 %v233
    %5289 = vmatprep.subr.mxu0 %v238
    %5290 = vmatpush1.msra.mxu0 %v237
    %5291 = vmatprep.subr.mxu0 %v242
    %5292 = vmatpush1.msra.mxu0 %v241
    %5293 = vmatprep.subr.mxu0 %v246
    %5294 = vmatpush1.msra.mxu0 %v245
    %5295 = vmatprep.subr.mxu0 %v250
    %5296 = vmatpush1.msra.mxu0 %v249
    %5297 = vmatprep.subr.mxu0 %v254
    %5298 = vmatpush1.msra.mxu0 %v253
    %5299 = vmatprep.subr.mxu0 %v258
    %5300 = vmatpush1.msra.mxu0 %v257
    %5301 = vmatprep.subr.mxu0 %v262
    %5302 = vmatpush1.msra.mxu0 %v261
    %5303 = vmatprep.subr.mxu0 %v266
    %5304 = vmatpush1.msra.mxu0 %v265
    %5305 = vmatprep.subr.mxu0 %v270
    %5306 = vmatpush1.msra.mxu0 %v269
    %5307 = vmatprep.subr.mxu0 %v274
    %5308 = vmatpush1.msra.mxu0 %v273
    %5309 = vmatprep.subr.mxu0 %v278
    %5310 = vmatpush1.msra.mxu0 %v277
    %5311 = vmatprep.subr.mxu0 %v282
    %5312 = vmatpush1.msra.mxu0 %v281
    %5313 = vmatprep.subr.mxu0 %v286
    %5314 = vmatpush1.msra.mxu0 %v285
    %5315 = vmatprep.subr.mxu0 %v290
    %5316 = vmatpush1.msra.mxu0 %v289
    %5317 = vmatprep.subr.mxu0 0.0
    %5318 = vmatpush1.msra.mxu0 0.0
    %5319 = vmatprep.subr.mxu0 0.0
    %5320 = vmatpush1.msra.mxu0 0.0
    %5321 = vmatprep.subr.mxu0 0.0
    %5322 = vmatpush1.msra.mxu0 0.0
    %5323 = vmatprep.subr.mxu0 0.0
    %5324 = vmatpush1.msra.mxu0 0.0
    %5325 = vmatprep.subr.mxu0 0.0
    %5326 = vmatpush1.msra.mxu0 0.0
    %5327 = vmatprep.subr.mxu0 0.0
    %5328 = vmatpush1.msra.mxu0 0.0
    %5329 = vmatprep.subr.mxu0 0.0
    %5330 = vmatpush1.msra.mxu0 0.0
    %5331 = vmatprep.subr.mxu0 0.0
    %5332 = vmatpush1.msra.mxu0 0.0
    %5333 = vmatprep.subr.mxu0 0.0
    %5334 = vmatpush1.msra.mxu0 0.0
    %5335 = vmatprep.subr.mxu0 0.0
    %5336 = vmatpush1.msra.mxu0 0.0
    %5337 = vmatprep.subr.mxu0 0.0
    %5338 = vmatpush1.msra.mxu0 0.0
    %5339 = vmatprep.subr.mxu0 0.0
    %5340 = vmatpush1.msra.mxu0 0.0
    %5341 = vmatprep.subr.mxu0 0.0
    %5342 = vmatpush1.msra.mxu0 0.0
    %5343 = vmatprep.subr.mxu0 0.0
    %5344 = vmatpush1.msra.mxu0 0.0
    %5345 = vmatprep.subr.mxu0 0.0
    %5346 = vmatpush1.msra.mxu0 0.0
    %5347 = vmatprep.subr.mxu0 0.0
    %5348 = vmatpush1.msra.mxu0 0.0
    %5349 = vmatprep.mubr.f32.mxu0 0.0
    %5350 = vmatmul.mubr.f32.gmra.mrb[0].mxu0 %v4754
    %v5351 = vpop.f32.mrb[0].mxu0
    %v5352 = vadd.f32 0.0, %v5351
    %v5353 = vpop.f32.mrb[0].mxu0
    %v5354 = vadd.f32 0.0, %v5353
    %5355 = vdwg.mxu0
    %v5356 = vadd.f32 %v5139, %v5281
    %v5357 = vadd.f32 %v5141, %v5283
    %v5358 = vadd.f32 %v5210, %v5352
    %v5359 = vadd.f32 %v5212, %v5354
    %v5360 = vxor.u32 %v5356, 2147483648
    %v5361 = vxor.u32 %v5357, 2147483648
    %v5362 = vxor.u32 %v5358, 2147483648
    %v5363 = vmul.f32 %v5360, 1.442695
    %v5364 = vpow.pop %v5363
    %v5365 = vmul.f32 %v5361, 1.442695
    %v5366 = vpow.pop %v5365
    %v5367 = vmul.f32 %v5362, 1.442695
    %v5368 = vpow.pop %v5367
    %v5369 = vadd.f32 %v5364, 1.0
    %v5370 = vadd.f32 %v5366, 1.0
    %v5371 = vadd.f32 %v5368, 1.0
    %v5372 = vrcp.pop %v5369
    %v5373 = vmul.f32 1.0, %v5372
    %v5374 = vrcp.pop %v5370
    %v5375 = vmul.f32 1.0, %v5374
    %v5376 = vrcp.pop %v5371
    %v5377 = vmul.f32 1.0, %v5376
    %v5378 = vtanh.pop %v5359
    %v5379 = vmul.f32 %v5375, %v4752
    %v5380 = vmul.f32 %v5373, %v5378
    %v5381 = vadd.f32 %v5379, %v5380
    %v5382 = vtanh.pop %v5381
    %v5383 = vmul.f32 %v5377, %v5382
    %v5385 = vlaneseq
    %v5386 = vshrl.u32 %v5385, 7
    %v5387 = vsub.s32 0, %v5386
    %v5388 = vrot.slane %v90, %v5387
    %5390 = vmatprep.subr.mxu0 0.0
    %5391 = vmatpush1.msra.mxu0 %v74
    %5392 = vmatprep.subr.mxu0 0.0
    %5393 = vmatpush1.msra.mxu0 %v75
    %5394 = vmatprep.subr.mxu0 0.0
    %5395 = vmatpush1.msra.mxu0 %v76
    %5396 = vmatprep.subr.mxu0 0.0
    %5397 = vmatpush1.msra.mxu0 %v77
    %5398 = vmatprep.subr.mxu0 0.0
    %5399 = vmatpush1.msra.mxu0 %v78
    %5400 = vmatprep.subr.mxu0 0.0
    %5401 = vmatpush1.msra.mxu0 %v79
    %5402 = vmatprep.subr.mxu0 0.0
    %5403 = vmatpush1.msra.mxu0 %v80
    %5404 = vmatprep.subr.mxu0 0.0
    %5405 = vmatpush1.msra.mxu0 %v81
    %5406 = vmatprep.subr.mxu0 0.0
    %5407 = vmatpush1.msra.mxu0 %v82
    %5408 = vmatprep.subr.mxu0 0.0
    %5409 = vmatpush1.msra.mxu0 %v83
    %5410 = vmatprep.subr.mxu0 0.0
    %5411 = vmatpush1.msra.mxu0 %v84
    %5412 = vmatprep.subr.mxu0 0.0
    %5413 = vmatpush1.msra.mxu0 %v85
    %5414 = vmatprep.subr.mxu0 0.0
    %5415 = vmatpush1.msra.mxu0 %v86
    %5416 = vmatprep.subr.mxu0 0.0
    %5417 = vmatpush1.msra.mxu0 %v87
    %5418 = vmatprep.subr.mxu0 0.0
    %5419 = vmatpush1.msra.mxu0 %v88
    %5420 = vmatprep.subr.mxu0 0.0
    %5421 = vmatpush1.msra.mxu0 %v89
    %5422 = vmatprep.subr.mxu0 0.0
    %5423 = vmatpush1.msra.mxu0 0.0
    %5424 = vmatprep.subr.mxu0 0.0
    %5425 = vmatpush1.msra.mxu0 0.0
    %5426 = vmatprep.subr.mxu0 0.0
    %5427 = vmatpush1.msra.mxu0 0.0
    %5428 = vmatprep.subr.mxu0 0.0
    %5429 = vmatpush1.msra.mxu0 0.0
    %5430 = vmatprep.subr.mxu0 0.0
    %5431 = vmatpush1.msra.mxu0 0.0
    %5432 = vmatprep.subr.mxu0 0.0
    %5433 = vmatpush1.msra.mxu0 0.0
    %5434 = vmatprep.subr.mxu0 0.0
    %5435 = vmatpush1.msra.mxu0 0.0
    %5436 = vmatprep.subr.mxu0 0.0
    %5437 = vmatpush1.msra.mxu0 0.0
    %5438 = vmatprep.subr.mxu0 0.0
    %5439 = vmatpush1.msra.mxu0 0.0
    %5440 = vmatprep.subr.mxu0 0.0
    %5441 = vmatpush1.msra.mxu0 0.0
    %5442 = vmatprep.subr.mxu0 0.0
    %5443 = vmatpush1.msra.mxu0 0.0
    %5444 = vmatprep.subr.mxu0 0.0
    %5445 = vmatpush1.msra.mxu0 0.0
    %5446 = vmatprep.subr.mxu0 0.0
    %5447 = vmatpush1.msra.mxu0 0.0
    %5448 = vmatprep.subr.mxu0 0.0
    %5449 = vmatpush1.msra.mxu0 0.0
    %5450 = vmatprep.subr.mxu0 0.0
    %5451 = vmatpush1.msra.mxu0 0.0
    %5452 = vmatprep.subr.mxu0 0.0
    %5453 = vmatpush1.msra.mxu0 0.0
    %5454 = vmatprep.mubr.f32.mxu0 0.0
    %5455 = vmatmul.mubr.f32.gmra.mrb[0].mxu0 %v5383
    %v5456 = vpop.f32.mrb[0].mxu0
    %v5457 = vadd.f32 %v5388, %v5456
    %v5458 = vpop.f32.mrb[0].mxu0
    %5459 = vdwg.mxu0
    %vm5460 = vcmask 17408
    %5461 = vst.msk [vmem:[#allocation8] sm:$0x3] %vm5460, %v5457
    // Predicated region
    $region50: #{tpu_custom_call.1} parent=1 // pred_check
      _
    $region51: #{tpu_custom_call.1} parent=1 // pred_check_branch
      %5463 = sbr.rel (0) target = $region53
    $region52: #{tpu_custom_call.1} parent=1 // pred_region
      %s5465 = ssub.s32 32, 32
      %5466 = vsyncadd [#allocation4], %s5465
      %s5468 = sshll.u32 [#allocation8], 4
      %s5469 = int_to_ptr.vmem [resolvable:$true] %s5468
      %5471 = dma.vmem_to_hbm [thread:$0]  %s5469, 32, %s9, [#allocation4]
    $region53: #{tpu_custom_call.1} parent=1 // pred_fallthru
      _
    // Predicated region
    $region54: #{tpu_custom_call.1} parent=1 // pred_check
      _
    $region55: #{tpu_custom_call.1} parent=1 // pred_check_branch
      %5473 = sbr.rel (0) target = $region57
    $region56: #{tpu_custom_call.1} parent=1 // pred_region
      %5474 = dma.done [#allocation4], 32
    $region57: #{tpu_custom_call.1} parent=1 // pred_fallthru
      _
    %5475 = vsyncpa [#allocation3], 1
    %5476 = vsyncpa [#allocation6], 1
    %5477 = vsyncpa [#allocation4], 1

</llo_original>
